<compile_context>
chip_gen: v5e
topology: v5e:2x2
jax: 0.10.0
libtpu: 0.0.40
codegen_flags: <defaults>
</compile_context>

<pallas_src>
import jax
import jax.numpy as jnp
from jax import lax
from jax.experimental import pallas as pl
from jax.experimental.pallas import tpu as pltpu

# ----- small, TPU-layout-friendly config (stands in for CONFIG.dim / hyp) -----
B = 8        # batch
E = 32       # CONFIG.dim.E  (feature / embedding dim)
M2 = 128     # CONFIG.dim.M_2 (LSTM hidden dim)
V = 128      # vocabulary size
T = 8        # CONFIG.dim.max_caption_len
BOS_IDX = 1
EOS_IDX = 10


def _decoder_kernel(x_ref, o_ref,
                    w_init_ref, b_init_ref,
                    w_ih_ref, b_g_ref,
                    w_hh_ref,
                    w_out_ref, b_out_ref,
                    logits_ref, hidden_ref,
                    pre_ref):
    """Whole decoder forward in one kernel invocation (grid=())."""
    # hn0 / cn0 from one fused bf16 matmul: o @ [W_init_h^T | W_init_c^T].
    o_bf = o_ref[...].astype(jnp.bfloat16)                              # (B, E)
    hc = jnp.dot(o_bf, w_init_ref[...],
                 preferred_element_type=jnp.float32) + b_init_ref[...]  # (B, 2M2) f32
    hn = hc[:, :M2]
    cn = hc[:, M2:]

    # All non-recurrent gate pre-activations in one bf16 matmul:
    #   x_ref[s*B:(s+1)*B] = concat([tn_s, o], -1) with tn_0 = o, tn_s = emb(t[:, s-1]).
    # Both LSTM biases are folded in here, outside the recurrence.
    gx = jnp.dot(x_ref[...], w_ih_ref[...],
                 preferred_element_type=jnp.float32) + b_g_ref[...]     # (T*B, 4M2) f32
    pre_ref[...] = gx.reshape(T, B, 4 * M2)

    def step_fn(step, carry):
        hn, cn = carry
        # Single recurrent bf16 matmul on the serial critical path.
        gates = pre_ref[step] + jnp.dot(hn.astype(jnp.bfloat16), w_hh_ref[...],
                                        preferred_element_type=jnp.float32)
        # Gate columns were permuted offline to [i, f, o, g].
        # i/f sigmoids + g tanh first (they feed cn); the o-gate sigmoid is
        # issued separately so it does not sit ahead of tanh(cn) in the EUP FIFO.
        if_sig = jax.nn.sigmoid(gates[:, :2 * M2])
        i_g = if_sig[:, :M2]
        f_g = if_sig[:, M2:]
        g_g = jnp.tanh(gates[:, 3 * M2:])
        cn = f_g * cn + i_g * g_g
        o_g = jax.nn.sigmoid(gates[:, 2 * M2:3 * M2])
        hn = o_g * jnp.tanh(cn)
        hidden_ref[step] = hn                                           # hidden[:, :, step]
        return hn, cn

    lax.fori_loop(0, T, step_fn, (hn, cn), unroll=True)

    # Output linear hoisted out of the recurrence (dropout is identity in eval):
    # one (T*B, M2) @ (M2, V) bf16 matmul instead of T matmuls with M=B rows.
    h_all = hidden_ref[...].reshape(T * B, M2).astype(jnp.bfloat16)
    logits = jnp.dot(h_all, w_out_ref[...],
                     preferred_element_type=jnp.float32) + b_out_ref[...]
    logits_ref[...] = logits.reshape(T, B, V)

    # TODO(synk): scheduled-sampling / free-running inference (tn = emb(argmax(on))
    #             with probability ss_prob) is stochastic at the Python level; only
    #             the deterministic teacher-forcing path is implemented in-kernel.


def caption_decoder_forward(params, o, t, length=None):
    """o: (B, E) f32, t: (B, T) int32, length: (B,) int32 or None."""
    o = o.astype(jnp.float32)
    cap_emb = params["emb"][t].astype(jnp.float32)                      # (B, T, E)
    cap_emb_t = jnp.transpose(cap_emb, (1, 0, 2))                       # (T, B, E)
    # Step-s token input: o at step 0, emb(t[:, s-1]) afterwards (teacher forcing).
    tok = jnp.concatenate([o[None], cap_emb_t[:T - 1]], axis=0)         # (T, B, E)
    o_rep = jnp.broadcast_to(o[None], (T, B, E))
    x_in = jnp.concatenate([tok, o_rep], axis=-1)                       # (T, B, 2E)
    x_in = x_in.reshape(T * B, 2 * E).astype(jnp.bfloat16)

    def vmem():
        return pl.BlockSpec(memory_space=pltpu.MemorySpace.VMEM)

    logits_tbv, hidden_tbm = pl.pallas_call(
        _decoder_kernel,
        out_shape=(jax.ShapeDtypeStruct((T, B, V), jnp.float32),
                   jax.ShapeDtypeStruct((T, B, M2), jnp.float32)),
        in_specs=[vmem() for _ in range(9)],
        out_specs=(vmem(), vmem()),
        scratch_shapes=[pltpu.VMEM((T, B, 4 * M2), jnp.float32)],       # precomputed gates
    )(x_in, o,
      params["w_init"], params["b_init"],
      params["w_ih"], params["b_gates"],
      params["w_hh"],
      params["w_out"], params["b_out"])

    # Sequence length / gather index.
    if length is None:
        # first_true(eq(argmax over V, eos), time axis); all-False -> 0 (matches torch.max).
        mat = (jnp.argmax(logits_tbv, axis=-1) == EOS_IDX)              # (T, B)
        first = (jnp.cumsum(mat.astype(jnp.int32), axis=0) == 1) & mat
        step_idx = jnp.argmax(first, axis=0).astype(jnp.int32)          # (B,)
    else:
        step_idx = jnp.clip(length - 1, 0, None).astype(jnp.int32)

    # Lane-dense gather straight from the (T, B, M2) slab — no transposes.
    hidden = hidden_tbm[step_idx, jnp.arange(B), :]                     # (B, M2)

    # Single transpose to the PyTorch (B, V, T) API layout.
    logits = jnp.transpose(logits_tbv, (1, 2, 0))                       # (B, V, T)
    return logits, hidden


def init_params(key):
    """PyTorch-layout parameters for CaptionDecoderCell."""
    ks = jax.random.split(key, 11)

    def uni(k, shape, fan_in):
        bound = 1.0 / jnp.sqrt(fan_in)
        return jax.random.uniform(k, shape, jnp.float32, -bound, bound)

    return {
        "w_init_h": uni(ks[0], (M2, E), E), "b_init_h": uni(ks[1], (M2,), E),
        "w_init_c": uni(ks[2], (M2, E), E), "b_init_c": uni(ks[3], (M2,), E),
        "emb": jax.random.normal(ks[4], (V, E), jnp.float32),
        "w_ih": uni(ks[5], (4 * M2, 2 * E), M2),   # LSTMCell weight_ih, order [i,f,g,o]
        "w_hh": uni(ks[6], (4 * M2, M2), M2),      # LSTMCell weight_hh
        "b_ih": uni(ks[7], (4 * M2,), M2),
        "b_hh": uni(ks[8], (4 * M2,), M2),
        "w_out": uni(ks[9], (V, M2), M2),          # output linear
        "b_out": uni(ks[10], (V,), M2),
    }


def prep_kernel_params(raw):
    """Kernel layout: transposed bf16 weights, fused init / LSTM biases, gate
    columns permuted from PyTorch [i, f, g, o] to [i, f, o, g]."""
    perm = jnp.concatenate([jnp.arange(0, 2 * M2),
                            jnp.arange(3 * M2, 4 * M2),
                            jnp.arange(2 * M2, 3 * M2)])
    w_ih = raw["w_ih"][perm]                        # (4M2, 2E)
    w_hh = raw["w_hh"][perm]                        # (4M2, M2)
    b_g = (raw["b_ih"] + raw["b_hh"])[perm]
    return {
        "emb": raw["emb"],
        # init_h | init_c fused into one (E, 2M2) RHS
        "w_init": jnp.concatenate([raw["w_init_h"].T, raw["w_init_c"].T],
                                  axis=1).astype(jnp.bfloat16),
        "b_init": jnp.concatenate([raw["b_init_h"], raw["b_init_c"]])[None, :],   # f32
        "w_ih": w_ih.T.astype(jnp.bfloat16),        # (2E, 4M2) acts on concat([tn, o])
        "b_gates": b_g[None, :],                    # (1, 4M2) f32
        "w_hh": w_hh.T.astype(jnp.bfloat16),        # (M2, 4M2)
        "w_out": raw["w_out"].T.astype(jnp.bfloat16),   # (M2, V)
        "b_out": raw["b_out"][None, :],             # (1, V) f32
    }


def reference_forward(raw, o, t, length):
    """Pure-JAX f32 reference mirroring the PyTorch loop (teacher forcing, eval mode)."""
    cap_emb = raw["emb"][t]
    hn = o @ raw["w_init_h"].T + raw["b_init_h"]
    cn = o @ raw["w_init_c"].T + raw["b_init_c"]
    tn = o
    logits_steps, hidden_steps = [], []
    for step in range(T):
        x = jnp.concatenate([tn, o], axis=1)
        gates = x @ raw["w_ih"].T + raw["b_ih"] + hn @ raw["w_hh"].T + raw["b_hh"]
        i_g = jax.nn.sigmoid(gates[:, 0 * M2:1 * M2])
        f_g = jax.nn.sigmoid(gates[:, 1 * M2:2 * M2])
        g_g = jnp.tanh(gates[:, 2 * M2:3 * M2])
        o_g = jax.nn.sigmoid(gates[:, 3 * M2:4 * M2])
        cn = f_g * cn + i_g * g_g
        hn = o_g * jnp.tanh(cn)
        hidden_steps.append(hn)
        logits_steps.append(hn @ raw["w_out"].T + raw["b_out"])
        tn = cap_emb[:, step, :]
    logits = jnp.stack(logits_steps, axis=2)                  # (B, V, T)
    hidden_all = jnp.stack(hidden_steps, axis=2)              # (B, M2, T)
    L = jnp.clip(length - 1, 0, None).astype(jnp.int32)
    idx = jnp.broadcast_to(L[:, None, None], (B, M2, 1))
    hidden = jnp.take_along_axis(hidden_all, idx, axis=2)[..., 0]
    return logits, hidden


if __name__ == "__main__":
    key = jax.random.PRNGKey(0)
    k_param, k_o, k_t, k_len = jax.random.split(key, 4)

    raw = init_params(k_param)
    kparams = prep_kernel_params(raw)
    o = jax.random.normal(k_o, (B, E), jnp.float32)
    t = jax.random.randint(k_t, (B, T), 0, V, jnp.int32)
    length = jax.random.randint(k_len, (B,), 1, T + 1, jnp.int32)

    logits, hidden = jax.jit(caption_decoder_forward)(kparams, o, t, length)
    jax.block_until_ready((logits, hidden))

    ref_logits, ref_hidden = reference_forward(raw, o, t, length)
    assert logits.shape == (B, V, T) and hidden.shape == (B, M2)
    # bf16 MXU operands vs f32 reference -> relaxed tolerance.
    assert jnp.allclose(logits, ref_logits, atol=5e-2, rtol=5e-2)
    assert jnp.allclose(hidden, ref_hidden, atol=5e-2, rtol=5e-2)

    print("KERNEL_OK")
</pallas_src>

<mosaic_0001>
module attributes {stable_mosaic.version = 11 : i64} {
  func.func @_decoder_kernel(%arg0: memref<64x64xbf16, #tpu.memory_space<vmem>>, %arg1: memref<8x32xf32, #tpu.memory_space<vmem>>, %arg2: memref<32x256xbf16, #tpu.memory_space<vmem>>, %arg3: memref<1x256xf32, #tpu.memory_space<vmem>>, %arg4: memref<64x512xbf16, #tpu.memory_space<vmem>>, %arg5: memref<1x512xf32, #tpu.memory_space<vmem>>, %arg6: memref<128x512xbf16, #tpu.memory_space<vmem>>, %arg7: memref<128x128xbf16, #tpu.memory_space<vmem>>, %arg8: memref<1x128xf32, #tpu.memory_space<vmem>>, %arg9: memref<8x8x128xf32, #tpu.memory_space<vmem>>, %arg10: memref<8x8x128xf32, #tpu.memory_space<vmem>>, %arg11: memref<8x8x512xf32, #tpu.memory_space<vmem>>) attributes {dimension_semantics = [], scalar_prefetch = 0 : i64, scratch_operands = 1 : i64, tpu.core_type = #tpu.core_type<tc>} {
    %c0 = arith.constant 0 : index
    %c0_0 = arith.constant 0 : index
    %0 = vector.load %arg1[%c0, %c0_0] : memref<8x32xf32, #tpu.memory_space<vmem>>, vector<8x32xf32>
    %1 = arith.truncf %0 : vector<8x32xf32> to vector<8x32xbf16>
    %c0_1 = arith.constant 0 : index
    %c0_2 = arith.constant 0 : index
    %2 = vector.load %arg2[%c0_1, %c0_2] : memref<32x256xbf16, #tpu.memory_space<vmem>>, vector<32x256xbf16>
    %cst = arith.constant dense<0.000000e+00> : vector<8x256xf32>
    %3 = tpu.matmul %1, %2, %cst {dimension_numbers = #tpu.dot_dimension_numbers<[1], [0], [0], [1], [0, 0, 1, 1], [], []>} : vector<8x32xbf16>, vector<32x256xbf16>, vector<8x256xf32> -> vector<8x256xf32>
    %c0_3 = arith.constant 0 : index
    %c0_4 = arith.constant 0 : index
    %4 = vector.load %arg3[%c0_3, %c0_4] : memref<1x256xf32, #tpu.memory_space<vmem>>, vector<1x256xf32>
    %5 = vector.broadcast %4 : vector<1x256xf32> to vector<8x256xf32>
    %6 = arith.addf %3, %5 : vector<8x256xf32>
    %7 = vector.extract_strided_slice %6 {offsets = [0, 0], sizes = [8, 128], strides = [1, 1]} : vector<8x256xf32> to vector<8x128xf32>
    %8 = vector.extract_strided_slice %6 {offsets = [0, 128], sizes = [8, 128], strides = [1, 1]} : vector<8x256xf32> to vector<8x128xf32>
    %c0_5 = arith.constant 0 : index
    %c0_6 = arith.constant 0 : index
    %9 = vector.load %arg0[%c0_5, %c0_6] : memref<64x64xbf16, #tpu.memory_space<vmem>>, vector<64x64xbf16>
    %c0_7 = arith.constant 0 : index
    %c0_8 = arith.constant 0 : index
    %10 = vector.load %arg4[%c0_7, %c0_8] : memref<64x512xbf16, #tpu.memory_space<vmem>>, vector<64x512xbf16>
    %cst_9 = arith.constant dense<0.000000e+00> : vector<64x512xf32>
    %11 = tpu.matmul %9, %10, %cst_9 {dimension_numbers = #tpu.dot_dimension_numbers<[1], [0], [0], [1], [0, 0, 1, 1], [], []>} : vector<64x64xbf16>, vector<64x512xbf16>, vector<64x512xf32> -> vector<64x512xf32>
    %c0_10 = arith.constant 0 : index
    %c0_11 = arith.constant 0 : index
    %12 = vector.load %arg5[%c0_10, %c0_11] : memref<1x512xf32, #tpu.memory_space<vmem>>, vector<1x512xf32>
    %13 = vector.broadcast %12 : vector<1x512xf32> to vector<64x512xf32>
    %14 = arith.addf %11, %13 : vector<64x512xf32>
    %15 = vector.shape_cast %14 : vector<64x512xf32> to vector<8x8x512xf32>
    %c0_12 = arith.constant 0 : index
    %c0_13 = arith.constant 0 : index
    %c0_14 = arith.constant 0 : index
    %16 = vector.load %arg11[%c0_12, %c0_13, %c0_14] : memref<8x8x512xf32, #tpu.memory_space<vmem>>, vector<8x8x512xf32>
    tpu.vector_store %arg11[%c0_12, %c0_13, %c0_14], %15 {strides = array<i32>} : memref<8x8x512xf32, #tpu.memory_space<vmem>>, vector<8x8x512xf32>,
    %c0_i32 = arith.constant 0 : i32
    %17 = arith.index_cast %c0_i32 : i32 to index
    %c0_15 = arith.constant 0 : index
    %c0_16 = arith.constant 0 : index
    %18 = vector.load %arg11[%17, %c0_15, %c0_16] : memref<8x8x512xf32, #tpu.memory_space<vmem>>, vector<1x8x512xf32>
    %19 = vector.shape_cast %18 : vector<1x8x512xf32> to vector<8x512xf32>
    %20 = arith.truncf %7 : vector<8x128xf32> to vector<8x128xbf16>
    %c0_17 = arith.constant 0 : index
    %c0_18 = arith.constant 0 : index
    %21 = vector.load %arg6[%c0_17, %c0_18] : memref<128x512xbf16, #tpu.memory_space<vmem>>, vector<128x512xbf16>
    %cst_19 = arith.constant dense<0.000000e+00> : vector<8x512xf32>
    %22 = tpu.matmul %20, %21, %cst_19 {dimension_numbers = #tpu.dot_dimension_numbers<[1], [0], [0], [1], [0, 0, 1, 1], [], []>} : vector<8x128xbf16>, vector<128x512xbf16>, vector<8x512xf32> -> vector<8x512xf32>
    %23 = arith.addf %19, %22 : vector<8x512xf32>
    %24 = vector.extract_strided_slice %23 {offsets = [0, 0], sizes = [8, 256], strides = [1, 1]} : vector<8x512xf32> to vector<8x256xf32>
    %25 = arith.negf %24 : vector<8x256xf32>
    %26 = math.exp %25 : vector<8x256xf32>
    %cst_20 = arith.constant 1.000000e+00 : f32
    %27 = vector.broadcast %cst_20 : f32 to vector<8x256xf32>
    %28 = arith.addf %27, %26 : vector<8x256xf32>
    %29 = arith.divf %27, %28 : vector<8x256xf32>
    %30 = vector.extract_strided_slice %29 {offsets = [0, 0], sizes = [8, 128], strides = [1, 1]} : vector<8x256xf32> to vector<8x128xf32>
    %31 = vector.extract_strided_slice %29 {offsets = [0, 128], sizes = [8, 128], strides = [1, 1]} : vector<8x256xf32> to vector<8x128xf32>
    %32 = vector.extract_strided_slice %23 {offsets = [0, 384], sizes = [8, 128], strides = [1, 1]} : vector<8x512xf32> to vector<8x128xf32>
    %33 = math.tanh %32 : vector<8x128xf32>
    %34 = arith.mulf %31, %8 : vector<8x128xf32>
    %35 = arith.mulf %30, %33 : vector<8x128xf32>
    %36 = arith.addf %34, %35 : vector<8x128xf32>
    %37 = vector.extract_strided_slice %23 {offsets = [0, 256], sizes = [8, 128], strides = [1, 1]} : vector<8x512xf32> to vector<8x128xf32>
    %38 = arith.negf %37 : vector<8x128xf32>
    %39 = math.exp %38 : vector<8x128xf32>
    %cst_21 = arith.constant 1.000000e+00 : f32
    %40 = vector.broadcast %cst_21 : f32 to vector<8x128xf32>
    %41 = arith.addf %40, %39 : vector<8x128xf32>
    %42 = arith.divf %40, %41 : vector<8x128xf32>
    %43 = math.tanh %36 : vector<8x128xf32>
    %44 = arith.mulf %42, %43 : vector<8x128xf32>
    %45 = arith.index_cast %c0_i32 : i32 to index
    %c0_22 = arith.constant 0 : index
    %c0_23 = arith.constant 0 : index
    %46 = vector.load %arg10[%45, %c0_22, %c0_23] : memref<8x8x128xf32, #tpu.memory_space<vmem>>, vector<1x8x128xf32>
    %47 = vector.shape_cast %46 : vector<1x8x128xf32> to vector<8x128xf32>
    %48 = vector.shape_cast %44 : vector<8x128xf32> to vector<1x8x128xf32>
    tpu.vector_store %arg10[%45, %c0_22, %c0_23], %48 {strides = array<i32>} : memref<8x8x128xf32, #tpu.memory_space<vmem>>, vector<1x8x128xf32>,
    %c1_i32 = arith.constant 1 : i32
    %49 = arith.index_cast %c1_i32 : i32 to index
    %c0_24 = arith.constant 0 : index
    %c0_25 = arith.constant 0 : index
    %50 = vector.load %arg11[%49, %c0_24, %c0_25] : memref<8x8x512xf32, #tpu.memory_space<vmem>>, vector<1x8x512xf32>
    %51 = vector.shape_cast %50 : vector<1x8x512xf32> to vector<8x512xf32>
    %52 = arith.truncf %44 : vector<8x128xf32> to vector<8x128xbf16>
    %c0_26 = arith.constant 0 : index
    %c0_27 = arith.constant 0 : index
    %53 = vector.load %arg6[%c0_26, %c0_27] : memref<128x512xbf16, #tpu.memory_space<vmem>>, vector<128x512xbf16>
    %cst_28 = arith.constant dense<0.000000e+00> : vector<8x512xf32>
    %54 = tpu.matmul %52, %53, %cst_28 {dimension_numbers = #tpu.dot_dimension_numbers<[1], [0], [0], [1], [0, 0, 1, 1], [], []>} : vector<8x128xbf16>, vector<128x512xbf16>, vector<8x512xf32> -> vector<8x512xf32>
    %55 = arith.addf %51, %54 : vector<8x512xf32>
    %56 = vector.extract_strided_slice %55 {offsets = [0, 0], sizes = [8, 256], strides = [1, 1]} : vector<8x512xf32> to vector<8x256xf32>
    %57 = arith.negf %56 : vector<8x256xf32>
    %58 = math.exp %57 : vector<8x256xf32>
    %cst_29 = arith.constant 1.000000e+00 : f32
    %59 = vector.broadcast %cst_29 : f32 to vector<8x256xf32>
    %60 = arith.addf %59, %58 : vector<8x256xf32>
    %61 = arith.divf %59, %60 : vector<8x256xf32>
    %62 = vector.extract_strided_slice %61 {offsets = [0, 0], sizes = [8, 128], strides = [1, 1]} : vector<8x256xf32> to vector<8x128xf32>
    %63 = vector.extract_strided_slice %61 {offsets = [0, 128], sizes = [8, 128], strides = [1, 1]} : vector<8x256xf32> to vector<8x128xf32>
    %64 = vector.extract_strided_slice %55 {offsets = [0, 384], sizes = [8, 128], strides = [1, 1]} : vector<8x512xf32> to vector<8x128xf32>
    %65 = math.tanh %64 : vector<8x128xf32>
    %66 = arith.mulf %63, %36 : vector<8x128xf32>
    %67 = arith.mulf %62, %65 : vector<8x128xf32>
    %68 = arith.addf %66, %67 : vector<8x128xf32>
    %69 = vector.extract_strided_slice %55 {offsets = [0, 256], sizes = [8, 128], strides = [1, 1]} : vector<8x512xf32> to vector<8x128xf32>
    %70 = arith.negf %69 : vector<8x128xf32>
    %71 = math.exp %70 : vector<8x128xf32>
    %cst_30 = arith.constant 1.000000e+00 : f32
    %72 = vector.broadcast %cst_30 : f32 to vector<8x128xf32>
    %73 = arith.addf %72, %71 : vector<8x128xf32>
    %74 = arith.divf %72, %73 : vector<8x128xf32>
    %75 = math.tanh %68 : vector<8x128xf32>
    %76 = arith.mulf %74, %75 : vector<8x128xf32>
    %77 = arith.index_cast %c1_i32 : i32 to index
    %c0_31 = arith.constant 0 : index
    %c0_32 = arith.constant 0 : index
    %78 = vector.load %arg10[%77, %c0_31, %c0_32] : memref<8x8x128xf32, #tpu.memory_space<vmem>>, vector<1x8x128xf32>
    %79 = vector.shape_cast %78 : vector<1x8x128xf32> to vector<8x128xf32>
    %80 = vector.shape_cast %76 : vector<8x128xf32> to vector<1x8x128xf32>
    tpu.vector_store %arg10[%77, %c0_31, %c0_32], %80 {strides = array<i32>} : memref<8x8x128xf32, #tpu.memory_space<vmem>>, vector<1x8x128xf32>,
    %c2_i32 = arith.constant 2 : i32
    %81 = arith.index_cast %c2_i32 : i32 to index
    %c0_33 = arith.constant 0 : index
    %c0_34 = arith.constant 0 : index
    %82 = vector.load %arg11[%81, %c0_33, %c0_34] : memref<8x8x512xf32, #tpu.memory_space<vmem>>, vector<1x8x512xf32>
    %83 = vector.shape_cast %82 : vector<1x8x512xf32> to vector<8x512xf32>
    %84 = arith.truncf %76 : vector<8x128xf32> to vector<8x128xbf16>
    %c0_35 = arith.constant 0 : index
    %c0_36 = arith.constant 0 : index
    %85 = vector.load %arg6[%c0_35, %c0_36] : memref<128x512xbf16, #tpu.memory_space<vmem>>, vector<128x512xbf16>
    %cst_37 = arith.constant dense<0.000000e+00> : vector<8x512xf32>
    %86 = tpu.matmul %84, %85, %cst_37 {dimension_numbers = #tpu.dot_dimension_numbers<[1], [0], [0], [1], [0, 0, 1, 1], [], []>} : vector<8x128xbf16>, vector<128x512xbf16>, vector<8x512xf32> -> vector<8x512xf32>
    %87 = arith.addf %83, %86 : vector<8x512xf32>
    %88 = vector.extract_strided_slice %87 {offsets = [0, 0], sizes = [8, 256], strides = [1, 1]} : vector<8x512xf32> to vector<8x256xf32>
    %89 = arith.negf %88 : vector<8x256xf32>
    %90 = math.exp %89 : vector<8x256xf32>
    %cst_38 = arith.constant 1.000000e+00 : f32
    %91 = vector.broadcast %cst_38 : f32 to vector<8x256xf32>
    %92 = arith.addf %91, %90 : vector<8x256xf32>
    %93 = arith.divf %91, %92 : vector<8x256xf32>
    %94 = vector.extract_strided_slice %93 {offsets = [0, 0], sizes = [8, 128], strides = [1, 1]} : vector<8x256xf32> to vector<8x128xf32>
    %95 = vector.extract_strided_slice %93 {offsets = [0, 128], sizes = [8, 128], strides = [1, 1]} : vector<8x256xf32> to vector<8x128xf32>
    %96 = vector.extract_strided_slice %87 {offsets = [0, 384], sizes = [8, 128], strides = [1, 1]} : vector<8x512xf32> to vector<8x128xf32>
    %97 = math.tanh %96 : vector<8x128xf32>
    %98 = arith.mulf %95, %68 : vector<8x128xf32>
    %99 = arith.mulf %94, %97 : vector<8x128xf32>
    %100 = arith.addf %98, %99 : vector<8x128xf32>
    %101 = vector.extract_strided_slice %87 {offsets = [0, 256], sizes = [8, 128], strides = [1, 1]} : vector<8x512xf32> to vector<8x128xf32>
    %102 = arith.negf %101 : vector<8x128xf32>
    %103 = math.exp %102 : vector<8x128xf32>
    %cst_39 = arith.constant 1.000000e+00 : f32
    %104 = vector.broadcast %cst_39 : f32 to vector<8x128xf32>
    %105 = arith.addf %104, %103 : vector<8x128xf32>
    %106 = arith.divf %104, %105 : vector<8x128xf32>
    %107 = math.tanh %100 : vector<8x128xf32>
    %108 = arith.mulf %106, %107 : vector<8x128xf32>
    %109 = arith.index_cast %c2_i32 : i32 to index
    %c0_40 = arith.constant 0 : index
    %c0_41 = arith.constant 0 : index
    %110 = vector.load %arg10[%109, %c0_40, %c0_41] : memref<8x8x128xf32, #tpu.memory_space<vmem>>, vector<1x8x128xf32>
    %111 = vector.shape_cast %110 : vector<1x8x128xf32> to vector<8x128xf32>
    %112 = vector.shape_cast %108 : vector<8x128xf32> to vector<1x8x128xf32>
    tpu.vector_store %arg10[%109, %c0_40, %c0_41], %112 {strides = array<i32>} : memref<8x8x128xf32, #tpu.memory_space<vmem>>, vector<1x8x128xf32>,
    %c3_i32 = arith.constant 3 : i32
    %113 = arith.index_cast %c3_i32 : i32 to index
    %c0_42 = arith.constant 0 : index
    %c0_43 = arith.constant 0 : index
    %114 = vector.load %arg11[%113, %c0_42, %c0_43] : memref<8x8x512xf32, #tpu.memory_space<vmem>>, vector<1x8x512xf32>
    %115 = vector.shape_cast %114 : vector<1x8x512xf32> to vector<8x512xf32>
    %116 = arith.truncf %108 : vector<8x128xf32> to vector<8x128xbf16>
    %c0_44 = arith.constant 0 : index
    %c0_45 = arith.constant 0 : index
    %117 = vector.load %arg6[%c0_44, %c0_45] : memref<128x512xbf16, #tpu.memory_space<vmem>>, vector<128x512xbf16>
    %cst_46 = arith.constant dense<0.000000e+00> : vector<8x512xf32>
    %118 = tpu.matmul %116, %117, %cst_46 {dimension_numbers = #tpu.dot_dimension_numbers<[1], [0], [0], [1], [0, 0, 1, 1], [], []>} : vector<8x128xbf16>, vector<128x512xbf16>, vector<8x512xf32> -> vector<8x512xf32>
    %119 = arith.addf %115, %118 : vector<8x512xf32>
    %120 = vector.extract_strided_slice %119 {offsets = [0, 0], sizes = [8, 256], strides = [1, 1]} : vector<8x512xf32> to vector<8x256xf32>
    %121 = arith.negf %120 : vector<8x256xf32>
    %122 = math.exp %121 : vector<8x256xf32>
    %cst_47 = arith.constant 1.000000e+00 : f32
    %123 = vector.broadcast %cst_47 : f32 to vector<8x256xf32>
    %124 = arith.addf %123, %122 : vector<8x256xf32>
    %125 = arith.divf %123, %124 : vector<8x256xf32>
    %126 = vector.extract_strided_slice %125 {offsets = [0, 0], sizes = [8, 128], strides = [1, 1]} : vector<8x256xf32> to vector<8x128xf32>
    %127 = vector.extract_strided_slice %125 {offsets = [0, 128], sizes = [8, 128], strides = [1, 1]} : vector<8x256xf32> to vector<8x128xf32>
    %128 = vector.extract_strided_slice %119 {offsets = [0, 384], sizes = [8, 128], strides = [1, 1]} : vector<8x512xf32> to vector<8x128xf32>
    %129 = math.tanh %128 : vector<8x128xf32>
    %130 = arith.mulf %127, %100 : vector<8x128xf32>
    %131 = arith.mulf %126, %129 : vector<8x128xf32>
    %132 = arith.addf %130, %131 : vector<8x128xf32>
    %133 = vector.extract_strided_slice %119 {offsets = [0, 256], sizes = [8, 128], strides = [1, 1]} : vector<8x512xf32> to vector<8x128xf32>
    %134 = arith.negf %133 : vector<8x128xf32>
    %135 = math.exp %134 : vector<8x128xf32>
    %cst_48 = arith.constant 1.000000e+00 : f32
    %136 = vector.broadcast %cst_48 : f32 to vector<8x128xf32>
    %137 = arith.addf %136, %135 : vector<8x128xf32>
    %138 = arith.divf %136, %137 : vector<8x128xf32>
    %139 = math.tanh %132 : vector<8x128xf32>
    %140 = arith.mulf %138, %139 : vector<8x128xf32>
    %141 = arith.index_cast %c3_i32 : i32 to index
    %c0_49 = arith.constant 0 : index
    %c0_50 = arith.constant 0 : index
    %142 = vector.load %arg10[%141, %c0_49, %c0_50] : memref<8x8x128xf32, #tpu.memory_space<vmem>>, vector<1x8x128xf32>
    %143 = vector.shape_cast %142 : vector<1x8x128xf32> to vector<8x128xf32>
    %144 = vector.shape_cast %140 : vector<8x128xf32> to vector<1x8x128xf32>
    tpu.vector_store %arg10[%141, %c0_49, %c0_50], %144 {strides = array<i32>} : memref<8x8x128xf32, #tpu.memory_space<vmem>>, vector<1x8x128xf32>,
    %c4_i32 = arith.constant 4 : i32
    %145 = arith.index_cast %c4_i32 : i32 to index
    %c0_51 = arith.constant 0 : index
    %c0_52 = arith.constant 0 : index
    %146 = vector.load %arg11[%145, %c0_51, %c0_52] : memref<8x8x512xf32, #tpu.memory_space<vmem>>, vector<1x8x512xf32>
    %147 = vector.shape_cast %146 : vector<1x8x512xf32> to vector<8x512xf32>
    %148 = arith.truncf %140 : vector<8x128xf32> to vector<8x128xbf16>
    %c0_53 = arith.constant 0 : index
    %c0_54 = arith.constant 0 : index
    %149 = vector.load %arg6[%c0_53, %c0_54] : memref<128x512xbf16, #tpu.memory_space<vmem>>, vector<128x512xbf16>
    %cst_55 = arith.constant dense<0.000000e+00> : vector<8x512xf32>
    %150 = tpu.matmul %148, %149, %cst_55 {dimension_numbers = #tpu.dot_dimension_numbers<[1], [0], [0], [1], [0, 0, 1, 1], [], []>} : vector<8x128xbf16>, vector<128x512xbf16>, vector<8x512xf32> -> vector<8x512xf32>
    %151 = arith.addf %147, %150 : vector<8x512xf32>
    %152 = vector.extract_strided_slice %151 {offsets = [0, 0], sizes = [8, 256], strides = [1, 1]} : vector<8x512xf32> to vector<8x256xf32>
    %153 = arith.negf %152 : vector<8x256xf32>
    %154 = math.exp %153 : vector<8x256xf32>
    %cst_56 = arith.constant 1.000000e+00 : f32
    %155 = vector.broadcast %cst_56 : f32 to vector<8x256xf32>
    %156 = arith.addf %155, %154 : vector<8x256xf32>
    %157 = arith.divf %155, %156 : vector<8x256xf32>
    %158 = vector.extract_strided_slice %157 {offsets = [0, 0], sizes = [8, 128], strides = [1, 1]} : vector<8x256xf32> to vector<8x128xf32>
    %159 = vector.extract_strided_slice %157 {offsets = [0, 128], sizes = [8, 128], strides = [1, 1]} : vector<8x256xf32> to vector<8x128xf32>
    %160 = vector.extract_strided_slice %151 {offsets = [0, 384], sizes = [8, 128], strides = [1, 1]} : vector<8x512xf32> to vector<8x128xf32>
    %161 = math.tanh %160 : vector<8x128xf32>
    %162 = arith.mulf %159, %132 : vector<8x128xf32>
    %163 = arith.mulf %158, %161 : vector<8x128xf32>
    %164 = arith.addf %162, %163 : vector<8x128xf32>
    %165 = vector.extract_strided_slice %151 {offsets = [0, 256], sizes = [8, 128], strides = [1, 1]} : vector<8x512xf32> to vector<8x128xf32>
    %166 = arith.negf %165 : vector<8x128xf32>
    %167 = math.exp %166 : vector<8x128xf32>
    %cst_57 = arith.constant 1.000000e+00 : f32
    %168 = vector.broadcast %cst_57 : f32 to vector<8x128xf32>
    %169 = arith.addf %168, %167 : vector<8x128xf32>
    %170 = arith.divf %168, %169 : vector<8x128xf32>
    %171 = math.tanh %164 : vector<8x128xf32>
    %172 = arith.mulf %170, %171 : vector<8x128xf32>
    %173 = arith.index_cast %c4_i32 : i32 to index
    %c0_58 = arith.constant 0 : index
    %c0_59 = arith.constant 0 : index
    %174 = vector.load %arg10[%173, %c0_58, %c0_59] : memref<8x8x128xf32, #tpu.memory_space<vmem>>, vector<1x8x128xf32>
    %175 = vector.shape_cast %174 : vector<1x8x128xf32> to vector<8x128xf32>
    %176 = vector.shape_cast %172 : vector<8x128xf32> to vector<1x8x128xf32>
    tpu.vector_store %arg10[%173, %c0_58, %c0_59], %176 {strides = array<i32>} : memref<8x8x128xf32, #tpu.memory_space<vmem>>, vector<1x8x128xf32>,
    %c5_i32 = arith.constant 5 : i32
    %177 = arith.index_cast %c5_i32 : i32 to index
    %c0_60 = arith.constant 0 : index
    %c0_61 = arith.constant 0 : index
    %178 = vector.load %arg11[%177, %c0_60, %c0_61] : memref<8x8x512xf32, #tpu.memory_space<vmem>>, vector<1x8x512xf32>
    %179 = vector.shape_cast %178 : vector<1x8x512xf32> to vector<8x512xf32>
    %180 = arith.truncf %172 : vector<8x128xf32> to vector<8x128xbf16>
    %c0_62 = arith.constant 0 : index
    %c0_63 = arith.constant 0 : index
    %181 = vector.load %arg6[%c0_62, %c0_63] : memref<128x512xbf16, #tpu.memory_space<vmem>>, vector<128x512xbf16>
    %cst_64 = arith.constant dense<0.000000e+00> : vector<8x512xf32>
    %182 = tpu.matmul %180, %181, %cst_64 {dimension_numbers = #tpu.dot_dimension_numbers<[1], [0], [0], [1], [0, 0, 1, 1], [], []>} : vector<8x128xbf16>, vector<128x512xbf16>, vector<8x512xf32> -> vector<8x512xf32>
    %183 = arith.addf %179, %182 : vector<8x512xf32>
    %184 = vector.extract_strided_slice %183 {offsets = [0, 0], sizes = [8, 256], strides = [1, 1]} : vector<8x512xf32> to vector<8x256xf32>
    %185 = arith.negf %184 : vector<8x256xf32>
    %186 = math.exp %185 : vector<8x256xf32>
    %cst_65 = arith.constant 1.000000e+00 : f32
    %187 = vector.broadcast %cst_65 : f32 to vector<8x256xf32>
    %188 = arith.addf %187, %186 : vector<8x256xf32>
    %189 = arith.divf %187, %188 : vector<8x256xf32>
    %190 = vector.extract_strided_slice %189 {offsets = [0, 0], sizes = [8, 128], strides = [1, 1]} : vector<8x256xf32> to vector<8x128xf32>
    %191 = vector.extract_strided_slice %189 {offsets = [0, 128], sizes = [8, 128], strides = [1, 1]} : vector<8x256xf32> to vector<8x128xf32>
    %192 = vector.extract_strided_slice %183 {offsets = [0, 384], sizes = [8, 128], strides = [1, 1]} : vector<8x512xf32> to vector<8x128xf32>
    %193 = math.tanh %192 : vector<8x128xf32>
    %194 = arith.mulf %191, %164 : vector<8x128xf32>
    %195 = arith.mulf %190, %193 : vector<8x128xf32>
    %196 = arith.addf %194, %195 : vector<8x128xf32>
    %197 = vector.extract_strided_slice %183 {offsets = [0, 256], sizes = [8, 128], strides = [1, 1]} : vector<8x512xf32> to vector<8x128xf32>
    %198 = arith.negf %197 : vector<8x128xf32>
    %199 = math.exp %198 : vector<8x128xf32>
    %cst_66 = arith.constant 1.000000e+00 : f32
    %200 = vector.broadcast %cst_66 : f32 to vector<8x128xf32>
    %201 = arith.addf %200, %199 : vector<8x128xf32>
    %202 = arith.divf %200, %201 : vector<8x128xf32>
    %203 = math.tanh %196 : vector<8x128xf32>
    %204 = arith.mulf %202, %203 : vector<8x128xf32>
    %205 = arith.index_cast %c5_i32 : i32 to index
    %c0_67 = arith.constant 0 : index
    %c0_68 = arith.constant 0 : index
    %206 = vector.load %arg10[%205, %c0_67, %c0_68] : memref<8x8x128xf32, #tpu.memory_space<vmem>>, vector<1x8x128xf32>
    %207 = vector.shape_cast %206 : vector<1x8x128xf32> to vector<8x128xf32>
    %208 = vector.shape_cast %204 : vector<8x128xf32> to vector<1x8x128xf32>
    tpu.vector_store %arg10[%205, %c0_67, %c0_68], %208 {strides = array<i32>} : memref<8x8x128xf32, #tpu.memory_space<vmem>>, vector<1x8x128xf32>,
    %c6_i32 = arith.constant 6 : i32
    %209 = arith.index_cast %c6_i32 : i32 to index
    %c0_69 = arith.constant 0 : index
    %c0_70 = arith.constant 0 : index
    %210 = vector.load %arg11[%209, %c0_69, %c0_70] : memref<8x8x512xf32, #tpu.memory_space<vmem>>, vector<1x8x512xf32>
    %211 = vector.shape_cast %210 : vector<1x8x512xf32> to vector<8x512xf32>
    %212 = arith.truncf %204 : vector<8x128xf32> to vector<8x128xbf16>
    %c0_71 = arith.constant 0 : index
    %c0_72 = arith.constant 0 : index
    %213 = vector.load %arg6[%c0_71, %c0_72] : memref<128x512xbf16, #tpu.memory_space<vmem>>, vector<128x512xbf16>
    %cst_73 = arith.constant dense<0.000000e+00> : vector<8x512xf32>
    %214 = tpu.matmul %212, %213, %cst_73 {dimension_numbers = #tpu.dot_dimension_numbers<[1], [0], [0], [1], [0, 0, 1, 1], [], []>} : vector<8x128xbf16>, vector<128x512xbf16>, vector<8x512xf32> -> vector<8x512xf32>
    %215 = arith.addf %211, %214 : vector<8x512xf32>
    %216 = vector.extract_strided_slice %215 {offsets = [0, 0], sizes = [8, 256], strides = [1, 1]} : vector<8x512xf32> to vector<8x256xf32>
    %217 = arith.negf %216 : vector<8x256xf32>
    %218 = math.exp %217 : vector<8x256xf32>
    %cst_74 = arith.constant 1.000000e+00 : f32
    %219 = vector.broadcast %cst_74 : f32 to vector<8x256xf32>
    %220 = arith.addf %219, %218 : vector<8x256xf32>
    %221 = arith.divf %219, %220 : vector<8x256xf32>
    %222 = vector.extract_strided_slice %221 {offsets = [0, 0], sizes = [8, 128], strides = [1, 1]} : vector<8x256xf32> to vector<8x128xf32>
    %223 = vector.extract_strided_slice %221 {offsets = [0, 128], sizes = [8, 128], strides = [1, 1]} : vector<8x256xf32> to vector<8x128xf32>
    %224 = vector.extract_strided_slice %215 {offsets = [0, 384], sizes = [8, 128], strides = [1, 1]} : vector<8x512xf32> to vector<8x128xf32>
    %225 = math.tanh %224 : vector<8x128xf32>
    %226 = arith.mulf %223, %196 : vector<8x128xf32>
    %227 = arith.mulf %222, %225 : vector<8x128xf32>
    %228 = arith.addf %226, %227 : vector<8x128xf32>
    %229 = vector.extract_strided_slice %215 {offsets = [0, 256], sizes = [8, 128], strides = [1, 1]} : vector<8x512xf32> to vector<8x128xf32>
    %230 = arith.negf %229 : vector<8x128xf32>
    %231 = math.exp %230 : vector<8x128xf32>
    %cst_75 = arith.constant 1.000000e+00 : f32
    %232 = vector.broadcast %cst_75 : f32 to vector<8x128xf32>
    %233 = arith.addf %232, %231 : vector<8x128xf32>
    %234 = arith.divf %232, %233 : vector<8x128xf32>
    %235 = math.tanh %228 : vector<8x128xf32>
    %236 = arith.mulf %234, %235 : vector<8x128xf32>
    %237 = arith.index_cast %c6_i32 : i32 to index
    %c0_76 = arith.constant 0 : index
    %c0_77 = arith.constant 0 : index
    %238 = vector.load %arg10[%237, %c0_76, %c0_77] : memref<8x8x128xf32, #tpu.memory_space<vmem>>, vector<1x8x128xf32>
    %239 = vector.shape_cast %238 : vector<1x8x128xf32> to vector<8x128xf32>
    %240 = vector.shape_cast %236 : vector<8x128xf32> to vector<1x8x128xf32>
    tpu.vector_store %arg10[%237, %c0_76, %c0_77], %240 {strides = array<i32>} : memref<8x8x128xf32, #tpu.memory_space<vmem>>, vector<1x8x128xf32>,
    %c7_i32 = arith.constant 7 : i32
    %241 = arith.index_cast %c7_i32 : i32 to index
    %c0_78 = arith.constant 0 : index
    %c0_79 = arith.constant 0 : index
    %242 = vector.load %arg11[%241, %c0_78, %c0_79] : memref<8x8x512xf32, #tpu.memory_space<vmem>>, vector<1x8x512xf32>
    %243 = vector.shape_cast %242 : vector<1x8x512xf32> to vector<8x512xf32>
    %244 = arith.truncf %236 : vector<8x128xf32> to vector<8x128xbf16>
    %c0_80 = arith.constant 0 : index
    %c0_81 = arith.constant 0 : index
    %245 = vector.load %arg6[%c0_80, %c0_81] : memref<128x512xbf16, #tpu.memory_space<vmem>>, vector<128x512xbf16>
    %cst_82 = arith.constant dense<0.000000e+00> : vector<8x512xf32>
    %246 = tpu.matmul %244, %245, %cst_82 {dimension_numbers = #tpu.dot_dimension_numbers<[1], [0], [0], [1], [0, 0, 1, 1], [], []>} : vector<8x128xbf16>, vector<128x512xbf16>, vector<8x512xf32> -> vector<8x512xf32>
    %247 = arith.addf %243, %246 : vector<8x512xf32>
    %248 = vector.extract_strided_slice %247 {offsets = [0, 0], sizes = [8, 256], strides = [1, 1]} : vector<8x512xf32> to vector<8x256xf32>
    %249 = arith.negf %248 : vector<8x256xf32>
    %250 = math.exp %249 : vector<8x256xf32>
    %cst_83 = arith.constant 1.000000e+00 : f32
    %251 = vector.broadcast %cst_83 : f32 to vector<8x256xf32>
    %252 = arith.addf %251, %250 : vector<8x256xf32>
    %253 = arith.divf %251, %252 : vector<8x256xf32>
    %254 = vector.extract_strided_slice %253 {offsets = [0, 0], sizes = [8, 128], strides = [1, 1]} : vector<8x256xf32> to vector<8x128xf32>
    %255 = vector.extract_strided_slice %253 {offsets = [0, 128], sizes = [8, 128], strides = [1, 1]} : vector<8x256xf32> to vector<8x128xf32>
    %256 = vector.extract_strided_slice %247 {offsets = [0, 384], sizes = [8, 128], strides = [1, 1]} : vector<8x512xf32> to vector<8x128xf32>
    %257 = math.tanh %256 : vector<8x128xf32>
    %258 = arith.mulf %255, %228 : vector<8x128xf32>
    %259 = arith.mulf %254, %257 : vector<8x128xf32>
    %260 = arith.addf %258, %259 : vector<8x128xf32>
    %261 = vector.extract_strided_slice %247 {offsets = [0, 256], sizes = [8, 128], strides = [1, 1]} : vector<8x512xf32> to vector<8x128xf32>
    %262 = arith.negf %261 : vector<8x128xf32>
    %263 = math.exp %262 : vector<8x128xf32>
    %cst_84 = arith.constant 1.000000e+00 : f32
    %264 = vector.broadcast %cst_84 : f32 to vector<8x128xf32>
    %265 = arith.addf %264, %263 : vector<8x128xf32>
    %266 = arith.divf %264, %265 : vector<8x128xf32>
    %267 = math.tanh %260 : vector<8x128xf32>
    %268 = arith.mulf %266, %267 : vector<8x128xf32>
    %269 = arith.index_cast %c7_i32 : i32 to index
    %c0_85 = arith.constant 0 : index
    %c0_86 = arith.constant 0 : index
    %270 = vector.load %arg10[%269, %c0_85, %c0_86] : memref<8x8x128xf32, #tpu.memory_space<vmem>>, vector<1x8x128xf32>
    %271 = vector.shape_cast %270 : vector<1x8x128xf32> to vector<8x128xf32>
    %272 = vector.shape_cast %268 : vector<8x128xf32> to vector<1x8x128xf32>
    tpu.vector_store %arg10[%269, %c0_85, %c0_86], %272 {strides = array<i32>} : memref<8x8x128xf32, #tpu.memory_space<vmem>>, vector<1x8x128xf32>,
    %c8_i32 = arith.constant 8 : i32
    %c0_87 = arith.constant 0 : index
    %c0_88 = arith.constant 0 : index
    %c0_89 = arith.constant 0 : index
    %273 = vector.load %arg10[%c0_87, %c0_88, %c0_89] : memref<8x8x128xf32, #tpu.memory_space<vmem>>, vector<8x8x128xf32>
    %274 = vector.shape_cast %273 : vector<8x8x128xf32> to vector<64x128xf32>
    %275 = arith.truncf %274 : vector<64x128xf32> to vector<64x128xbf16>
    %c0_90 = arith.constant 0 : index
    %c0_91 = arith.constant 0 : index
    %276 = vector.load %arg7[%c0_90, %c0_91] : memref<128x128xbf16, #tpu.memory_space<vmem>>, vector<128x128xbf16>
    %cst_92 = arith.constant dense<0.000000e+00> : vector<64x128xf32>
    %277 = tpu.matmul %275, %276, %cst_92 {dimension_numbers = #tpu.dot_dimension_numbers<[1], [0], [0], [1], [0, 0, 1, 1], [], []>} : vector<64x128xbf16>, vector<128x128xbf16>, vector<64x128xf32> -> vector<64x128xf32>
    %c0_93 = arith.constant 0 : index
    %c0_94 = arith.constant 0 : index
    %278 = vector.load %arg8[%c0_93, %c0_94] : memref<1x128xf32, #tpu.memory_space<vmem>>, vector<1x128xf32>
    %279 = vector.broadcast %278 : vector<1x128xf32> to vector<64x128xf32>
    %280 = arith.addf %277, %279 : vector<64x128xf32>
    %281 = vector.shape_cast %280 : vector<64x128xf32> to vector<8x8x128xf32>
    %c0_95 = arith.constant 0 : index
    %c0_96 = arith.constant 0 : index
    %c0_97 = arith.constant 0 : index
    %282 = vector.load %arg9[%c0_95, %c0_96, %c0_97] : memref<8x8x128xf32, #tpu.memory_space<vmem>>, vector<8x8x128xf32>
    tpu.vector_store %arg9[%c0_95, %c0_96, %c0_97], %281 {strides = array<i32>} : memref<8x8x128xf32, #tpu.memory_space<vmem>>, vector<8x8x128xf32>,
    return
  }
}

</mosaic_0001>

<llo_original>
// kernel: caption_decoder_forward.1
$region0: #{caption_decoder_forward.1}
  #allocation0 [shape = 'u32[]', space=smem, size = 0x4, offset = 0x4, fixed_abs, tag = 'smem constant byte address 0x4 - core index']
  #allocation1 [shape = 'u32[72,128]{1,0:T(1,128)}', space=vmem, size = 0x9000, scoped, tag = 'internal scratch']
  #allocation2 [shape = 'f32[8,8,512]{2,1,0:T(8,128)}', space=vmem, size = 0x20000, scoped, tag = 'scratch operand']
  %s0 = inlined_call_operand.vmem [shape: bf16[64,64], index: 0, kind: input, shape index: {}]
  %s1 = inlined_call_operand.vmem [shape: f32[8,32], index: 1, kind: input, shape index: {}]
  %s2 = inlined_call_operand.vmem [shape: bf16[32,256], index: 2, kind: input, shape index: {}]
  %s3 = inlined_call_operand.vmem [shape: f32[1,256], index: 3, kind: input, shape index: {}]
  %s4 = inlined_call_operand.vmem [shape: bf16[64,512], index: 4, kind: input, shape index: {}]
  %s5 = inlined_call_operand.vmem [shape: f32[1,512], index: 5, kind: input, shape index: {}]
  %s6 = inlined_call_operand.vmem [shape: bf16[128,512], index: 6, kind: input, shape index: {}]
  %s7 = inlined_call_operand.vmem [shape: bf16[128,128], index: 7, kind: input, shape index: {}]
  %s8 = inlined_call_operand.vmem [shape: f32[1,128], index: 8, kind: input, shape index: {}]
  %s9 = inlined_call_operand.vmem [shape: f32[8,8,128], index: 9, kind: output, shape index: {0}]
  %s10 = inlined_call_operand.vmem [shape: f32[8,8,128], index: 10, kind: output, shape index: {1}]
  %11 = xla_tuple %s9, %s10
  %s12 = sld [smem:[#allocation0]]
  $region54: #{caption_decoder_forward.1} parent=0
    _
  %s14 = ssub.s32 1, %s12
  %s15 = scalar_select 0, %s14, %s12
  // Predicated region
  $region2: #{caption_decoder_forward.1} parent=0 // pred_check
    _
  $region3: #{caption_decoder_forward.1} parent=0 // pred_check_branch
    %17 = sbr.rel (0) target = $region5
  $region4: #{caption_decoder_forward.1} parent=0 // pred_region
    _
  $region5: #{caption_decoder_forward.1} parent=0 // pred_fallthru
    _
  // Predicated region
  $region6: #{caption_decoder_forward.1} parent=0 // pred_check
    _
  $region7: #{caption_decoder_forward.1} parent=0 // pred_check_branch
    %19 = sbr.rel (0) target = $region9
  $region8: #{caption_decoder_forward.1} parent=0 // pred_region
    _
  $region9: #{caption_decoder_forward.1} parent=0 // pred_fallthru
    _
  // Predicated region
  $region10: #{caption_decoder_forward.1} parent=0 // pred_check
    _
  $region11: #{caption_decoder_forward.1} parent=0 // pred_check_branch
    %21 = sbr.rel (0) target = $region13
  $region12: #{caption_decoder_forward.1} parent=0 // pred_region
    _
  $region13: #{caption_decoder_forward.1} parent=0 // pred_fallthru
    _
  // Predicated region
  $region14: #{caption_decoder_forward.1} parent=0 // pred_check
    _
  $region15: #{caption_decoder_forward.1} parent=0 // pred_check_branch
    %23 = sbr.rel (0) target = $region17
  $region16: #{caption_decoder_forward.1} parent=0 // pred_region
    _
  $region17: #{caption_decoder_forward.1} parent=0 // pred_fallthru
    _
  // Predicated region
  $region18: #{caption_decoder_forward.1} parent=0 // pred_check
    _
  $region19: #{caption_decoder_forward.1} parent=0 // pred_check_branch
    %25 = sbr.rel (0) target = $region21
  $region20: #{caption_decoder_forward.1} parent=0 // pred_region
    _
  $region21: #{caption_decoder_forward.1} parent=0 // pred_fallthru
    _
  // Predicated region
  $region22: #{caption_decoder_forward.1} parent=0 // pred_check
    _
  $region23: #{caption_decoder_forward.1} parent=0 // pred_check_branch
    %27 = sbr.rel (0) target = $region25
  $region24: #{caption_decoder_forward.1} parent=0 // pred_region
    _
  $region25: #{caption_decoder_forward.1} parent=0 // pred_fallthru
    _
  // Predicated region
  $region26: #{caption_decoder_forward.1} parent=0 // pred_check
    _
  $region27: #{caption_decoder_forward.1} parent=0 // pred_check_branch
    %29 = sbr.rel (0) target = $region29
  $region28: #{caption_decoder_forward.1} parent=0 // pred_region
    _
  $region29: #{caption_decoder_forward.1} parent=0 // pred_fallthru
    _
  // Predicated region
  $region30: #{caption_decoder_forward.1} parent=0 // pred_check
    _
  $region31: #{caption_decoder_forward.1} parent=0 // pred_check_branch
    %31 = sbr.rel (0) target = $region33
  $region32: #{caption_decoder_forward.1} parent=0 // pred_region
    _
  $region33: #{caption_decoder_forward.1} parent=0 // pred_fallthru
    _
  // Predicated region
  $region34: #{caption_decoder_forward.1} parent=0 // pred_check
    _
  $region35: #{caption_decoder_forward.1} parent=0 // pred_check_branch
    %33 = sbr.rel (0) target = $region37
  $region36: #{caption_decoder_forward.1} parent=0 // pred_region
    _
  $region37: #{caption_decoder_forward.1} parent=0 // pred_fallthru
    _
  %v35 = vld [vmem:[%s1] sm:$0xff]
  %v36 = vpack.c.bf16 %v35, %v35
  %v37 = vld [vmem:[%s2] sm:$0xff]
  %v38 = vld [vmem:[%s2 + $0x8] sm:$0xff]
  %v39 = vld [vmem:[%s2 + $0x10] sm:$0xff]
  %v40 = vld [vmem:[%s2 + $0x18] sm:$0xff]
  %v41 = vld [vmem:[%s3] sm:$0x3]
  %v43 = vperm.slane %v41, 0
  %v44 = vperm.slane %v41, 1
  %v51 = vunpack.c.l.b16 %v37
  %v52 = vunpack.c.h.b16 %v37
  %v53 = vunpack.c.l.b16 %v38
  %v54 = vunpack.c.h.b16 %v38
  %v55 = vunpack.c.l.b16 %v39
  %v56 = vunpack.c.h.b16 %v39
  %v57 = vunpack.c.l.b16 %v40
  %v58 = vunpack.c.h.b16 %v40
  %v59 = vpack.c.b16 %v53, %v51
  %v60 = vpack.c.b16 %v54, %v52
  %v61 = vpack.c.b16 %v57, %v55
  %v62 = vpack.c.b16 %v58, %v56
  %vm67 = vcmask 261120
  %v69 = vsel %vm67, %v36, 0
  %71 = vmatpush.bf16.msra.mxu0 0
  %72 = vmatpush.bf16.msra.mxu0 0
  %73 = vmatpush.bf16.msra.mxu0 0
  %74 = vmatpush.bf16.msra.mxu0 0
  %75 = vmatpush.bf16.msra.mxu0 0
  %76 = vmatpush.bf16.msra.mxu0 0
  %77 = vmatpush.bf16.msra.mxu0 %v61
  %78 = vmatpush.bf16.msra.mxu0 %v59
  %79 = vmatmul.bf16.gmra.mxu0 %v69
  %v80 = vpop.f32.mrf.mxu0
  %v81 = vadd.f32 %v43, %v80
  %v82 = vpop.f32.mrf.mxu0
  %83 = vdwg.mxu0
  %84 = vmatpush.bf16.msra.mxu0 0
  %85 = vmatpush.bf16.msra.mxu0 0
  %86 = vmatpush.bf16.msra.mxu0 0
  %87 = vmatpush.bf16.msra.mxu0 0
  %88 = vmatpush.bf16.msra.mxu0 0
  %89 = vmatpush.bf16.msra.mxu0 0
  %90 = vmatpush.bf16.msra.mxu0 %v62
  %91 = vmatpush.bf16.msra.mxu0 %v60
  %92 = vmatmul.bf16.gmra.mxu0 %v69
  %v93 = vpop.f32.mrf.mxu0
  %v94 = vadd.f32 %v44, %v93
  %v95 = vpop.f32.mrf.mxu0
  %96 = vdwg.mxu0
  %v97 = vld [vmem:[%s0] sm:$0xf]
  %v98 = vld [vmem:[%s0 + $0x4] sm:$0xf]
  %v99 = vld [vmem:[%s0 + $0x8] sm:$0xf]
  %v100 = vld [vmem:[%s0 + $0xc] sm:$0xf]
  %v101 = vld [vmem:[%s0 + $0x10] sm:$0xf]
  %v102 = vld [vmem:[%s0 + $0x14] sm:$0xf]
  %v103 = vld [vmem:[%s0 + $0x18] sm:$0xf]
  %v104 = vld [vmem:[%s0 + $0x1c] sm:$0xf]
  %v105 = vld [vmem:[%s4] sm:$0xff]
  %v106 = vld [vmem:[%s4 + $0x8] sm:$0xff]
  %v107 = vld [vmem:[%s4 + $0x10] sm:$0xff]
  %v108 = vld [vmem:[%s4 + $0x18] sm:$0xff]
  %v109 = vld [vmem:[%s4 + $0x20] sm:$0xff]
  %v110 = vld [vmem:[%s4 + $0x28] sm:$0xff]
  %v111 = vld [vmem:[%s4 + $0x30] sm:$0xff]
  %v112 = vld [vmem:[%s4 + $0x38] sm:$0xff]
  %v113 = vld [vmem:[%s4 + $0x40] sm:$0xff]
  %v114 = vld [vmem:[%s4 + $0x48] sm:$0xff]
  %v115 = vld [vmem:[%s4 + $0x50] sm:$0xff]
  %v116 = vld [vmem:[%s4 + $0x58] sm:$0xff]
  %v117 = vld [vmem:[%s4 + $0x60] sm:$0xff]
  %v118 = vld [vmem:[%s4 + $0x68] sm:$0xff]
  %v119 = vld [vmem:[%s4 + $0x70] sm:$0xff]
  %v120 = vld [vmem:[%s4 + $0x78] sm:$0xff]
  %v121 = vld [vmem:[%s5] sm:$0xf]
  %v123 = vperm.slane %v121, 0
  %v124 = vperm.slane %v121, 1
  %v125 = vperm.slane %v121, 2
  %v126 = vperm.slane %v121, 3
  %v139 = vunpack.c.l.b16 %v97
  %v140 = vunpack.c.l.b16 %v98
  %v141 = vunpack.c.l.b16 %v99
  %v142 = vunpack.c.l.b16 %v100
  %v143 = vunpack.c.l.b16 %v101
  %v144 = vunpack.c.l.b16 %v102
  %v145 = vunpack.c.l.b16 %v103
  %v146 = vunpack.c.l.b16 %v104
  %v147 = vpack.c.b16 %v140, %v139
  %v148 = vpack.c.b16 %v142, %v141
  %v149 = vpack.c.b16 %v144, %v143
  %v150 = vpack.c.b16 %v146, %v145
  %v167 = vunpack.c.l.b16 %v105
  %v168 = vunpack.c.h.b16 %v105
  %v169 = vunpack.c.l.b16 %v106
  %v170 = vunpack.c.h.b16 %v106
  %v171 = vunpack.c.l.b16 %v107
  %v172 = vunpack.c.h.b16 %v107
  %v173 = vunpack.c.l.b16 %v108
  %v174 = vunpack.c.h.b16 %v108
  %v175 = vunpack.c.l.b16 %v109
  %v176 = vunpack.c.h.b16 %v109
  %v177 = vunpack.c.l.b16 %v110
  %v178 = vunpack.c.h.b16 %v110
  %v179 = vunpack.c.l.b16 %v111
  %v180 = vunpack.c.h.b16 %v111
  %v181 = vunpack.c.l.b16 %v112
  %v182 = vunpack.c.h.b16 %v112
  %v183 = vunpack.c.l.b16 %v113
  %v184 = vunpack.c.h.b16 %v113
  %v185 = vunpack.c.l.b16 %v114
  %v186 = vunpack.c.h.b16 %v114
  %v187 = vunpack.c.l.b16 %v115
  %v188 = vunpack.c.h.b16 %v115
  %v189 = vunpack.c.l.b16 %v116
  %v190 = vunpack.c.h.b16 %v116
  %v191 = vunpack.c.l.b16 %v117
  %v192 = vunpack.c.h.b16 %v117
  %v193 = vunpack.c.l.b16 %v118
  %v194 = vunpack.c.h.b16 %v118
  %v195 = vunpack.c.l.b16 %v119
  %v196 = vunpack.c.h.b16 %v119
  %v197 = vunpack.c.l.b16 %v120
  %v198 = vunpack.c.h.b16 %v120
  %v199 = vpack.c.b16 %v171, %v167
  %v200 = vpack.c.b16 %v172, %v168
  %v201 = vpack.c.b16 %v173, %v169
  %v202 = vpack.c.b16 %v174, %v170
  %v203 = vpack.c.b16 %v179, %v175
  %v204 = vpack.c.b16 %v180, %v176
  %v205 = vpack.c.b16 %v181, %v177
  %v206 = vpack.c.b16 %v182, %v178
  %v207 = vpack.c.b16 %v187, %v183
  %v208 = vpack.c.b16 %v188, %v184
  %v209 = vpack.c.b16 %v189, %v185
  %v210 = vpack.c.b16 %v190, %v186
  %v211 = vpack.c.b16 %v195, %v191
  %v212 = vpack.c.b16 %v196, %v192
  %v213 = vpack.c.b16 %v197, %v193
  %v214 = vpack.c.b16 %v198, %v194
  %vm231 = vcmask 523264
  %v233 = vsel %vm231, %v147, 0
  %v236 = vsel %vm231, %v148, 0
  %v239 = vsel %vm231, %v149, 0
  %v242 = vsel %vm231, %v150, 0
  %244 = vmatpush.bf16.msra.mxu0 0
  %245 = vmatpush.bf16.msra.mxu0 0
  %246 = vmatpush.bf16.msra.mxu0 0
  %247 = vmatpush.bf16.msra.mxu0 0
  %248 = vmatpush.bf16.msra.mxu0 %v211
  %249 = vmatpush.bf16.msra.mxu0 %v207
  %250 = vmatpush.bf16.msra.mxu0 %v203
  %251 = vmatpush.bf16.msra.mxu0 %v199
  %252 = vmatmul.bf16.gmra.mxu0 %v233
  %v253 = vpop.f32.mrf.mxu0
  %v254 = vadd.f32 %v123, %v253
  %v255 = vpop.f32.mrf.mxu0
  %v256 = vadd.f32 %v123, %v255
  %257 = vmatmul.bf16.gmra.mxu0 %v236
  %v258 = vpop.f32.mrf.mxu0
  %v259 = vadd.f32 %v123, %v258
  %v260 = vpop.f32.mrf.mxu0
  %v261 = vadd.f32 %v123, %v260
  %262 = vmatmul.bf16.gmra.mxu0 %v239
  %v263 = vpop.f32.mrf.mxu0
  %v264 = vadd.f32 %v123, %v263
  %v265 = vpop.f32.mrf.mxu0
  %v266 = vadd.f32 %v123, %v265
  %267 = vmatmul.bf16.gmra.mxu0 %v242
  %v268 = vpop.f32.mrf.mxu0
  %v269 = vadd.f32 %v123, %v268
  %v270 = vpop.f32.mrf.mxu0
  %v271 = vadd.f32 %v123, %v270
  %272 = vdwg.mxu0
  %273 = vmatpush.bf16.msra.mxu0 0
  %274 = vmatpush.bf16.msra.mxu0 0
  %275 = vmatpush.bf16.msra.mxu0 0
  %276 = vmatpush.bf16.msra.mxu0 0
  %277 = vmatpush.bf16.msra.mxu0 %v212
  %278 = vmatpush.bf16.msra.mxu0 %v208
  %279 = vmatpush.bf16.msra.mxu0 %v204
  %280 = vmatpush.bf16.msra.mxu0 %v200
  %281 = vmatmul.bf16.gmra.mxu0 %v233
  %v282 = vpop.f32.mrf.mxu0
  %v283 = vadd.f32 %v124, %v282
  %v284 = vpop.f32.mrf.mxu0
  %v285 = vadd.f32 %v124, %v284
  %286 = vmatmul.bf16.gmra.mxu0 %v236
  %v287 = vpop.f32.mrf.mxu0
  %v288 = vadd.f32 %v124, %v287
  %v289 = vpop.f32.mrf.mxu0
  %v290 = vadd.f32 %v124, %v289
  %291 = vmatmul.bf16.gmra.mxu0 %v239
  %v292 = vpop.f32.mrf.mxu0
  %v293 = vadd.f32 %v124, %v292
  %v294 = vpop.f32.mrf.mxu0
  %v295 = vadd.f32 %v124, %v294
  %296 = vmatmul.bf16.gmra.mxu0 %v242
  %v297 = vpop.f32.mrf.mxu0
  %v298 = vadd.f32 %v124, %v297
  %v299 = vpop.f32.mrf.mxu0
  %v300 = vadd.f32 %v124, %v299
  %301 = vdwg.mxu0
  %302 = vmatpush.bf16.msra.mxu0 0
  %303 = vmatpush.bf16.msra.mxu0 0
  %304 = vmatpush.bf16.msra.mxu0 0
  %305 = vmatpush.bf16.msra.mxu0 0
  %306 = vmatpush.bf16.msra.mxu0 %v213
  %307 = vmatpush.bf16.msra.mxu0 %v209
  %308 = vmatpush.bf16.msra.mxu0 %v205
  %309 = vmatpush.bf16.msra.mxu0 %v201
  %310 = vmatmul.bf16.gmra.mxu0 %v233
  %v311 = vpop.f32.mrf.mxu0
  %v312 = vadd.f32 %v125, %v311
  %v313 = vpop.f32.mrf.mxu0
  %v314 = vadd.f32 %v125, %v313
  %315 = vmatmul.bf16.gmra.mxu0 %v236
  %v316 = vpop.f32.mrf.mxu0
  %v317 = vadd.f32 %v125, %v316
  %v318 = vpop.f32.mrf.mxu0
  %v319 = vadd.f32 %v125, %v318
  %320 = vmatmul.bf16.gmra.mxu0 %v239
  %v321 = vpop.f32.mrf.mxu0
  %v322 = vadd.f32 %v125, %v321
  %v323 = vpop.f32.mrf.mxu0
  %v324 = vadd.f32 %v125, %v323
  %325 = vmatmul.bf16.gmra.mxu0 %v242
  %v326 = vpop.f32.mrf.mxu0
  %v327 = vadd.f32 %v125, %v326
  %v328 = vpop.f32.mrf.mxu0
  %v329 = vadd.f32 %v125, %v328
  %330 = vdwg.mxu0
  %331 = vmatpush.bf16.msra.mxu0 0
  %332 = vmatpush.bf16.msra.mxu0 0
  %333 = vmatpush.bf16.msra.mxu0 0
  %334 = vmatpush.bf16.msra.mxu0 0
  %335 = vmatpush.bf16.msra.mxu0 %v214
  %336 = vmatpush.bf16.msra.mxu0 %v210
  %337 = vmatpush.bf16.msra.mxu0 %v206
  %338 = vmatpush.bf16.msra.mxu0 %v202
  %339 = vmatmul.bf16.gmra.mxu0 %v233
  %v340 = vpop.f32.mrf.mxu0
  %v341 = vadd.f32 %v126, %v340
  %v342 = vpop.f32.mrf.mxu0
  %v343 = vadd.f32 %v126, %v342
  %344 = vmatmul.bf16.gmra.mxu0 %v236
  %v345 = vpop.f32.mrf.mxu0
  %v346 = vadd.f32 %v126, %v345
  %v347 = vpop.f32.mrf.mxu0
  %v348 = vadd.f32 %v126, %v347
  %349 = vmatmul.bf16.gmra.mxu0 %v239
  %v350 = vpop.f32.mrf.mxu0
  %v351 = vadd.f32 %v126, %v350
  %v352 = vpop.f32.mrf.mxu0
  %v353 = vadd.f32 %v126, %v352
  %354 = vmatmul.bf16.gmra.mxu0 %v242
  %v355 = vpop.f32.mrf.mxu0
  %v356 = vadd.f32 %v126, %v355
  %v357 = vpop.f32.mrf.mxu0
  %v358 = vadd.f32 %v126, %v357
  %359 = vdwg.mxu0
  %360 = vst [vmem:[#allocation2] sm:$0xff] %v254
  %361 = vst [vmem:[#allocation2 + $0x8] sm:$0xff] %v283
  %362 = vst [vmem:[#allocation2 + $0x10] sm:$0xff] %v312
  %363 = vst [vmem:[#allocation2 + $0x18] sm:$0xff] %v341
  %364 = vst [vmem:[#allocation2 + $0x20] sm:$0xff] %v256
  %365 = vst [vmem:[#allocation2 + $0x28] sm:$0xff] %v285
  %366 = vst [vmem:[#allocation2 + $0x30] sm:$0xff] %v314
  %367 = vst [vmem:[#allocation2 + $0x38] sm:$0xff] %v343
  %368 = vst [vmem:[#allocation2 + $0x40] sm:$0xff] %v259
  %369 = vst [vmem:[#allocation2 + $0x48] sm:$0xff] %v288
  %370 = vst [vmem:[#allocation2 + $0x50] sm:$0xff] %v317
  %371 = vst [vmem:[#allocation2 + $0x58] sm:$0xff] %v346
  %372 = vst [vmem:[#allocation2 + $0x60] sm:$0xff] %v261
  %373 = vst [vmem:[#allocation2 + $0x68] sm:$0xff] %v290
  %374 = vst [vmem:[#allocation2 + $0x70] sm:$0xff] %v319
  %375 = vst [vmem:[#allocation2 + $0x78] sm:$0xff] %v348
  %376 = vst [vmem:[#allocation2 + $0x80] sm:$0xff] %v264
  %377 = vst [vmem:[#allocation2 + $0x88] sm:$0xff] %v293
  %378 = vst [vmem:[#allocation2 + $0x90] sm:$0xff] %v322
  %379 = vst [vmem:[#allocation2 + $0x98] sm:$0xff] %v351
  %380 = vst [vmem:[#allocation2 + $0xa0] sm:$0xff] %v266
  %381 = vst [vmem:[#allocation2 + $0xa8] sm:$0xff] %v295
  %382 = vst [vmem:[#allocation2 + $0xb0] sm:$0xff] %v324
  %383 = vst [vmem:[#allocation2 + $0xb8] sm:$0xff] %v353
  %384 = vst [vmem:[#allocation2 + $0xc0] sm:$0xff] %v269
  %385 = vst [vmem:[#allocation2 + $0xc8] sm:$0xff] %v298
  %386 = vst [vmem:[#allocation2 + $0xd0] sm:$0xff] %v327
  %387 = vst [vmem:[#allocation2 + $0xd8] sm:$0xff] %v356
  %388 = vst [vmem:[#allocation2 + $0xe0] sm:$0xff] %v271
  %389 = vst [vmem:[#allocation2 + $0xe8] sm:$0xff] %v300
  %390 = vst [vmem:[#allocation2 + $0xf0] sm:$0xff] %v329
  %391 = vst [vmem:[#allocation2 + $0xf8] sm:$0xff] %v358
  %v392 = vld [vmem:[#allocation2] sm:$0xff]
  %v393 = vld [vmem:[#allocation2 + $0x8] sm:$0xff]
  %v394 = vld [vmem:[#allocation2 + $0x10] sm:$0xff]
  %v395 = vld [vmem:[#allocation2 + $0x18] sm:$0xff]
  %v396 = vpack.c.bf16 %v81, %v81
  %v397 = vld [vmem:[%s6] sm:$0xff]
  %v398 = vld [vmem:[%s6 + $0x8] sm:$0xff]
  %v399 = vld [vmem:[%s6 + $0x10] sm:$0xff]
  %v400 = vld [vmem:[%s6 + $0x18] sm:$0xff]
  %v401 = vld [vmem:[%s6 + $0x20] sm:$0xff]
  %v402 = vld [vmem:[%s6 + $0x28] sm:$0xff]
  %v403 = vld [vmem:[%s6 + $0x30] sm:$0xff]
  %v404 = vld [vmem:[%s6 + $0x38] sm:$0xff]
  %v405 = vld [vmem:[%s6 + $0x40] sm:$0xff]
  %v406 = vld [vmem:[%s6 + $0x48] sm:$0xff]
  %v407 = vld [vmem:[%s6 + $0x50] sm:$0xff]
  %v408 = vld [vmem:[%s6 + $0x58] sm:$0xff]
  %v409 = vld [vmem:[%s6 + $0x60] sm:$0xff]
  %v410 = vld [vmem:[%s6 + $0x68] sm:$0xff]
  %v411 = vld [vmem:[%s6 + $0x70] sm:$0xff]
  %v412 = vld [vmem:[%s6 + $0x78] sm:$0xff]
  %v413 = vld [vmem:[%s6 + $0x80] sm:$0xff]
  %v414 = vld [vmem:[%s6 + $0x88] sm:$0xff]
  %v415 = vld [vmem:[%s6 + $0x90] sm:$0xff]
  %v416 = vld [vmem:[%s6 + $0x98] sm:$0xff]
  %v417 = vld [vmem:[%s6 + $0xa0] sm:$0xff]
  %v418 = vld [vmem:[%s6 + $0xa8] sm:$0xff]
  %v419 = vld [vmem:[%s6 + $0xb0] sm:$0xff]
  %v420 = vld [vmem:[%s6 + $0xb8] sm:$0xff]
  %v421 = vld [vmem:[%s6 + $0xc0] sm:$0xff]
  %v422 = vld [vmem:[%s6 + $0xc8] sm:$0xff]
  %v423 = vld [vmem:[%s6 + $0xd0] sm:$0xff]
  %v424 = vld [vmem:[%s6 + $0xd8] sm:$0xff]
  %v425 = vld [vmem:[%s6 + $0xe0] sm:$0xff]
  %v426 = vld [vmem:[%s6 + $0xe8] sm:$0xff]
  %v427 = vld [vmem:[%s6 + $0xf0] sm:$0xff]
  %v428 = vld [vmem:[%s6 + $0xf8] sm:$0xff]
  %v461 = vunpack.c.l.b16 %v397
  %v462 = vunpack.c.h.b16 %v397
  %v463 = vunpack.c.l.b16 %v398
  %v464 = vunpack.c.h.b16 %v398
  %v465 = vunpack.c.l.b16 %v399
  %v466 = vunpack.c.h.b16 %v399
  %v467 = vunpack.c.l.b16 %v400
  %v468 = vunpack.c.h.b16 %v400
  %v469 = vunpack.c.l.b16 %v401
  %v470 = vunpack.c.h.b16 %v401
  %v471 = vunpack.c.l.b16 %v402
  %v472 = vunpack.c.h.b16 %v402
  %v473 = vunpack.c.l.b16 %v403
  %v474 = vunpack.c.h.b16 %v403
  %v475 = vunpack.c.l.b16 %v404
  %v476 = vunpack.c.h.b16 %v404
  %v477 = vunpack.c.l.b16 %v405
  %v478 = vunpack.c.h.b16 %v405
  %v479 = vunpack.c.l.b16 %v406
  %v480 = vunpack.c.h.b16 %v406
  %v481 = vunpack.c.l.b16 %v407
  %v482 = vunpack.c.h.b16 %v407
  %v483 = vunpack.c.l.b16 %v408
  %v484 = vunpack.c.h.b16 %v408
  %v485 = vunpack.c.l.b16 %v409
  %v486 = vunpack.c.h.b16 %v409
  %v487 = vunpack.c.l.b16 %v410
  %v488 = vunpack.c.h.b16 %v410
  %v489 = vunpack.c.l.b16 %v411
  %v490 = vunpack.c.h.b16 %v411
  %v491 = vunpack.c.l.b16 %v412
  %v492 = vunpack.c.h.b16 %v412
  %v493 = vunpack.c.l.b16 %v413
  %v494 = vunpack.c.h.b16 %v413
  %v495 = vunpack.c.l.b16 %v414
  %v496 = vunpack.c.h.b16 %v414
  %v497 = vunpack.c.l.b16 %v415
  %v498 = vunpack.c.h.b16 %v415
  %v499 = vunpack.c.l.b16 %v416
  %v500 = vunpack.c.h.b16 %v416
  %v501 = vunpack.c.l.b16 %v417
  %v502 = vunpack.c.h.b16 %v417
  %v503 = vunpack.c.l.b16 %v418
  %v504 = vunpack.c.h.b16 %v418
  %v505 = vunpack.c.l.b16 %v419
  %v506 = vunpack.c.h.b16 %v419
  %v507 = vunpack.c.l.b16 %v420
  %v508 = vunpack.c.h.b16 %v420
  %v509 = vunpack.c.l.b16 %v421
  %v510 = vunpack.c.h.b16 %v421
  %v511 = vunpack.c.l.b16 %v422
  %v512 = vunpack.c.h.b16 %v422
  %v513 = vunpack.c.l.b16 %v423
  %v514 = vunpack.c.h.b16 %v423
  %v515 = vunpack.c.l.b16 %v424
  %v516 = vunpack.c.h.b16 %v424
  %v517 = vunpack.c.l.b16 %v425
  %v518 = vunpack.c.h.b16 %v425
  %v519 = vunpack.c.l.b16 %v426
  %v520 = vunpack.c.h.b16 %v426
  %v521 = vunpack.c.l.b16 %v427
  %v522 = vunpack.c.h.b16 %v427
  %v523 = vunpack.c.l.b16 %v428
  %v524 = vunpack.c.h.b16 %v428
  %v525 = vpack.c.b16 %v465, %v461
  %v526 = vpack.c.b16 %v466, %v462
  %v527 = vpack.c.b16 %v467, %v463
  %v528 = vpack.c.b16 %v468, %v464
  %v529 = vpack.c.b16 %v473, %v469
  %v530 = vpack.c.b16 %v474, %v470
  %v531 = vpack.c.b16 %v475, %v471
  %v532 = vpack.c.b16 %v476, %v472
  %v533 = vpack.c.b16 %v481, %v477
  %v534 = vpack.c.b16 %v482, %v478
  %v535 = vpack.c.b16 %v483, %v479
  %v536 = vpack.c.b16 %v484, %v480
  %v537 = vpack.c.b16 %v489, %v485
  %v538 = vpack.c.b16 %v490, %v486
  %v539 = vpack.c.b16 %v491, %v487
  %v540 = vpack.c.b16 %v492, %v488
  %v541 = vpack.c.b16 %v497, %v493
  %v542 = vpack.c.b16 %v498, %v494
  %v543 = vpack.c.b16 %v499, %v495
  %v544 = vpack.c.b16 %v500, %v496
  %v545 = vpack.c.b16 %v505, %v501
  %v546 = vpack.c.b16 %v506, %v502
  %v547 = vpack.c.b16 %v507, %v503
  %v548 = vpack.c.b16 %v508, %v504
  %v549 = vpack.c.b16 %v513, %v509
  %v550 = vpack.c.b16 %v514, %v510
  %v551 = vpack.c.b16 %v515, %v511
  %v552 = vpack.c.b16 %v516, %v512
  %v553 = vpack.c.b16 %v521, %v517
  %v554 = vpack.c.b16 %v522, %v518
  %v555 = vpack.c.b16 %v523, %v519
  %v556 = vpack.c.b16 %v524, %v520
  %589 = vmatpush.bf16.msra.mxu0 %v553
  %590 = vmatpush.bf16.msra.mxu0 %v549
  %591 = vmatpush.bf16.msra.mxu0 %v545
  %592 = vmatpush.bf16.msra.mxu0 %v541
  %593 = vmatpush.bf16.msra.mxu0 %v537
  %594 = vmatpush.bf16.msra.mxu0 %v533
  %595 = vmatpush.bf16.msra.mxu0 %v529
  %596 = vmatpush.bf16.msra.mxu0 %v525
  %597 = vmatmul.bf16.gmra.mxu0 %v396
  %v598 = vpop.f32.mrf.mxu0
  %v599 = vadd.f32 0.0, %v598
  %v600 = vpop.f32.mrf.mxu0
  %601 = vdwg.mxu0
  %602 = vmatpush.bf16.msra.mxu0 %v554
  %603 = vmatpush.bf16.msra.mxu0 %v550
  %604 = vmatpush.bf16.msra.mxu0 %v546
  %605 = vmatpush.bf16.msra.mxu0 %v542
  %606 = vmatpush.bf16.msra.mxu0 %v538
  %607 = vmatpush.bf16.msra.mxu0 %v534
  %608 = vmatpush.bf16.msra.mxu0 %v530
  %609 = vmatpush.bf16.msra.mxu0 %v526
  %610 = vmatmul.bf16.gmra.mxu0 %v396
  %v611 = vpop.f32.mrf.mxu0
  %v612 = vadd.f32 0.0, %v611
  %v613 = vpop.f32.mrf.mxu0
  %614 = vdwg.mxu0
  %615 = vmatpush.bf16.msra.mxu0 %v555
  %616 = vmatpush.bf16.msra.mxu0 %v551
  %617 = vmatpush.bf16.msra.mxu0 %v547
  %618 = vmatpush.bf16.msra.mxu0 %v543
  %619 = vmatpush.bf16.msra.mxu0 %v539
  %620 = vmatpush.bf16.msra.mxu0 %v535
  %621 = vmatpush.bf16.msra.mxu0 %v531
  %622 = vmatpush.bf16.msra.mxu0 %v527
  %623 = vmatmul.bf16.gmra.mxu0 %v396
  %v624 = vpop.f32.mrf.mxu0
  %v625 = vadd.f32 0.0, %v624
  %v626 = vpop.f32.mrf.mxu0
  %627 = vdwg.mxu0
  %628 = vmatpush.bf16.msra.mxu0 %v556
  %629 = vmatpush.bf16.msra.mxu0 %v552
  %630 = vmatpush.bf16.msra.mxu0 %v548
  %631 = vmatpush.bf16.msra.mxu0 %v544
  %632 = vmatpush.bf16.msra.mxu0 %v540
  %633 = vmatpush.bf16.msra.mxu0 %v536
  %634 = vmatpush.bf16.msra.mxu0 %v532
  %635 = vmatpush.bf16.msra.mxu0 %v528
  %636 = vmatmul.bf16.gmra.mxu0 %v396
  %v637 = vpop.f32.mrf.mxu0
  %v638 = vadd.f32 0.0, %v637
  %v639 = vpop.f32.mrf.mxu0
  %640 = vdwg.mxu0
  %v641 = vadd.f32 %v392, %v599
  %v642 = vadd.f32 %v393, %v612
  %v643 = vadd.f32 %v394, %v625
  %v644 = vadd.f32 %v395, %v638
  %v645 = vxor.u32 %v641, 2147483648
  %v646 = vxor.u32 %v642, 2147483648
  %v647 = vmul.f32 %v645, 1.442695
  %v648 = vpow.pop %v647
  %v649 = vmul.f32 %v646, 1.442695
  %v650 = vpow.pop %v649
  %v651 = vadd.f32 %v648, 1.0
  %v652 = vadd.f32 %v650, 1.0
  %v653 = vrcp.pop %v651
  %v654 = vmul.f32 %v651, %v653
  %v655 = vsub.f32 1.0, %v654
  %v656 = vmul.f32 %v653, %v655
  %v657 = vadd.f32 %v653, %v656
  %vm658 = vweird.f32 %v651
  %vm659 = vweird.f32 %v653
  %vm660 = vmor %vm658, %vm659
  %v661 = vsel %vm660, %v653, %v657
  %v662 = vand.u32 2147483647, %v651
  %vm663 = vcmp.eq.f32.partialorder %v662, 8.507059e+37
  %v664 = vand.u32 %v651, 2147483648
  %v665 = vor.u32 1.1754944e-38, %v664
  %v666 = vsel %vm663, %v665, %v661
  %v667 = vmul.f32 1.0, %v666
  %v668 = vrcp.pop %v652
  %v669 = vmul.f32 %v652, %v668
  %v670 = vsub.f32 1.0, %v669
  %v671 = vmul.f32 %v668, %v670
  %v672 = vadd.f32 %v668, %v671
  %vm673 = vweird.f32 %v652
  %vm674 = vweird.f32 %v668
  %vm675 = vmor %vm673, %vm674
  %v676 = vsel %vm675, %v668, %v672
  %v677 = vand.u32 2147483647, %v652
  %vm678 = vcmp.eq.f32.partialorder %v677, 8.507059e+37
  %v679 = vand.u32 %v652, 2147483648
  %v680 = vor.u32 1.1754944e-38, %v679
  %v681 = vsel %vm678, %v680, %v676
  %v682 = vmul.f32 1.0, %v681
  %v683 = vtanh.pop %v644
  %v684 = vmul.f32 %v682, %v94
  %v685 = vmul.f32 %v667, %v683
  %v686 = vadd.f32 %v684, %v685
  %v687 = vxor.u32 %v643, 2147483648
  %v688 = vmul.f32 %v687, 1.442695
  %v689 = vpow.pop %v688
  %v690 = vadd.f32 %v689, 1.0
  %v691 = vrcp.pop %v690
  %v692 = vmul.f32 %v690, %v691
  %v693 = vsub.f32 1.0, %v692
  %v694 = vmul.f32 %v691, %v693
  %v695 = vadd.f32 %v691, %v694
  %vm696 = vweird.f32 %v690
  %vm697 = vweird.f32 %v691
  %vm698 = vmor %vm696, %vm697
  %v699 = vsel %vm698, %v691, %v695
  %v700 = vand.u32 2147483647, %v690
  %vm701 = vcmp.eq.f32.partialorder %v700, 8.507059e+37
  %v702 = vand.u32 %v690, 2147483648
  %v703 = vor.u32 1.1754944e-38, %v702
  %v704 = vsel %vm701, %v703, %v699
  %v705 = vmul.f32 1.0, %v704
  %v706 = vtanh.pop %v686
  %v707 = vmul.f32 %v705, %v706
  %708 = vst [vmem:[%s10] sm:$0xff] %v707
  %s709 = scalar_lea.vmem [#allocation2], 32
  %v710 = vld [vmem:[%s709] sm:$0xff]
  %v711 = vld [vmem:[%s709 + $0x8] sm:$0xff]
  %v712 = vld [vmem:[%s709 + $0x10] sm:$0xff]
  %v713 = vld [vmem:[%s709 + $0x18] sm:$0xff]
  %v714 = vpack.c.bf16 %v707, %v707
  %v715 = vld [vmem:[%s6] sm:$0xff]
  %v716 = vld [vmem:[%s6 + $0x8] sm:$0xff]
  %v717 = vld [vmem:[%s6 + $0x10] sm:$0xff]
  %v718 = vld [vmem:[%s6 + $0x18] sm:$0xff]
  %v719 = vld [vmem:[%s6 + $0x20] sm:$0xff]
  %v720 = vld [vmem:[%s6 + $0x28] sm:$0xff]
  %v721 = vld [vmem:[%s6 + $0x30] sm:$0xff]
  %v722 = vld [vmem:[%s6 + $0x38] sm:$0xff]
  %v723 = vld [vmem:[%s6 + $0x40] sm:$0xff]
  %v724 = vld [vmem:[%s6 + $0x48] sm:$0xff]
  %v725 = vld [vmem:[%s6 + $0x50] sm:$0xff]
  %v726 = vld [vmem:[%s6 + $0x58] sm:$0xff]
  %v727 = vld [vmem:[%s6 + $0x60] sm:$0xff]
  %v728 = vld [vmem:[%s6 + $0x68] sm:$0xff]
  %v729 = vld [vmem:[%s6 + $0x70] sm:$0xff]
  %v730 = vld [vmem:[%s6 + $0x78] sm:$0xff]
  %v731 = vld [vmem:[%s6 + $0x80] sm:$0xff]
  %v732 = vld [vmem:[%s6 + $0x88] sm:$0xff]
  %v733 = vld [vmem:[%s6 + $0x90] sm:$0xff]
  %v734 = vld [vmem:[%s6 + $0x98] sm:$0xff]
  %v735 = vld [vmem:[%s6 + $0xa0] sm:$0xff]
  %v736 = vld [vmem:[%s6 + $0xa8] sm:$0xff]
  %v737 = vld [vmem:[%s6 + $0xb0] sm:$0xff]
  %v738 = vld [vmem:[%s6 + $0xb8] sm:$0xff]
  %v739 = vld [vmem:[%s6 + $0xc0] sm:$0xff]
  %v740 = vld [vmem:[%s6 + $0xc8] sm:$0xff]
  %v741 = vld [vmem:[%s6 + $0xd0] sm:$0xff]
  %v742 = vld [vmem:[%s6 + $0xd8] sm:$0xff]
  %v743 = vld [vmem:[%s6 + $0xe0] sm:$0xff]
  %v744 = vld [vmem:[%s6 + $0xe8] sm:$0xff]
  %v745 = vld [vmem:[%s6 + $0xf0] sm:$0xff]
  %v746 = vld [vmem:[%s6 + $0xf8] sm:$0xff]
  %v779 = vunpack.c.l.b16 %v715
  %v780 = vunpack.c.h.b16 %v715
  %v781 = vunpack.c.l.b16 %v716
  %v782 = vunpack.c.h.b16 %v716
  %v783 = vunpack.c.l.b16 %v717
  %v784 = vunpack.c.h.b16 %v717
  %v785 = vunpack.c.l.b16 %v718
  %v786 = vunpack.c.h.b16 %v718
  %v787 = vunpack.c.l.b16 %v719
  %v788 = vunpack.c.h.b16 %v719
  %v789 = vunpack.c.l.b16 %v720
  %v790 = vunpack.c.h.b16 %v720
  %v791 = vunpack.c.l.b16 %v721
  %v792 = vunpack.c.h.b16 %v721
  %v793 = vunpack.c.l.b16 %v722
  %v794 = vunpack.c.h.b16 %v722
  %v795 = vunpack.c.l.b16 %v723
  %v796 = vunpack.c.h.b16 %v723
  %v797 = vunpack.c.l.b16 %v724
  %v798 = vunpack.c.h.b16 %v724
  %v799 = vunpack.c.l.b16 %v725
  %v800 = vunpack.c.h.b16 %v725
  %v801 = vunpack.c.l.b16 %v726
  %v802 = vunpack.c.h.b16 %v726
  %v803 = vunpack.c.l.b16 %v727
  %v804 = vunpack.c.h.b16 %v727
  %v805 = vunpack.c.l.b16 %v728
  %v806 = vunpack.c.h.b16 %v728
  %v807 = vunpack.c.l.b16 %v729
  %v808 = vunpack.c.h.b16 %v729
  %v809 = vunpack.c.l.b16 %v730
  %v810 = vunpack.c.h.b16 %v730
  %v811 = vunpack.c.l.b16 %v731
  %v812 = vunpack.c.h.b16 %v731
  %v813 = vunpack.c.l.b16 %v732
  %v814 = vunpack.c.h.b16 %v732
  %v815 = vunpack.c.l.b16 %v733
  %v816 = vunpack.c.h.b16 %v733
  %v817 = vunpack.c.l.b16 %v734
  %v818 = vunpack.c.h.b16 %v734
  %v819 = vunpack.c.l.b16 %v735
  %v820 = vunpack.c.h.b16 %v735
  %v821 = vunpack.c.l.b16 %v736
  %v822 = vunpack.c.h.b16 %v736
  %v823 = vunpack.c.l.b16 %v737
  %v824 = vunpack.c.h.b16 %v737
  %v825 = vunpack.c.l.b16 %v738
  %v826 = vunpack.c.h.b16 %v738
  %v827 = vunpack.c.l.b16 %v739
  %v828 = vunpack.c.h.b16 %v739
  %v829 = vunpack.c.l.b16 %v740
  %v830 = vunpack.c.h.b16 %v740
  %v831 = vunpack.c.l.b16 %v741
  %v832 = vunpack.c.h.b16 %v741
  %v833 = vunpack.c.l.b16 %v742
  %v834 = vunpack.c.h.b16 %v742
  %v835 = vunpack.c.l.b16 %v743
  %v836 = vunpack.c.h.b16 %v743
  %v837 = vunpack.c.l.b16 %v744
  %v838 = vunpack.c.h.b16 %v744
  %v839 = vunpack.c.l.b16 %v745
  %v840 = vunpack.c.h.b16 %v745
  %v841 = vunpack.c.l.b16 %v746
  %v842 = vunpack.c.h.b16 %v746
  %v843 = vpack.c.b16 %v783, %v779
  %v844 = vpack.c.b16 %v784, %v780
  %v845 = vpack.c.b16 %v785, %v781
  %v846 = vpack.c.b16 %v786, %v782
  %v847 = vpack.c.b16 %v791, %v787
  %v848 = vpack.c.b16 %v792, %v788
  %v849 = vpack.c.b16 %v793, %v789
  %v850 = vpack.c.b16 %v794, %v790
  %v851 = vpack.c.b16 %v799, %v795
  %v852 = vpack.c.b16 %v800, %v796
  %v853 = vpack.c.b16 %v801, %v797
  %v854 = vpack.c.b16 %v802, %v798
  %v855 = vpack.c.b16 %v807, %v803
  %v856 = vpack.c.b16 %v808, %v804
  %v857 = vpack.c.b16 %v809, %v805
  %v858 = vpack.c.b16 %v810, %v806
  %v859 = vpack.c.b16 %v815, %v811
  %v860 = vpack.c.b16 %v816, %v812
  %v861 = vpack.c.b16 %v817, %v813
  %v862 = vpack.c.b16 %v818, %v814
  %v863 = vpack.c.b16 %v823, %v819
  %v864 = vpack.c.b16 %v824, %v820
  %v865 = vpack.c.b16 %v825, %v821
  %v866 = vpack.c.b16 %v826, %v822
  %v867 = vpack.c.b16 %v831, %v827
  %v868 = vpack.c.b16 %v832, %v828
  %v869 = vpack.c.b16 %v833, %v829
  %v870 = vpack.c.b16 %v834, %v830
  %v871 = vpack.c.b16 %v839, %v835
  %v872 = vpack.c.b16 %v840, %v836
  %v873 = vpack.c.b16 %v841, %v837
  %v874 = vpack.c.b16 %v842, %v838
  %907 = vmatpush.bf16.msra.mxu0 %v871
  %908 = vmatpush.bf16.msra.mxu0 %v867
  %909 = vmatpush.bf16.msra.mxu0 %v863
  %910 = vmatpush.bf16.msra.mxu0 %v859
  %911 = vmatpush.bf16.msra.mxu0 %v855
  %912 = vmatpush.bf16.msra.mxu0 %v851
  %913 = vmatpush.bf16.msra.mxu0 %v847
  %914 = vmatpush.bf16.msra.mxu0 %v843
  %915 = vmatmul.bf16.gmra.mxu0 %v714
  %v916 = vpop.f32.mrf.mxu0
  %v917 = vadd.f32 0.0, %v916
  %v918 = vpop.f32.mrf.mxu0
  %919 = vdwg.mxu0
  %920 = vmatpush.bf16.msra.mxu0 %v872
  %921 = vmatpush.bf16.msra.mxu0 %v868
  %922 = vmatpush.bf16.msra.mxu0 %v864
  %923 = vmatpush.bf16.msra.mxu0 %v860
  %924 = vmatpush.bf16.msra.mxu0 %v856
  %925 = vmatpush.bf16.msra.mxu0 %v852
  %926 = vmatpush.bf16.msra.mxu0 %v848
  %927 = vmatpush.bf16.msra.mxu0 %v844
  %928 = vmatmul.bf16.gmra.mxu0 %v714
  %v929 = vpop.f32.mrf.mxu0
  %v930 = vadd.f32 0.0, %v929
  %v931 = vpop.f32.mrf.mxu0
  %932 = vdwg.mxu0
  %933 = vmatpush.bf16.msra.mxu0 %v873
  %934 = vmatpush.bf16.msra.mxu0 %v869
  %935 = vmatpush.bf16.msra.mxu0 %v865
  %936 = vmatpush.bf16.msra.mxu0 %v861
  %937 = vmatpush.bf16.msra.mxu0 %v857
  %938 = vmatpush.bf16.msra.mxu0 %v853
  %939 = vmatpush.bf16.msra.mxu0 %v849
  %940 = vmatpush.bf16.msra.mxu0 %v845
  %941 = vmatmul.bf16.gmra.mxu0 %v714
  %v942 = vpop.f32.mrf.mxu0
  %v943 = vadd.f32 0.0, %v942
  %v944 = vpop.f32.mrf.mxu0
  %945 = vdwg.mxu0
  %946 = vmatpush.bf16.msra.mxu0 %v874
  %947 = vmatpush.bf16.msra.mxu0 %v870
  %948 = vmatpush.bf16.msra.mxu0 %v866
  %949 = vmatpush.bf16.msra.mxu0 %v862
  %950 = vmatpush.bf16.msra.mxu0 %v858
  %951 = vmatpush.bf16.msra.mxu0 %v854
  %952 = vmatpush.bf16.msra.mxu0 %v850
  %953 = vmatpush.bf16.msra.mxu0 %v846
  %954 = vmatmul.bf16.gmra.mxu0 %v714
  %v955 = vpop.f32.mrf.mxu0
  %v956 = vadd.f32 0.0, %v955
  %v957 = vpop.f32.mrf.mxu0
  %958 = vdwg.mxu0
  %v959 = vadd.f32 %v710, %v917
  %v960 = vadd.f32 %v711, %v930
  %v961 = vadd.f32 %v712, %v943
  %v962 = vadd.f32 %v713, %v956
  %v963 = vxor.u32 %v959, 2147483648
  %v964 = vxor.u32 %v960, 2147483648
  %v965 = vmul.f32 %v963, 1.442695
  %v966 = vpow.pop %v965
  %v967 = vmul.f32 %v964, 1.442695
  %v968 = vpow.pop %v967
  %v969 = vadd.f32 %v966, 1.0
  %v970 = vadd.f32 %v968, 1.0
  %v971 = vrcp.pop %v969
  %v972 = vmul.f32 %v969, %v971
  %v973 = vsub.f32 1.0, %v972
  %v974 = vmul.f32 %v971, %v973
  %v975 = vadd.f32 %v971, %v974
  %vm976 = vweird.f32 %v969
  %vm977 = vweird.f32 %v971
  %vm978 = vmor %vm976, %vm977
  %v979 = vsel %vm978, %v971, %v975
  %v980 = vand.u32 2147483647, %v969
  %vm981 = vcmp.eq.f32.partialorder %v980, 8.507059e+37
  %v982 = vand.u32 %v969, 2147483648
  %v983 = vor.u32 1.1754944e-38, %v982
  %v984 = vsel %vm981, %v983, %v979
  %v985 = vmul.f32 1.0, %v984
  %v986 = vrcp.pop %v970
  %v987 = vmul.f32 %v970, %v986
  %v988 = vsub.f32 1.0, %v987
  %v989 = vmul.f32 %v986, %v988
  %v990 = vadd.f32 %v986, %v989
  %vm991 = vweird.f32 %v970
  %vm992 = vweird.f32 %v986
  %vm993 = vmor %vm991, %vm992
  %v994 = vsel %vm993, %v986, %v990
  %v995 = vand.u32 2147483647, %v970
  %vm996 = vcmp.eq.f32.partialorder %v995, 8.507059e+37
  %v997 = vand.u32 %v970, 2147483648
  %v998 = vor.u32 1.1754944e-38, %v997
  %v999 = vsel %vm996, %v998, %v994
  %v1000 = vmul.f32 1.0, %v999
  %v1001 = vtanh.pop %v962
  %v1002 = vmul.f32 %v1000, %v686
  %v1003 = vmul.f32 %v985, %v1001
  %v1004 = vadd.f32 %v1002, %v1003
  %v1005 = vxor.u32 %v961, 2147483648
  %v1006 = vmul.f32 %v1005, 1.442695
  %v1007 = vpow.pop %v1006
  %v1008 = vadd.f32 %v1007, 1.0
  %v1009 = vrcp.pop %v1008
  %v1010 = vmul.f32 %v1008, %v1009
  %v1011 = vsub.f32 1.0, %v1010
  %v1012 = vmul.f32 %v1009, %v1011
  %v1013 = vadd.f32 %v1009, %v1012
  %vm1014 = vweird.f32 %v1008
  %vm1015 = vweird.f32 %v1009
  %vm1016 = vmor %vm1014, %vm1015
  %v1017 = vsel %vm1016, %v1009, %v1013
  %v1018 = vand.u32 2147483647, %v1008
  %vm1019 = vcmp.eq.f32.partialorder %v1018, 8.507059e+37
  %v1020 = vand.u32 %v1008, 2147483648
  %v1021 = vor.u32 1.1754944e-38, %v1020
  %v1022 = vsel %vm1019, %v1021, %v1017
  %v1023 = vmul.f32 1.0, %v1022
  %v1024 = vtanh.pop %v1004
  %v1025 = vmul.f32 %v1023, %v1024
  %s1026 = scalar_lea.vmem %s10, 8
  %1027 = vst [vmem:[%s1026] sm:$0xff] %v1025
  %s1028 = scalar_lea.vmem [#allocation2], 64
  %v1029 = vld [vmem:[%s1028] sm:$0xff]
  %v1030 = vld [vmem:[%s1028 + $0x8] sm:$0xff]
  %v1031 = vld [vmem:[%s1028 + $0x10] sm:$0xff]
  %v1032 = vld [vmem:[%s1028 + $0x18] sm:$0xff]
  %v1033 = vpack.c.bf16 %v1025, %v1025
  %v1034 = vld [vmem:[%s6] sm:$0xff]
  %v1035 = vld [vmem:[%s6 + $0x8] sm:$0xff]
  %v1036 = vld [vmem:[%s6 + $0x10] sm:$0xff]
  %v1037 = vld [vmem:[%s6 + $0x18] sm:$0xff]
  %v1038 = vld [vmem:[%s6 + $0x20] sm:$0xff]
  %v1039 = vld [vmem:[%s6 + $0x28] sm:$0xff]
  %v1040 = vld [vmem:[%s6 + $0x30] sm:$0xff]
  %v1041 = vld [vmem:[%s6 + $0x38] sm:$0xff]
  %v1042 = vld [vmem:[%s6 + $0x40] sm:$0xff]
  %v1043 = vld [vmem:[%s6 + $0x48] sm:$0xff]
  %v1044 = vld [vmem:[%s6 + $0x50] sm:$0xff]
  %v1045 = vld [vmem:[%s6 + $0x58] sm:$0xff]
  %v1046 = vld [vmem:[%s6 + $0x60] sm:$0xff]
  %v1047 = vld [vmem:[%s6 + $0x68] sm:$0xff]
  %v1048 = vld [vmem:[%s6 + $0x70] sm:$0xff]
  %v1049 = vld [vmem:[%s6 + $0x78] sm:$0xff]
  %v1050 = vld [vmem:[%s6 + $0x80] sm:$0xff]
  %v1051 = vld [vmem:[%s6 + $0x88] sm:$0xff]
  %v1052 = vld [vmem:[%s6 + $0x90] sm:$0xff]
  %v1053 = vld [vmem:[%s6 + $0x98] sm:$0xff]
  %v1054 = vld [vmem:[%s6 + $0xa0] sm:$0xff]
  %v1055 = vld [vmem:[%s6 + $0xa8] sm:$0xff]
  %v1056 = vld [vmem:[%s6 + $0xb0] sm:$0xff]
  %v1057 = vld [vmem:[%s6 + $0xb8] sm:$0xff]
  %v1058 = vld [vmem:[%s6 + $0xc0] sm:$0xff]
  %v1059 = vld [vmem:[%s6 + $0xc8] sm:$0xff]
  %v1060 = vld [vmem:[%s6 + $0xd0] sm:$0xff]
  %v1061 = vld [vmem:[%s6 + $0xd8] sm:$0xff]
  %v1062 = vld [vmem:[%s6 + $0xe0] sm:$0xff]
  %v1063 = vld [vmem:[%s6 + $0xe8] sm:$0xff]
  %v1064 = vld [vmem:[%s6 + $0xf0] sm:$0xff]
  %v1065 = vld [vmem:[%s6 + $0xf8] sm:$0xff]
  %v1098 = vunpack.c.l.b16 %v1034
  %v1099 = vunpack.c.h.b16 %v1034
  %v1100 = vunpack.c.l.b16 %v1035
  %v1101 = vunpack.c.h.b16 %v1035
  %v1102 = vunpack.c.l.b16 %v1036
  %v1103 = vunpack.c.h.b16 %v1036
  %v1104 = vunpack.c.l.b16 %v1037
  %v1105 = vunpack.c.h.b16 %v1037
  %v1106 = vunpack.c.l.b16 %v1038
  %v1107 = vunpack.c.h.b16 %v1038
  %v1108 = vunpack.c.l.b16 %v1039
  %v1109 = vunpack.c.h.b16 %v1039
  %v1110 = vunpack.c.l.b16 %v1040
  %v1111 = vunpack.c.h.b16 %v1040
  %v1112 = vunpack.c.l.b16 %v1041
  %v1113 = vunpack.c.h.b16 %v1041
  %v1114 = vunpack.c.l.b16 %v1042
  %v1115 = vunpack.c.h.b16 %v1042
  %v1116 = vunpack.c.l.b16 %v1043
  %v1117 = vunpack.c.h.b16 %v1043
  %v1118 = vunpack.c.l.b16 %v1044
  %v1119 = vunpack.c.h.b16 %v1044
  %v1120 = vunpack.c.l.b16 %v1045
  %v1121 = vunpack.c.h.b16 %v1045
  %v1122 = vunpack.c.l.b16 %v1046
  %v1123 = vunpack.c.h.b16 %v1046
  %v1124 = vunpack.c.l.b16 %v1047
  %v1125 = vunpack.c.h.b16 %v1047
  %v1126 = vunpack.c.l.b16 %v1048
  %v1127 = vunpack.c.h.b16 %v1048
  %v1128 = vunpack.c.l.b16 %v1049
  %v1129 = vunpack.c.h.b16 %v1049
  %v1130 = vunpack.c.l.b16 %v1050
  %v1131 = vunpack.c.h.b16 %v1050
  %v1132 = vunpack.c.l.b16 %v1051
  %v1133 = vunpack.c.h.b16 %v1051
  %v1134 = vunpack.c.l.b16 %v1052
  %v1135 = vunpack.c.h.b16 %v1052
  %v1136 = vunpack.c.l.b16 %v1053
  %v1137 = vunpack.c.h.b16 %v1053
  %v1138 = vunpack.c.l.b16 %v1054
  %v1139 = vunpack.c.h.b16 %v1054
  %v1140 = vunpack.c.l.b16 %v1055
  %v1141 = vunpack.c.h.b16 %v1055
  %v1142 = vunpack.c.l.b16 %v1056
  %v1143 = vunpack.c.h.b16 %v1056
  %v1144 = vunpack.c.l.b16 %v1057
  %v1145 = vunpack.c.h.b16 %v1057
  %v1146 = vunpack.c.l.b16 %v1058
  %v1147 = vunpack.c.h.b16 %v1058
  %v1148 = vunpack.c.l.b16 %v1059
  %v1149 = vunpack.c.h.b16 %v1059
  %v1150 = vunpack.c.l.b16 %v1060
  %v1151 = vunpack.c.h.b16 %v1060
  %v1152 = vunpack.c.l.b16 %v1061
  %v1153 = vunpack.c.h.b16 %v1061
  %v1154 = vunpack.c.l.b16 %v1062
  %v1155 = vunpack.c.h.b16 %v1062
  %v1156 = vunpack.c.l.b16 %v1063
  %v1157 = vunpack.c.h.b16 %v1063
  %v1158 = vunpack.c.l.b16 %v1064
  %v1159 = vunpack.c.h.b16 %v1064
  %v1160 = vunpack.c.l.b16 %v1065
  %v1161 = vunpack.c.h.b16 %v1065
  %v1162 = vpack.c.b16 %v1102, %v1098
  %v1163 = vpack.c.b16 %v1103, %v1099
  %v1164 = vpack.c.b16 %v1104, %v1100
  %v1165 = vpack.c.b16 %v1105, %v1101
  %v1166 = vpack.c.b16 %v1110, %v1106
  %v1167 = vpack.c.b16 %v1111, %v1107
  %v1168 = vpack.c.b16 %v1112, %v1108
  %v1169 = vpack.c.b16 %v1113, %v1109
  %v1170 = vpack.c.b16 %v1118, %v1114
  %v1171 = vpack.c.b16 %v1119, %v1115
  %v1172 = vpack.c.b16 %v1120, %v1116
  %v1173 = vpack.c.b16 %v1121, %v1117
  %v1174 = vpack.c.b16 %v1126, %v1122
  %v1175 = vpack.c.b16 %v1127, %v1123
  %v1176 = vpack.c.b16 %v1128, %v1124
  %v1177 = vpack.c.b16 %v1129, %v1125
  %v1178 = vpack.c.b16 %v1134, %v1130
  %v1179 = vpack.c.b16 %v1135, %v1131
  %v1180 = vpack.c.b16 %v1136, %v1132
  %v1181 = vpack.c.b16 %v1137, %v1133
  %v1182 = vpack.c.b16 %v1142, %v1138
  %v1183 = vpack.c.b16 %v1143, %v1139
  %v1184 = vpack.c.b16 %v1144, %v1140
  %v1185 = vpack.c.b16 %v1145, %v1141
  %v1186 = vpack.c.b16 %v1150, %v1146
  %v1187 = vpack.c.b16 %v1151, %v1147
  %v1188 = vpack.c.b16 %v1152, %v1148
  %v1189 = vpack.c.b16 %v1153, %v1149
  %v1190 = vpack.c.b16 %v1158, %v1154
  %v1191 = vpack.c.b16 %v1159, %v1155
  %v1192 = vpack.c.b16 %v1160, %v1156
  %v1193 = vpack.c.b16 %v1161, %v1157
  %1226 = vmatpush.bf16.msra.mxu0 %v1190
  %1227 = vmatpush.bf16.msra.mxu0 %v1186
  %1228 = vmatpush.bf16.msra.mxu0 %v1182
  %1229 = vmatpush.bf16.msra.mxu0 %v1178
  %1230 = vmatpush.bf16.msra.mxu0 %v1174
  %1231 = vmatpush.bf16.msra.mxu0 %v1170
  %1232 = vmatpush.bf16.msra.mxu0 %v1166
  %1233 = vmatpush.bf16.msra.mxu0 %v1162
  %1234 = vmatmul.bf16.gmra.mxu0 %v1033
  %v1235 = vpop.f32.mrf.mxu0
  %v1236 = vadd.f32 0.0, %v1235
  %v1237 = vpop.f32.mrf.mxu0
  %1238 = vdwg.mxu0
  %1239 = vmatpush.bf16.msra.mxu0 %v1191
  %1240 = vmatpush.bf16.msra.mxu0 %v1187
  %1241 = vmatpush.bf16.msra.mxu0 %v1183
  %1242 = vmatpush.bf16.msra.mxu0 %v1179
  %1243 = vmatpush.bf16.msra.mxu0 %v1175
  %1244 = vmatpush.bf16.msra.mxu0 %v1171
  %1245 = vmatpush.bf16.msra.mxu0 %v1167
  %1246 = vmatpush.bf16.msra.mxu0 %v1163
  %1247 = vmatmul.bf16.gmra.mxu0 %v1033
  %v1248 = vpop.f32.mrf.mxu0
  %v1249 = vadd.f32 0.0, %v1248
  %v1250 = vpop.f32.mrf.mxu0
  %1251 = vdwg.mxu0
  %1252 = vmatpush.bf16.msra.mxu0 %v1192
  %1253 = vmatpush.bf16.msra.mxu0 %v1188
  %1254 = vmatpush.bf16.msra.mxu0 %v1184
  %1255 = vmatpush.bf16.msra.mxu0 %v1180
  %1256 = vmatpush.bf16.msra.mxu0 %v1176
  %1257 = vmatpush.bf16.msra.mxu0 %v1172
  %1258 = vmatpush.bf16.msra.mxu0 %v1168
  %1259 = vmatpush.bf16.msra.mxu0 %v1164
  %1260 = vmatmul.bf16.gmra.mxu0 %v1033
  %v1261 = vpop.f32.mrf.mxu0
  %v1262 = vadd.f32 0.0, %v1261
  %v1263 = vpop.f32.mrf.mxu0
  %1264 = vdwg.mxu0
  %1265 = vmatpush.bf16.msra.mxu0 %v1193
  %1266 = vmatpush.bf16.msra.mxu0 %v1189
  %1267 = vmatpush.bf16.msra.mxu0 %v1185
  %1268 = vmatpush.bf16.msra.mxu0 %v1181
  %1269 = vmatpush.bf16.msra.mxu0 %v1177
  %1270 = vmatpush.bf16.msra.mxu0 %v1173
  %1271 = vmatpush.bf16.msra.mxu0 %v1169
  %1272 = vmatpush.bf16.msra.mxu0 %v1165
  %1273 = vmatmul.bf16.gmra.mxu0 %v1033
  %v1274 = vpop.f32.mrf.mxu0
  %v1275 = vadd.f32 0.0, %v1274
  %v1276 = vpop.f32.mrf.mxu0
  %1277 = vdwg.mxu0
  %v1278 = vadd.f32 %v1029, %v1236
  %v1279 = vadd.f32 %v1030, %v1249
  %v1280 = vadd.f32 %v1031, %v1262
  %v1281 = vadd.f32 %v1032, %v1275
  %v1282 = vxor.u32 %v1278, 2147483648
  %v1283 = vxor.u32 %v1279, 2147483648
  %v1284 = vmul.f32 %v1282, 1.442695
  %v1285 = vpow.pop %v1284
  %v1286 = vmul.f32 %v1283, 1.442695
  %v1287 = vpow.pop %v1286
  %v1288 = vadd.f32 %v1285, 1.0
  %v1289 = vadd.f32 %v1287, 1.0
  %v1290 = vrcp.pop %v1288
  %v1291 = vmul.f32 %v1288, %v1290
  %v1292 = vsub.f32 1.0, %v1291
  %v1293 = vmul.f32 %v1290, %v1292
  %v1294 = vadd.f32 %v1290, %v1293
  %vm1295 = vweird.f32 %v1288
  %vm1296 = vweird.f32 %v1290
  %vm1297 = vmor %vm1295, %vm1296
  %v1298 = vsel %vm1297, %v1290, %v1294
  %v1299 = vand.u32 2147483647, %v1288
  %vm1300 = vcmp.eq.f32.partialorder %v1299, 8.507059e+37
  %v1301 = vand.u32 %v1288, 2147483648
  %v1302 = vor.u32 1.1754944e-38, %v1301
  %v1303 = vsel %vm1300, %v1302, %v1298
  %v1304 = vmul.f32 1.0, %v1303
  %v1305 = vrcp.pop %v1289
  %v1306 = vmul.f32 %v1289, %v1305
  %v1307 = vsub.f32 1.0, %v1306
  %v1308 = vmul.f32 %v1305, %v1307
  %v1309 = vadd.f32 %v1305, %v1308
  %vm1310 = vweird.f32 %v1289
  %vm1311 = vweird.f32 %v1305
  %vm1312 = vmor %vm1310, %vm1311
  %v1313 = vsel %vm1312, %v1305, %v1309
  %v1314 = vand.u32 2147483647, %v1289
  %vm1315 = vcmp.eq.f32.partialorder %v1314, 8.507059e+37
  %v1316 = vand.u32 %v1289, 2147483648
  %v1317 = vor.u32 1.1754944e-38, %v1316
  %v1318 = vsel %vm1315, %v1317, %v1313
  %v1319 = vmul.f32 1.0, %v1318
  %v1320 = vtanh.pop %v1281
  %v1321 = vmul.f32 %v1319, %v1004
  %v1322 = vmul.f32 %v1304, %v1320
  %v1323 = vadd.f32 %v1321, %v1322
  %v1324 = vxor.u32 %v1280, 2147483648
  %v1325 = vmul.f32 %v1324, 1.442695
  %v1326 = vpow.pop %v1325
  %v1327 = vadd.f32 %v1326, 1.0
  %v1328 = vrcp.pop %v1327
  %v1329 = vmul.f32 %v1327, %v1328
  %v1330 = vsub.f32 1.0, %v1329
  %v1331 = vmul.f32 %v1328, %v1330
  %v1332 = vadd.f32 %v1328, %v1331
  %vm1333 = vweird.f32 %v1327
  %vm1334 = vweird.f32 %v1328
  %vm1335 = vmor %vm1333, %vm1334
  %v1336 = vsel %vm1335, %v1328, %v1332
  %v1337 = vand.u32 2147483647, %v1327
  %vm1338 = vcmp.eq.f32.partialorder %v1337, 8.507059e+37
  %v1339 = vand.u32 %v1327, 2147483648
  %v1340 = vor.u32 1.1754944e-38, %v1339
  %v1341 = vsel %vm1338, %v1340, %v1336
  %v1342 = vmul.f32 1.0, %v1341
  %v1343 = vtanh.pop %v1323
  %v1344 = vmul.f32 %v1342, %v1343
  %s1345 = scalar_lea.vmem %s10, 16
  %1346 = vst [vmem:[%s1345] sm:$0xff] %v1344
  %s1347 = scalar_lea.vmem [#allocation2], 96
  %v1348 = vld [vmem:[%s1347] sm:$0xff]
  %v1349 = vld [vmem:[%s1347 + $0x8] sm:$0xff]
  %v1350 = vld [vmem:[%s1347 + $0x10] sm:$0xff]
  %v1351 = vld [vmem:[%s1347 + $0x18] sm:$0xff]
  %v1352 = vpack.c.bf16 %v1344, %v1344
  %v1353 = vld [vmem:[%s6] sm:$0xff]
  %v1354 = vld [vmem:[%s6 + $0x8] sm:$0xff]
  %v1355 = vld [vmem:[%s6 + $0x10] sm:$0xff]
  %v1356 = vld [vmem:[%s6 + $0x18] sm:$0xff]
  %v1357 = vld [vmem:[%s6 + $0x20] sm:$0xff]
  %v1358 = vld [vmem:[%s6 + $0x28] sm:$0xff]
  %v1359 = vld [vmem:[%s6 + $0x30] sm:$0xff]
  %v1360 = vld [vmem:[%s6 + $0x38] sm:$0xff]
  %v1361 = vld [vmem:[%s6 + $0x40] sm:$0xff]
  %v1362 = vld [vmem:[%s6 + $0x48] sm:$0xff]
  %v1363 = vld [vmem:[%s6 + $0x50] sm:$0xff]
  %v1364 = vld [vmem:[%s6 + $0x58] sm:$0xff]
  %v1365 = vld [vmem:[%s6 + $0x60] sm:$0xff]
  %v1366 = vld [vmem:[%s6 + $0x68] sm:$0xff]
  %v1367 = vld [vmem:[%s6 + $0x70] sm:$0xff]
  %v1368 = vld [vmem:[%s6 + $0x78] sm:$0xff]
  %v1369 = vld [vmem:[%s6 + $0x80] sm:$0xff]
  %v1370 = vld [vmem:[%s6 + $0x88] sm:$0xff]
  %v1371 = vld [vmem:[%s6 + $0x90] sm:$0xff]
  %v1372 = vld [vmem:[%s6 + $0x98] sm:$0xff]
  %v1373 = vld [vmem:[%s6 + $0xa0] sm:$0xff]
  %v1374 = vld [vmem:[%s6 + $0xa8] sm:$0xff]
  %v1375 = vld [vmem:[%s6 + $0xb0] sm:$0xff]
  %v1376 = vld [vmem:[%s6 + $0xb8] sm:$0xff]
  %v1377 = vld [vmem:[%s6 + $0xc0] sm:$0xff]
  %v1378 = vld [vmem:[%s6 + $0xc8] sm:$0xff]
  %v1379 = vld [vmem:[%s6 + $0xd0] sm:$0xff]
  %v1380 = vld [vmem:[%s6 + $0xd8] sm:$0xff]
  %v1381 = vld [vmem:[%s6 + $0xe0] sm:$0xff]
  %v1382 = vld [vmem:[%s6 + $0xe8] sm:$0xff]
  %v1383 = vld [vmem:[%s6 + $0xf0] sm:$0xff]
  %v1384 = vld [vmem:[%s6 + $0xf8] sm:$0xff]
  %v1417 = vunpack.c.l.b16 %v1353
  %v1418 = vunpack.c.h.b16 %v1353
  %v1419 = vunpack.c.l.b16 %v1354
  %v1420 = vunpack.c.h.b16 %v1354
  %v1421 = vunpack.c.l.b16 %v1355
  %v1422 = vunpack.c.h.b16 %v1355
  %v1423 = vunpack.c.l.b16 %v1356
  %v1424 = vunpack.c.h.b16 %v1356
  %v1425 = vunpack.c.l.b16 %v1357
  %v1426 = vunpack.c.h.b16 %v1357
  %v1427 = vunpack.c.l.b16 %v1358
  %v1428 = vunpack.c.h.b16 %v1358
  %v1429 = vunpack.c.l.b16 %v1359
  %v1430 = vunpack.c.h.b16 %v1359
  %v1431 = vunpack.c.l.b16 %v1360
  %v1432 = vunpack.c.h.b16 %v1360
  %v1433 = vunpack.c.l.b16 %v1361
  %v1434 = vunpack.c.h.b16 %v1361
  %v1435 = vunpack.c.l.b16 %v1362
  %v1436 = vunpack.c.h.b16 %v1362
  %v1437 = vunpack.c.l.b16 %v1363
  %v1438 = vunpack.c.h.b16 %v1363
  %v1439 = vunpack.c.l.b16 %v1364
  %v1440 = vunpack.c.h.b16 %v1364
  %v1441 = vunpack.c.l.b16 %v1365
  %v1442 = vunpack.c.h.b16 %v1365
  %v1443 = vunpack.c.l.b16 %v1366
  %v1444 = vunpack.c.h.b16 %v1366
  %v1445 = vunpack.c.l.b16 %v1367
  %v1446 = vunpack.c.h.b16 %v1367
  %v1447 = vunpack.c.l.b16 %v1368
  %v1448 = vunpack.c.h.b16 %v1368
  %v1449 = vunpack.c.l.b16 %v1369
  %v1450 = vunpack.c.h.b16 %v1369
  %v1451 = vunpack.c.l.b16 %v1370
  %v1452 = vunpack.c.h.b16 %v1370
  %v1453 = vunpack.c.l.b16 %v1371
  %v1454 = vunpack.c.h.b16 %v1371
  %v1455 = vunpack.c.l.b16 %v1372
  %v1456 = vunpack.c.h.b16 %v1372
  %v1457 = vunpack.c.l.b16 %v1373
  %v1458 = vunpack.c.h.b16 %v1373
  %v1459 = vunpack.c.l.b16 %v1374
  %v1460 = vunpack.c.h.b16 %v1374
  %v1461 = vunpack.c.l.b16 %v1375
  %v1462 = vunpack.c.h.b16 %v1375
  %v1463 = vunpack.c.l.b16 %v1376
  %v1464 = vunpack.c.h.b16 %v1376
  %v1465 = vunpack.c.l.b16 %v1377
  %v1466 = vunpack.c.h.b16 %v1377
  %v1467 = vunpack.c.l.b16 %v1378
  %v1468 = vunpack.c.h.b16 %v1378
  %v1469 = vunpack.c.l.b16 %v1379
  %v1470 = vunpack.c.h.b16 %v1379
  %v1471 = vunpack.c.l.b16 %v1380
  %v1472 = vunpack.c.h.b16 %v1380
  %v1473 = vunpack.c.l.b16 %v1381
  %v1474 = vunpack.c.h.b16 %v1381
  %v1475 = vunpack.c.l.b16 %v1382
  %v1476 = vunpack.c.h.b16 %v1382
  %v1477 = vunpack.c.l.b16 %v1383
  %v1478 = vunpack.c.h.b16 %v1383
  %v1479 = vunpack.c.l.b16 %v1384
  %v1480 = vunpack.c.h.b16 %v1384
  %v1481 = vpack.c.b16 %v1421, %v1417
  %v1482 = vpack.c.b16 %v1422, %v1418
  %v1483 = vpack.c.b16 %v1423, %v1419
  %v1484 = vpack.c.b16 %v1424, %v1420
  %v1485 = vpack.c.b16 %v1429, %v1425
  %v1486 = vpack.c.b16 %v1430, %v1426
  %v1487 = vpack.c.b16 %v1431, %v1427
  %v1488 = vpack.c.b16 %v1432, %v1428
  %v1489 = vpack.c.b16 %v1437, %v1433
  %v1490 = vpack.c.b16 %v1438, %v1434
  %v1491 = vpack.c.b16 %v1439, %v1435
  %v1492 = vpack.c.b16 %v1440, %v1436
  %v1493 = vpack.c.b16 %v1445, %v1441
  %v1494 = vpack.c.b16 %v1446, %v1442
  %v1495 = vpack.c.b16 %v1447, %v1443
  %v1496 = vpack.c.b16 %v1448, %v1444
  %v1497 = vpack.c.b16 %v1453, %v1449
  %v1498 = vpack.c.b16 %v1454, %v1450
  %v1499 = vpack.c.b16 %v1455, %v1451
  %v1500 = vpack.c.b16 %v1456, %v1452
  %v1501 = vpack.c.b16 %v1461, %v1457
  %v1502 = vpack.c.b16 %v1462, %v1458
  %v1503 = vpack.c.b16 %v1463, %v1459
  %v1504 = vpack.c.b16 %v1464, %v1460
  %v1505 = vpack.c.b16 %v1469, %v1465
  %v1506 = vpack.c.b16 %v1470, %v1466
  %v1507 = vpack.c.b16 %v1471, %v1467
  %v1508 = vpack.c.b16 %v1472, %v1468
  %v1509 = vpack.c.b16 %v1477, %v1473
  %v1510 = vpack.c.b16 %v1478, %v1474
  %v1511 = vpack.c.b16 %v1479, %v1475
  %v1512 = vpack.c.b16 %v1480, %v1476
  %1545 = vmatpush.bf16.msra.mxu0 %v1509
  %1546 = vmatpush.bf16.msra.mxu0 %v1505
  %1547 = vmatpush.bf16.msra.mxu0 %v1501
  %1548 = vmatpush.bf16.msra.mxu0 %v1497
  %1549 = vmatpush.bf16.msra.mxu0 %v1493
  %1550 = vmatpush.bf16.msra.mxu0 %v1489
  %1551 = vmatpush.bf16.msra.mxu0 %v1485
  %1552 = vmatpush.bf16.msra.mxu0 %v1481
  %1553 = vmatmul.bf16.gmra.mxu0 %v1352
  %v1554 = vpop.f32.mrf.mxu0
  %v1555 = vadd.f32 0.0, %v1554
  %v1556 = vpop.f32.mrf.mxu0
  %1557 = vdwg.mxu0
  %1558 = vmatpush.bf16.msra.mxu0 %v1510
  %1559 = vmatpush.bf16.msra.mxu0 %v1506
  %1560 = vmatpush.bf16.msra.mxu0 %v1502
  %1561 = vmatpush.bf16.msra.mxu0 %v1498
  %1562 = vmatpush.bf16.msra.mxu0 %v1494
  %1563 = vmatpush.bf16.msra.mxu0 %v1490
  %1564 = vmatpush.bf16.msra.mxu0 %v1486
  %1565 = vmatpush.bf16.msra.mxu0 %v1482
  %1566 = vmatmul.bf16.gmra.mxu0 %v1352
  %v1567 = vpop.f32.mrf.mxu0
  %v1568 = vadd.f32 0.0, %v1567
  %v1569 = vpop.f32.mrf.mxu0
  %1570 = vdwg.mxu0
  %1571 = vmatpush.bf16.msra.mxu0 %v1511
  %1572 = vmatpush.bf16.msra.mxu0 %v1507
  %1573 = vmatpush.bf16.msra.mxu0 %v1503
  %1574 = vmatpush.bf16.msra.mxu0 %v1499
  %1575 = vmatpush.bf16.msra.mxu0 %v1495
  %1576 = vmatpush.bf16.msra.mxu0 %v1491
  %1577 = vmatpush.bf16.msra.mxu0 %v1487
  %1578 = vmatpush.bf16.msra.mxu0 %v1483
  %1579 = vmatmul.bf16.gmra.mxu0 %v1352
  %v1580 = vpop.f32.mrf.mxu0
  %v1581 = vadd.f32 0.0, %v1580
  %v1582 = vpop.f32.mrf.mxu0
  %1583 = vdwg.mxu0
  %1584 = vmatpush.bf16.msra.mxu0 %v1512
  %1585 = vmatpush.bf16.msra.mxu0 %v1508
  %1586 = vmatpush.bf16.msra.mxu0 %v1504
  %1587 = vmatpush.bf16.msra.mxu0 %v1500
  %1588 = vmatpush.bf16.msra.mxu0 %v1496
  %1589 = vmatpush.bf16.msra.mxu0 %v1492
  %1590 = vmatpush.bf16.msra.mxu0 %v1488
  %1591 = vmatpush.bf16.msra.mxu0 %v1484
  %1592 = vmatmul.bf16.gmra.mxu0 %v1352
  %v1593 = vpop.f32.mrf.mxu0
  %v1594 = vadd.f32 0.0, %v1593
  %v1595 = vpop.f32.mrf.mxu0
  %1596 = vdwg.mxu0
  %v1597 = vadd.f32 %v1348, %v1555
  %v1598 = vadd.f32 %v1349, %v1568
  %v1599 = vadd.f32 %v1350, %v1581
  %v1600 = vadd.f32 %v1351, %v1594
  %v1601 = vxor.u32 %v1597, 2147483648
  %v1602 = vxor.u32 %v1598, 2147483648
  %v1603 = vmul.f32 %v1601, 1.442695
  %v1604 = vpow.pop %v1603
  %v1605 = vmul.f32 %v1602, 1.442695
  %v1606 = vpow.pop %v1605
  %v1607 = vadd.f32 %v1604, 1.0
  %v1608 = vadd.f32 %v1606, 1.0
  %v1609 = vrcp.pop %v1607
  %v1610 = vmul.f32 %v1607, %v1609
  %v1611 = vsub.f32 1.0, %v1610
  %v1612 = vmul.f32 %v1609, %v1611
  %v1613 = vadd.f32 %v1609, %v1612
  %vm1614 = vweird.f32 %v1607
  %vm1615 = vweird.f32 %v1609
  %vm1616 = vmor %vm1614, %vm1615
  %v1617 = vsel %vm1616, %v1609, %v1613
  %v1618 = vand.u32 2147483647, %v1607
  %vm1619 = vcmp.eq.f32.partialorder %v1618, 8.507059e+37
  %v1620 = vand.u32 %v1607, 2147483648
  %v1621 = vor.u32 1.1754944e-38, %v1620
  %v1622 = vsel %vm1619, %v1621, %v1617
  %v1623 = vmul.f32 1.0, %v1622
  %v1624 = vrcp.pop %v1608
  %v1625 = vmul.f32 %v1608, %v1624
  %v1626 = vsub.f32 1.0, %v1625
  %v1627 = vmul.f32 %v1624, %v1626
  %v1628 = vadd.f32 %v1624, %v1627
  %vm1629 = vweird.f32 %v1608
  %vm1630 = vweird.f32 %v1624
  %vm1631 = vmor %vm1629, %vm1630
  %v1632 = vsel %vm1631, %v1624, %v1628
  %v1633 = vand.u32 2147483647, %v1608
  %vm1634 = vcmp.eq.f32.partialorder %v1633, 8.507059e+37
  %v1635 = vand.u32 %v1608, 2147483648
  %v1636 = vor.u32 1.1754944e-38, %v1635
  %v1637 = vsel %vm1634, %v1636, %v1632
  %v1638 = vmul.f32 1.0, %v1637
  %v1639 = vtanh.pop %v1600
  %v1640 = vmul.f32 %v1638, %v1323
  %v1641 = vmul.f32 %v1623, %v1639
  %v1642 = vadd.f32 %v1640, %v1641
  %v1643 = vxor.u32 %v1599, 2147483648
  %v1644 = vmul.f32 %v1643, 1.442695
  %v1645 = vpow.pop %v1644
  %v1646 = vadd.f32 %v1645, 1.0
  %v1647 = vrcp.pop %v1646
  %v1648 = vmul.f32 %v1646, %v1647
  %v1649 = vsub.f32 1.0, %v1648
  %v1650 = vmul.f32 %v1647, %v1649
  %v1651 = vadd.f32 %v1647, %v1650
  %vm1652 = vweird.f32 %v1646
  %vm1653 = vweird.f32 %v1647
  %vm1654 = vmor %vm1652, %vm1653
  %v1655 = vsel %vm1654, %v1647, %v1651
  %v1656 = vand.u32 2147483647, %v1646
  %vm1657 = vcmp.eq.f32.partialorder %v1656, 8.507059e+37
  %v1658 = vand.u32 %v1646, 2147483648
  %v1659 = vor.u32 1.1754944e-38, %v1658
  %v1660 = vsel %vm1657, %v1659, %v1655
  %v1661 = vmul.f32 1.0, %v1660
  %v1662 = vtanh.pop %v1642
  %v1663 = vmul.f32 %v1661, %v1662
  %s1664 = scalar_lea.vmem %s10, 24
  %1665 = vst [vmem:[%s1664] sm:$0xff] %v1663
  %s1666 = scalar_lea.vmem [#allocation2], 128
  %v1667 = vld [vmem:[%s1666] sm:$0xff]
  %v1668 = vld [vmem:[%s1666 + $0x8] sm:$0xff]
  %v1669 = vld [vmem:[%s1666 + $0x10] sm:$0xff]
  %v1670 = vld [vmem:[%s1666 + $0x18] sm:$0xff]
  %v1671 = vpack.c.bf16 %v1663, %v1663
  %v1672 = vld [vmem:[%s6] sm:$0xff]
  %v1673 = vld [vmem:[%s6 + $0x8] sm:$0xff]
  %v1674 = vld [vmem:[%s6 + $0x10] sm:$0xff]
  %v1675 = vld [vmem:[%s6 + $0x18] sm:$0xff]
  %v1676 = vld [vmem:[%s6 + $0x20] sm:$0xff]
  %v1677 = vld [vmem:[%s6 + $0x28] sm:$0xff]
  %v1678 = vld [vmem:[%s6 + $0x30] sm:$0xff]
  %v1679 = vld [vmem:[%s6 + $0x38] sm:$0xff]
  %v1680 = vld [vmem:[%s6 + $0x40] sm:$0xff]
  %v1681 = vld [vmem:[%s6 + $0x48] sm:$0xff]
  %v1682 = vld [vmem:[%s6 + $0x50] sm:$0xff]
  %v1683 = vld [vmem:[%s6 + $0x58] sm:$0xff]
  %v1684 = vld [vmem:[%s6 + $0x60] sm:$0xff]
  %v1685 = vld [vmem:[%s6 + $0x68] sm:$0xff]
  %v1686 = vld [vmem:[%s6 + $0x70] sm:$0xff]
  %v1687 = vld [vmem:[%s6 + $0x78] sm:$0xff]
  %v1688 = vld [vmem:[%s6 + $0x80] sm:$0xff]
  %v1689 = vld [vmem:[%s6 + $0x88] sm:$0xff]
  %v1690 = vld [vmem:[%s6 + $0x90] sm:$0xff]
  %v1691 = vld [vmem:[%s6 + $0x98] sm:$0xff]
  %v1692 = vld [vmem:[%s6 + $0xa0] sm:$0xff]
  %v1693 = vld [vmem:[%s6 + $0xa8] sm:$0xff]
  %v1694 = vld [vmem:[%s6 + $0xb0] sm:$0xff]
  %v1695 = vld [vmem:[%s6 + $0xb8] sm:$0xff]
  %v1696 = vld [vmem:[%s6 + $0xc0] sm:$0xff]
  %v1697 = vld [vmem:[%s6 + $0xc8] sm:$0xff]
  %v1698 = vld [vmem:[%s6 + $0xd0] sm:$0xff]
  %v1699 = vld [vmem:[%s6 + $0xd8] sm:$0xff]
  %v1700 = vld [vmem:[%s6 + $0xe0] sm:$0xff]
  %v1701 = vld [vmem:[%s6 + $0xe8] sm:$0xff]
  %v1702 = vld [vmem:[%s6 + $0xf0] sm:$0xff]
  %v1703 = vld [vmem:[%s6 + $0xf8] sm:$0xff]
  %v1736 = vunpack.c.l.b16 %v1672
  %v1737 = vunpack.c.h.b16 %v1672
  %v1738 = vunpack.c.l.b16 %v1673
  %v1739 = vunpack.c.h.b16 %v1673
  %v1740 = vunpack.c.l.b16 %v1674
  %v1741 = vunpack.c.h.b16 %v1674
  %v1742 = vunpack.c.l.b16 %v1675
  %v1743 = vunpack.c.h.b16 %v1675
  %v1744 = vunpack.c.l.b16 %v1676
  %v1745 = vunpack.c.h.b16 %v1676
  %v1746 = vunpack.c.l.b16 %v1677
  %v1747 = vunpack.c.h.b16 %v1677
  %v1748 = vunpack.c.l.b16 %v1678
  %v1749 = vunpack.c.h.b16 %v1678
  %v1750 = vunpack.c.l.b16 %v1679
  %v1751 = vunpack.c.h.b16 %v1679
  %v1752 = vunpack.c.l.b16 %v1680
  %v1753 = vunpack.c.h.b16 %v1680
  %v1754 = vunpack.c.l.b16 %v1681
  %v1755 = vunpack.c.h.b16 %v1681
  %v1756 = vunpack.c.l.b16 %v1682
  %v1757 = vunpack.c.h.b16 %v1682
  %v1758 = vunpack.c.l.b16 %v1683
  %v1759 = vunpack.c.h.b16 %v1683
  %v1760 = vunpack.c.l.b16 %v1684
  %v1761 = vunpack.c.h.b16 %v1684
  %v1762 = vunpack.c.l.b16 %v1685
  %v1763 = vunpack.c.h.b16 %v1685
  %v1764 = vunpack.c.l.b16 %v1686
  %v1765 = vunpack.c.h.b16 %v1686
  %v1766 = vunpack.c.l.b16 %v1687
  %v1767 = vunpack.c.h.b16 %v1687
  %v1768 = vunpack.c.l.b16 %v1688
  %v1769 = vunpack.c.h.b16 %v1688
  %v1770 = vunpack.c.l.b16 %v1689
  %v1771 = vunpack.c.h.b16 %v1689
  %v1772 = vunpack.c.l.b16 %v1690
  %v1773 = vunpack.c.h.b16 %v1690
  %v1774 = vunpack.c.l.b16 %v1691
  %v1775 = vunpack.c.h.b16 %v1691
  %v1776 = vunpack.c.l.b16 %v1692
  %v1777 = vunpack.c.h.b16 %v1692
  %v1778 = vunpack.c.l.b16 %v1693
  %v1779 = vunpack.c.h.b16 %v1693
  %v1780 = vunpack.c.l.b16 %v1694
  %v1781 = vunpack.c.h.b16 %v1694
  %v1782 = vunpack.c.l.b16 %v1695
  %v1783 = vunpack.c.h.b16 %v1695
  %v1784 = vunpack.c.l.b16 %v1696
  %v1785 = vunpack.c.h.b16 %v1696
  %v1786 = vunpack.c.l.b16 %v1697
  %v1787 = vunpack.c.h.b16 %v1697
  %v1788 = vunpack.c.l.b16 %v1698
  %v1789 = vunpack.c.h.b16 %v1698
  %v1790 = vunpack.c.l.b16 %v1699
  %v1791 = vunpack.c.h.b16 %v1699
  %v1792 = vunpack.c.l.b16 %v1700
  %v1793 = vunpack.c.h.b16 %v1700
  %v1794 = vunpack.c.l.b16 %v1701
  %v1795 = vunpack.c.h.b16 %v1701
  %v1796 = vunpack.c.l.b16 %v1702
  %v1797 = vunpack.c.h.b16 %v1702
  %v1798 = vunpack.c.l.b16 %v1703
  %v1799 = vunpack.c.h.b16 %v1703
  %v1800 = vpack.c.b16 %v1740, %v1736
  %v1801 = vpack.c.b16 %v1741, %v1737
  %v1802 = vpack.c.b16 %v1742, %v1738
  %v1803 = vpack.c.b16 %v1743, %v1739
  %v1804 = vpack.c.b16 %v1748, %v1744
  %v1805 = vpack.c.b16 %v1749, %v1745
  %v1806 = vpack.c.b16 %v1750, %v1746
  %v1807 = vpack.c.b16 %v1751, %v1747
  %v1808 = vpack.c.b16 %v1756, %v1752
  %v1809 = vpack.c.b16 %v1757, %v1753
  %v1810 = vpack.c.b16 %v1758, %v1754
  %v1811 = vpack.c.b16 %v1759, %v1755
  %v1812 = vpack.c.b16 %v1764, %v1760
  %v1813 = vpack.c.b16 %v1765, %v1761
  %v1814 = vpack.c.b16 %v1766, %v1762
  %v1815 = vpack.c.b16 %v1767, %v1763
  %v1816 = vpack.c.b16 %v1772, %v1768
  %v1817 = vpack.c.b16 %v1773, %v1769
  %v1818 = vpack.c.b16 %v1774, %v1770
  %v1819 = vpack.c.b16 %v1775, %v1771
  %v1820 = vpack.c.b16 %v1780, %v1776
  %v1821 = vpack.c.b16 %v1781, %v1777
  %v1822 = vpack.c.b16 %v1782, %v1778
  %v1823 = vpack.c.b16 %v1783, %v1779
  %v1824 = vpack.c.b16 %v1788, %v1784
  %v1825 = vpack.c.b16 %v1789, %v1785
  %v1826 = vpack.c.b16 %v1790, %v1786
  %v1827 = vpack.c.b16 %v1791, %v1787
  %v1828 = vpack.c.b16 %v1796, %v1792
  %v1829 = vpack.c.b16 %v1797, %v1793
  %v1830 = vpack.c.b16 %v1798, %v1794
  %v1831 = vpack.c.b16 %v1799, %v1795
  %1864 = vmatpush.bf16.msra.mxu0 %v1828
  %1865 = vmatpush.bf16.msra.mxu0 %v1824
  %1866 = vmatpush.bf16.msra.mxu0 %v1820
  %1867 = vmatpush.bf16.msra.mxu0 %v1816
  %1868 = vmatpush.bf16.msra.mxu0 %v1812
  %1869 = vmatpush.bf16.msra.mxu0 %v1808
  %1870 = vmatpush.bf16.msra.mxu0 %v1804
  %1871 = vmatpush.bf16.msra.mxu0 %v1800
  %1872 = vmatmul.bf16.gmra.mxu0 %v1671
  %v1873 = vpop.f32.mrf.mxu0
  %v1874 = vadd.f32 0.0, %v1873
  %v1875 = vpop.f32.mrf.mxu0
  %1876 = vdwg.mxu0
  %1877 = vmatpush.bf16.msra.mxu0 %v1829
  %1878 = vmatpush.bf16.msra.mxu0 %v1825
  %1879 = vmatpush.bf16.msra.mxu0 %v1821
  %1880 = vmatpush.bf16.msra.mxu0 %v1817
  %1881 = vmatpush.bf16.msra.mxu0 %v1813
  %1882 = vmatpush.bf16.msra.mxu0 %v1809
  %1883 = vmatpush.bf16.msra.mxu0 %v1805
  %1884 = vmatpush.bf16.msra.mxu0 %v1801
  %1885 = vmatmul.bf16.gmra.mxu0 %v1671
  %v1886 = vpop.f32.mrf.mxu0
  %v1887 = vadd.f32 0.0, %v1886
  %v1888 = vpop.f32.mrf.mxu0
  %1889 = vdwg.mxu0
  %1890 = vmatpush.bf16.msra.mxu0 %v1830
  %1891 = vmatpush.bf16.msra.mxu0 %v1826
  %1892 = vmatpush.bf16.msra.mxu0 %v1822
  %1893 = vmatpush.bf16.msra.mxu0 %v1818
  %1894 = vmatpush.bf16.msra.mxu0 %v1814
  %1895 = vmatpush.bf16.msra.mxu0 %v1810
  %1896 = vmatpush.bf16.msra.mxu0 %v1806
  %1897 = vmatpush.bf16.msra.mxu0 %v1802
  %1898 = vmatmul.bf16.gmra.mxu0 %v1671
  %v1899 = vpop.f32.mrf.mxu0
  %v1900 = vadd.f32 0.0, %v1899
  %v1901 = vpop.f32.mrf.mxu0
  %1902 = vdwg.mxu0
  %1903 = vmatpush.bf16.msra.mxu0 %v1831
  %1904 = vmatpush.bf16.msra.mxu0 %v1827
  %1905 = vmatpush.bf16.msra.mxu0 %v1823
  %1906 = vmatpush.bf16.msra.mxu0 %v1819
  %1907 = vmatpush.bf16.msra.mxu0 %v1815
  %1908 = vmatpush.bf16.msra.mxu0 %v1811
  %1909 = vmatpush.bf16.msra.mxu0 %v1807
  %1910 = vmatpush.bf16.msra.mxu0 %v1803
  %1911 = vmatmul.bf16.gmra.mxu0 %v1671
  %v1912 = vpop.f32.mrf.mxu0
  %v1913 = vadd.f32 0.0, %v1912
  %v1914 = vpop.f32.mrf.mxu0
  %1915 = vdwg.mxu0
  %v1916 = vadd.f32 %v1667, %v1874
  %v1917 = vadd.f32 %v1668, %v1887
  %v1918 = vadd.f32 %v1669, %v1900
  %v1919 = vadd.f32 %v1670, %v1913
  %v1920 = vxor.u32 %v1916, 2147483648
  %v1921 = vxor.u32 %v1917, 2147483648
  %v1922 = vmul.f32 %v1920, 1.442695
  %v1923 = vpow.pop %v1922
  %v1924 = vmul.f32 %v1921, 1.442695
  %v1925 = vpow.pop %v1924
  %v1926 = vadd.f32 %v1923, 1.0
  %v1927 = vadd.f32 %v1925, 1.0
  %v1928 = vrcp.pop %v1926
  %v1929 = vmul.f32 %v1926, %v1928
  %v1930 = vsub.f32 1.0, %v1929
  %v1931 = vmul.f32 %v1928, %v1930
  %v1932 = vadd.f32 %v1928, %v1931
  %vm1933 = vweird.f32 %v1926
  %vm1934 = vweird.f32 %v1928
  %vm1935 = vmor %vm1933, %vm1934
  %v1936 = vsel %vm1935, %v1928, %v1932
  %v1937 = vand.u32 2147483647, %v1926
  %vm1938 = vcmp.eq.f32.partialorder %v1937, 8.507059e+37
  %v1939 = vand.u32 %v1926, 2147483648
  %v1940 = vor.u32 1.1754944e-38, %v1939
  %v1941 = vsel %vm1938, %v1940, %v1936
  %v1942 = vmul.f32 1.0, %v1941
  %v1943 = vrcp.pop %v1927
  %v1944 = vmul.f32 %v1927, %v1943
  %v1945 = vsub.f32 1.0, %v1944
  %v1946 = vmul.f32 %v1943, %v1945
  %v1947 = vadd.f32 %v1943, %v1946
  %vm1948 = vweird.f32 %v1927
  %vm1949 = vweird.f32 %v1943
  %vm1950 = vmor %vm1948, %vm1949
  %v1951 = vsel %vm1950, %v1943, %v1947
  %v1952 = vand.u32 2147483647, %v1927
  %vm1953 = vcmp.eq.f32.partialorder %v1952, 8.507059e+37
  %v1954 = vand.u32 %v1927, 2147483648
  %v1955 = vor.u32 1.1754944e-38, %v1954
  %v1956 = vsel %vm1953, %v1955, %v1951
  %v1957 = vmul.f32 1.0, %v1956
  %v1958 = vtanh.pop %v1919
  %v1959 = vmul.f32 %v1957, %v1642
  %v1960 = vmul.f32 %v1942, %v1958
  %v1961 = vadd.f32 %v1959, %v1960
  %v1962 = vxor.u32 %v1918, 2147483648
  %v1963 = vmul.f32 %v1962, 1.442695
  %v1964 = vpow.pop %v1963
  %v1965 = vadd.f32 %v1964, 1.0
  %v1966 = vrcp.pop %v1965
  %v1967 = vmul.f32 %v1965, %v1966
  %v1968 = vsub.f32 1.0, %v1967
  %v1969 = vmul.f32 %v1966, %v1968
  %v1970 = vadd.f32 %v1966, %v1969
  %vm1971 = vweird.f32 %v1965
  %vm1972 = vweird.f32 %v1966
  %vm1973 = vmor %vm1971, %vm1972
  %v1974 = vsel %vm1973, %v1966, %v1970
  %v1975 = vand.u32 2147483647, %v1965
  %vm1976 = vcmp.eq.f32.partialorder %v1975, 8.507059e+37
  %v1977 = vand.u32 %v1965, 2147483648
  %v1978 = vor.u32 1.1754944e-38, %v1977
  %v1979 = vsel %vm1976, %v1978, %v1974
  %v1980 = vmul.f32 1.0, %v1979
  %v1981 = vtanh.pop %v1961
  %v1982 = vmul.f32 %v1980, %v1981
  %s1983 = scalar_lea.vmem %s10, 32
  %1984 = vst [vmem:[%s1983] sm:$0xff] %v1982
  %s1985 = scalar_lea.vmem [#allocation2], 160
  %v1986 = vld [vmem:[%s1985] sm:$0xff]
  %v1987 = vld [vmem:[%s1985 + $0x8] sm:$0xff]
  %v1988 = vld [vmem:[%s1985 + $0x10] sm:$0xff]
  %v1989 = vld [vmem:[%s1985 + $0x18] sm:$0xff]
  %v1990 = vpack.c.bf16 %v1982, %v1982
  %v1991 = vld [vmem:[%s6] sm:$0xff]
  %v1992 = vld [vmem:[%s6 + $0x8] sm:$0xff]
  %v1993 = vld [vmem:[%s6 + $0x10] sm:$0xff]
  %v1994 = vld [vmem:[%s6 + $0x18] sm:$0xff]
  %v1995 = vld [vmem:[%s6 + $0x20] sm:$0xff]
  %v1996 = vld [vmem:[%s6 + $0x28] sm:$0xff]
  %v1997 = vld [vmem:[%s6 + $0x30] sm:$0xff]
  %v1998 = vld [vmem:[%s6 + $0x38] sm:$0xff]
  %v1999 = vld [vmem:[%s6 + $0x40] sm:$0xff]
  %v2000 = vld [vmem:[%s6 + $0x48] sm:$0xff]
  %v2001 = vld [vmem:[%s6 + $0x50] sm:$0xff]
  %v2002 = vld [vmem:[%s6 + $0x58] sm:$0xff]
  %v2003 = vld [vmem:[%s6 + $0x60] sm:$0xff]
  %v2004 = vld [vmem:[%s6 + $0x68] sm:$0xff]
  %v2005 = vld [vmem:[%s6 + $0x70] sm:$0xff]
  %v2006 = vld [vmem:[%s6 + $0x78] sm:$0xff]
  %v2007 = vld [vmem:[%s6 + $0x80] sm:$0xff]
  %v2008 = vld [vmem:[%s6 + $0x88] sm:$0xff]
  %v2009 = vld [vmem:[%s6 + $0x90] sm:$0xff]
  %v2010 = vld [vmem:[%s6 + $0x98] sm:$0xff]
  %v2011 = vld [vmem:[%s6 + $0xa0] sm:$0xff]
  %v2012 = vld [vmem:[%s6 + $0xa8] sm:$0xff]
  %v2013 = vld [vmem:[%s6 + $0xb0] sm:$0xff]
  %v2014 = vld [vmem:[%s6 + $0xb8] sm:$0xff]
  %v2015 = vld [vmem:[%s6 + $0xc0] sm:$0xff]
  %v2016 = vld [vmem:[%s6 + $0xc8] sm:$0xff]
  %v2017 = vld [vmem:[%s6 + $0xd0] sm:$0xff]
  %v2018 = vld [vmem:[%s6 + $0xd8] sm:$0xff]
  %v2019 = vld [vmem:[%s6 + $0xe0] sm:$0xff]
  %v2020 = vld [vmem:[%s6 + $0xe8] sm:$0xff]
  %v2021 = vld [vmem:[%s6 + $0xf0] sm:$0xff]
  %v2022 = vld [vmem:[%s6 + $0xf8] sm:$0xff]
  %v2055 = vunpack.c.l.b16 %v1991
  %v2056 = vunpack.c.h.b16 %v1991
  %v2057 = vunpack.c.l.b16 %v1992
  %v2058 = vunpack.c.h.b16 %v1992
  %v2059 = vunpack.c.l.b16 %v1993
  %v2060 = vunpack.c.h.b16 %v1993
  %v2061 = vunpack.c.l.b16 %v1994
  %v2062 = vunpack.c.h.b16 %v1994
  %v2063 = vunpack.c.l.b16 %v1995
  %v2064 = vunpack.c.h.b16 %v1995
  %v2065 = vunpack.c.l.b16 %v1996
  %v2066 = vunpack.c.h.b16 %v1996
  %v2067 = vunpack.c.l.b16 %v1997
  %v2068 = vunpack.c.h.b16 %v1997
  %v2069 = vunpack.c.l.b16 %v1998
  %v2070 = vunpack.c.h.b16 %v1998
  %v2071 = vunpack.c.l.b16 %v1999
  %v2072 = vunpack.c.h.b16 %v1999
  %v2073 = vunpack.c.l.b16 %v2000
  %v2074 = vunpack.c.h.b16 %v2000
  %v2075 = vunpack.c.l.b16 %v2001
  %v2076 = vunpack.c.h.b16 %v2001
  %v2077 = vunpack.c.l.b16 %v2002
  %v2078 = vunpack.c.h.b16 %v2002
  %v2079 = vunpack.c.l.b16 %v2003
  %v2080 = vunpack.c.h.b16 %v2003
  %v2081 = vunpack.c.l.b16 %v2004
  %v2082 = vunpack.c.h.b16 %v2004
  %v2083 = vunpack.c.l.b16 %v2005
  %v2084 = vunpack.c.h.b16 %v2005
  %v2085 = vunpack.c.l.b16 %v2006
  %v2086 = vunpack.c.h.b16 %v2006
  %v2087 = vunpack.c.l.b16 %v2007
  %v2088 = vunpack.c.h.b16 %v2007
  %v2089 = vunpack.c.l.b16 %v2008
  %v2090 = vunpack.c.h.b16 %v2008
  %v2091 = vunpack.c.l.b16 %v2009
  %v2092 = vunpack.c.h.b16 %v2009
  %v2093 = vunpack.c.l.b16 %v2010
  %v2094 = vunpack.c.h.b16 %v2010
  %v2095 = vunpack.c.l.b16 %v2011
  %v2096 = vunpack.c.h.b16 %v2011
  %v2097 = vunpack.c.l.b16 %v2012
  %v2098 = vunpack.c.h.b16 %v2012
  %v2099 = vunpack.c.l.b16 %v2013
  %v2100 = vunpack.c.h.b16 %v2013
  %v2101 = vunpack.c.l.b16 %v2014
  %v2102 = vunpack.c.h.b16 %v2014
  %v2103 = vunpack.c.l.b16 %v2015
  %v2104 = vunpack.c.h.b16 %v2015
  %v2105 = vunpack.c.l.b16 %v2016
  %v2106 = vunpack.c.h.b16 %v2016
  %v2107 = vunpack.c.l.b16 %v2017
  %v2108 = vunpack.c.h.b16 %v2017
  %v2109 = vunpack.c.l.b16 %v2018
  %v2110 = vunpack.c.h.b16 %v2018
  %v2111 = vunpack.c.l.b16 %v2019
  %v2112 = vunpack.c.h.b16 %v2019
  %v2113 = vunpack.c.l.b16 %v2020
  %v2114 = vunpack.c.h.b16 %v2020
  %v2115 = vunpack.c.l.b16 %v2021
  %v2116 = vunpack.c.h.b16 %v2021
  %v2117 = vunpack.c.l.b16 %v2022
  %v2118 = vunpack.c.h.b16 %v2022
  %v2119 = vpack.c.b16 %v2059, %v2055
  %v2120 = vpack.c.b16 %v2060, %v2056
  %v2121 = vpack.c.b16 %v2061, %v2057
  %v2122 = vpack.c.b16 %v2062, %v2058
  %v2123 = vpack.c.b16 %v2067, %v2063
  %v2124 = vpack.c.b16 %v2068, %v2064
  %v2125 = vpack.c.b16 %v2069, %v2065
  %v2126 = vpack.c.b16 %v2070, %v2066
  %v2127 = vpack.c.b16 %v2075, %v2071
  %v2128 = vpack.c.b16 %v2076, %v2072
  %v2129 = vpack.c.b16 %v2077, %v2073
  %v2130 = vpack.c.b16 %v2078, %v2074
  %v2131 = vpack.c.b16 %v2083, %v2079
  %v2132 = vpack.c.b16 %v2084, %v2080
  %v2133 = vpack.c.b16 %v2085, %v2081
  %v2134 = vpack.c.b16 %v2086, %v2082
  %v2135 = vpack.c.b16 %v2091, %v2087
  %v2136 = vpack.c.b16 %v2092, %v2088
  %v2137 = vpack.c.b16 %v2093, %v2089
  %v2138 = vpack.c.b16 %v2094, %v2090
  %v2139 = vpack.c.b16 %v2099, %v2095
  %v2140 = vpack.c.b16 %v2100, %v2096
  %v2141 = vpack.c.b16 %v2101, %v2097
  %v2142 = vpack.c.b16 %v2102, %v2098
  %v2143 = vpack.c.b16 %v2107, %v2103
  %v2144 = vpack.c.b16 %v2108, %v2104
  %v2145 = vpack.c.b16 %v2109, %v2105
  %v2146 = vpack.c.b16 %v2110, %v2106
  %v2147 = vpack.c.b16 %v2115, %v2111
  %v2148 = vpack.c.b16 %v2116, %v2112
  %v2149 = vpack.c.b16 %v2117, %v2113
  %v2150 = vpack.c.b16 %v2118, %v2114
  %2183 = vmatpush.bf16.msra.mxu0 %v2147
  %2184 = vmatpush.bf16.msra.mxu0 %v2143
  %2185 = vmatpush.bf16.msra.mxu0 %v2139
  %2186 = vmatpush.bf16.msra.mxu0 %v2135
  %2187 = vmatpush.bf16.msra.mxu0 %v2131
  %2188 = vmatpush.bf16.msra.mxu0 %v2127
  %2189 = vmatpush.bf16.msra.mxu0 %v2123
  %2190 = vmatpush.bf16.msra.mxu0 %v2119
  %2191 = vmatmul.bf16.gmra.mxu0 %v1990
  %v2192 = vpop.f32.mrf.mxu0
  %v2193 = vadd.f32 0.0, %v2192
  %v2194 = vpop.f32.mrf.mxu0
  %2195 = vdwg.mxu0
  %2196 = vmatpush.bf16.msra.mxu0 %v2148
  %2197 = vmatpush.bf16.msra.mxu0 %v2144
  %2198 = vmatpush.bf16.msra.mxu0 %v2140
  %2199 = vmatpush.bf16.msra.mxu0 %v2136
  %2200 = vmatpush.bf16.msra.mxu0 %v2132
  %2201 = vmatpush.bf16.msra.mxu0 %v2128
  %2202 = vmatpush.bf16.msra.mxu0 %v2124
  %2203 = vmatpush.bf16.msra.mxu0 %v2120
  %2204 = vmatmul.bf16.gmra.mxu0 %v1990
  %v2205 = vpop.f32.mrf.mxu0
  %v2206 = vadd.f32 0.0, %v2205
  %v2207 = vpop.f32.mrf.mxu0
  %2208 = vdwg.mxu0
  %2209 = vmatpush.bf16.msra.mxu0 %v2149
  %2210 = vmatpush.bf16.msra.mxu0 %v2145
  %2211 = vmatpush.bf16.msra.mxu0 %v2141
  %2212 = vmatpush.bf16.msra.mxu0 %v2137
  %2213 = vmatpush.bf16.msra.mxu0 %v2133
  %2214 = vmatpush.bf16.msra.mxu0 %v2129
  %2215 = vmatpush.bf16.msra.mxu0 %v2125
  %2216 = vmatpush.bf16.msra.mxu0 %v2121
  %2217 = vmatmul.bf16.gmra.mxu0 %v1990
  %v2218 = vpop.f32.mrf.mxu0
  %v2219 = vadd.f32 0.0, %v2218
  %v2220 = vpop.f32.mrf.mxu0
  %2221 = vdwg.mxu0
  %2222 = vmatpush.bf16.msra.mxu0 %v2150
  %2223 = vmatpush.bf16.msra.mxu0 %v2146
  %2224 = vmatpush.bf16.msra.mxu0 %v2142
  %2225 = vmatpush.bf16.msra.mxu0 %v2138
  %2226 = vmatpush.bf16.msra.mxu0 %v2134
  %2227 = vmatpush.bf16.msra.mxu0 %v2130
  %2228 = vmatpush.bf16.msra.mxu0 %v2126
  %2229 = vmatpush.bf16.msra.mxu0 %v2122
  %2230 = vmatmul.bf16.gmra.mxu0 %v1990
  %v2231 = vpop.f32.mrf.mxu0
  %v2232 = vadd.f32 0.0, %v2231
  %v2233 = vpop.f32.mrf.mxu0
  %2234 = vdwg.mxu0
  %v2235 = vadd.f32 %v1986, %v2193
  %v2236 = vadd.f32 %v1987, %v2206
  %v2237 = vadd.f32 %v1988, %v2219
  %v2238 = vadd.f32 %v1989, %v2232
  %v2239 = vxor.u32 %v2235, 2147483648
  %v2240 = vxor.u32 %v2236, 2147483648
  %v2241 = vmul.f32 %v2239, 1.442695
  %v2242 = vpow.pop %v2241
  %v2243 = vmul.f32 %v2240, 1.442695
  %v2244 = vpow.pop %v2243
  %v2245 = vadd.f32 %v2242, 1.0
  %v2246 = vadd.f32 %v2244, 1.0
  %v2247 = vrcp.pop %v2245
  %v2248 = vmul.f32 %v2245, %v2247
  %v2249 = vsub.f32 1.0, %v2248
  %v2250 = vmul.f32 %v2247, %v2249
  %v2251 = vadd.f32 %v2247, %v2250
  %vm2252 = vweird.f32 %v2245
  %vm2253 = vweird.f32 %v2247
  %vm2254 = vmor %vm2252, %vm2253
  %v2255 = vsel %vm2254, %v2247, %v2251
  %v2256 = vand.u32 2147483647, %v2245
  %vm2257 = vcmp.eq.f32.partialorder %v2256, 8.507059e+37
  %v2258 = vand.u32 %v2245, 2147483648
  %v2259 = vor.u32 1.1754944e-38, %v2258
  %v2260 = vsel %vm2257, %v2259, %v2255
  %v2261 = vmul.f32 1.0, %v2260
  %v2262 = vrcp.pop %v2246
  %v2263 = vmul.f32 %v2246, %v2262
  %v2264 = vsub.f32 1.0, %v2263
  %v2265 = vmul.f32 %v2262, %v2264
  %v2266 = vadd.f32 %v2262, %v2265
  %vm2267 = vweird.f32 %v2246
  %vm2268 = vweird.f32 %v2262
  %vm2269 = vmor %vm2267, %vm2268
  %v2270 = vsel %vm2269, %v2262, %v2266
  %v2271 = vand.u32 2147483647, %v2246
  %vm2272 = vcmp.eq.f32.partialorder %v2271, 8.507059e+37
  %v2273 = vand.u32 %v2246, 2147483648
  %v2274 = vor.u32 1.1754944e-38, %v2273
  %v2275 = vsel %vm2272, %v2274, %v2270
  %v2276 = vmul.f32 1.0, %v2275
  %v2277 = vtanh.pop %v2238
  %v2278 = vmul.f32 %v2276, %v1961
  %v2279 = vmul.f32 %v2261, %v2277
  %v2280 = vadd.f32 %v2278, %v2279
  %v2281 = vxor.u32 %v2237, 2147483648
  %v2282 = vmul.f32 %v2281, 1.442695
  %v2283 = vpow.pop %v2282
  %v2284 = vadd.f32 %v2283, 1.0
  %v2285 = vrcp.pop %v2284
  %v2286 = vmul.f32 %v2284, %v2285
  %v2287 = vsub.f32 1.0, %v2286
  %v2288 = vmul.f32 %v2285, %v2287
  %v2289 = vadd.f32 %v2285, %v2288
  %vm2290 = vweird.f32 %v2284
  %vm2291 = vweird.f32 %v2285
  %vm2292 = vmor %vm2290, %vm2291
  %v2293 = vsel %vm2292, %v2285, %v2289
  %v2294 = vand.u32 2147483647, %v2284
  %vm2295 = vcmp.eq.f32.partialorder %v2294, 8.507059e+37
  %v2296 = vand.u32 %v2284, 2147483648
  %v2297 = vor.u32 1.1754944e-38, %v2296
  %v2298 = vsel %vm2295, %v2297, %v2293
  %v2299 = vmul.f32 1.0, %v2298
  %v2300 = vtanh.pop %v2280
  %v2301 = vmul.f32 %v2299, %v2300
  %s2302 = scalar_lea.vmem %s10, 40
  %2303 = vst [vmem:[%s2302] sm:$0xff] %v2301
  %s2304 = scalar_lea.vmem [#allocation2], 192
  %v2305 = vld [vmem:[%s2304] sm:$0xff]
  %v2306 = vld [vmem:[%s2304 + $0x8] sm:$0xff]
  %v2307 = vld [vmem:[%s2304 + $0x10] sm:$0xff]
  %v2308 = vld [vmem:[%s2304 + $0x18] sm:$0xff]
  %v2309 = vpack.c.bf16 %v2301, %v2301
  %v2310 = vld [vmem:[%s6] sm:$0xff]
  %v2311 = vld [vmem:[%s6 + $0x8] sm:$0xff]
  %v2312 = vld [vmem:[%s6 + $0x10] sm:$0xff]
  %v2313 = vld [vmem:[%s6 + $0x18] sm:$0xff]
  %v2314 = vld [vmem:[%s6 + $0x20] sm:$0xff]
  %v2315 = vld [vmem:[%s6 + $0x28] sm:$0xff]
  %v2316 = vld [vmem:[%s6 + $0x30] sm:$0xff]
  %v2317 = vld [vmem:[%s6 + $0x38] sm:$0xff]
  %v2318 = vld [vmem:[%s6 + $0x40] sm:$0xff]
  %v2319 = vld [vmem:[%s6 + $0x48] sm:$0xff]
  %v2320 = vld [vmem:[%s6 + $0x50] sm:$0xff]
  %v2321 = vld [vmem:[%s6 + $0x58] sm:$0xff]
  %v2322 = vld [vmem:[%s6 + $0x60] sm:$0xff]
  %v2323 = vld [vmem:[%s6 + $0x68] sm:$0xff]
  %v2324 = vld [vmem:[%s6 + $0x70] sm:$0xff]
  %v2325 = vld [vmem:[%s6 + $0x78] sm:$0xff]
  %v2326 = vld [vmem:[%s6 + $0x80] sm:$0xff]
  %v2327 = vld [vmem:[%s6 + $0x88] sm:$0xff]
  %v2328 = vld [vmem:[%s6 + $0x90] sm:$0xff]
  %v2329 = vld [vmem:[%s6 + $0x98] sm:$0xff]
  %v2330 = vld [vmem:[%s6 + $0xa0] sm:$0xff]
  %v2331 = vld [vmem:[%s6 + $0xa8] sm:$0xff]
  %v2332 = vld [vmem:[%s6 + $0xb0] sm:$0xff]
  %v2333 = vld [vmem:[%s6 + $0xb8] sm:$0xff]
  %v2334 = vld [vmem:[%s6 + $0xc0] sm:$0xff]
  %v2335 = vld [vmem:[%s6 + $0xc8] sm:$0xff]
  %v2336 = vld [vmem:[%s6 + $0xd0] sm:$0xff]
  %v2337 = vld [vmem:[%s6 + $0xd8] sm:$0xff]
  %v2338 = vld [vmem:[%s6 + $0xe0] sm:$0xff]
  %v2339 = vld [vmem:[%s6 + $0xe8] sm:$0xff]
  %v2340 = vld [vmem:[%s6 + $0xf0] sm:$0xff]
  %v2341 = vld [vmem:[%s6 + $0xf8] sm:$0xff]
  %v2374 = vunpack.c.l.b16 %v2310
  %v2375 = vunpack.c.h.b16 %v2310
  %v2376 = vunpack.c.l.b16 %v2311
  %v2377 = vunpack.c.h.b16 %v2311
  %v2378 = vunpack.c.l.b16 %v2312
  %v2379 = vunpack.c.h.b16 %v2312
  %v2380 = vunpack.c.l.b16 %v2313
  %v2381 = vunpack.c.h.b16 %v2313
  %v2382 = vunpack.c.l.b16 %v2314
  %v2383 = vunpack.c.h.b16 %v2314
  %v2384 = vunpack.c.l.b16 %v2315
  %v2385 = vunpack.c.h.b16 %v2315
  %v2386 = vunpack.c.l.b16 %v2316
  %v2387 = vunpack.c.h.b16 %v2316
  %v2388 = vunpack.c.l.b16 %v2317
  %v2389 = vunpack.c.h.b16 %v2317
  %v2390 = vunpack.c.l.b16 %v2318
  %v2391 = vunpack.c.h.b16 %v2318
  %v2392 = vunpack.c.l.b16 %v2319
  %v2393 = vunpack.c.h.b16 %v2319
  %v2394 = vunpack.c.l.b16 %v2320
  %v2395 = vunpack.c.h.b16 %v2320
  %v2396 = vunpack.c.l.b16 %v2321
  %v2397 = vunpack.c.h.b16 %v2321
  %v2398 = vunpack.c.l.b16 %v2322
  %v2399 = vunpack.c.h.b16 %v2322
  %v2400 = vunpack.c.l.b16 %v2323
  %v2401 = vunpack.c.h.b16 %v2323
  %v2402 = vunpack.c.l.b16 %v2324
  %v2403 = vunpack.c.h.b16 %v2324
  %v2404 = vunpack.c.l.b16 %v2325
  %v2405 = vunpack.c.h.b16 %v2325
  %v2406 = vunpack.c.l.b16 %v2326
  %v2407 = vunpack.c.h.b16 %v2326
  %v2408 = vunpack.c.l.b16 %v2327
  %v2409 = vunpack.c.h.b16 %v2327
  %v2410 = vunpack.c.l.b16 %v2328
  %v2411 = vunpack.c.h.b16 %v2328
  %v2412 = vunpack.c.l.b16 %v2329
  %v2413 = vunpack.c.h.b16 %v2329
  %v2414 = vunpack.c.l.b16 %v2330
  %v2415 = vunpack.c.h.b16 %v2330
  %v2416 = vunpack.c.l.b16 %v2331
  %v2417 = vunpack.c.h.b16 %v2331
  %v2418 = vunpack.c.l.b16 %v2332
  %v2419 = vunpack.c.h.b16 %v2332
  %v2420 = vunpack.c.l.b16 %v2333
  %v2421 = vunpack.c.h.b16 %v2333
  %v2422 = vunpack.c.l.b16 %v2334
  %v2423 = vunpack.c.h.b16 %v2334
  %v2424 = vunpack.c.l.b16 %v2335
  %v2425 = vunpack.c.h.b16 %v2335
  %v2426 = vunpack.c.l.b16 %v2336
  %v2427 = vunpack.c.h.b16 %v2336
  %v2428 = vunpack.c.l.b16 %v2337
  %v2429 = vunpack.c.h.b16 %v2337
  %v2430 = vunpack.c.l.b16 %v2338
  %v2431 = vunpack.c.h.b16 %v2338
  %v2432 = vunpack.c.l.b16 %v2339
  %v2433 = vunpack.c.h.b16 %v2339
  %v2434 = vunpack.c.l.b16 %v2340
  %v2435 = vunpack.c.h.b16 %v2340
  %v2436 = vunpack.c.l.b16 %v2341
  %v2437 = vunpack.c.h.b16 %v2341
  %v2438 = vpack.c.b16 %v2378, %v2374
  %v2439 = vpack.c.b16 %v2379, %v2375
  %v2440 = vpack.c.b16 %v2380, %v2376
  %v2441 = vpack.c.b16 %v2381, %v2377
  %v2442 = vpack.c.b16 %v2386, %v2382
  %v2443 = vpack.c.b16 %v2387, %v2383
  %v2444 = vpack.c.b16 %v2388, %v2384
  %v2445 = vpack.c.b16 %v2389, %v2385
  %v2446 = vpack.c.b16 %v2394, %v2390
  %v2447 = vpack.c.b16 %v2395, %v2391
  %v2448 = vpack.c.b16 %v2396, %v2392
  %v2449 = vpack.c.b16 %v2397, %v2393
  %v2450 = vpack.c.b16 %v2402, %v2398
  %v2451 = vpack.c.b16 %v2403, %v2399
  %v2452 = vpack.c.b16 %v2404, %v2400
  %v2453 = vpack.c.b16 %v2405, %v2401
  %v2454 = vpack.c.b16 %v2410, %v2406
  %v2455 = vpack.c.b16 %v2411, %v2407
  %v2456 = vpack.c.b16 %v2412, %v2408
  %v2457 = vpack.c.b16 %v2413, %v2409
  %v2458 = vpack.c.b16 %v2418, %v2414
  %v2459 = vpack.c.b16 %v2419, %v2415
  %v2460 = vpack.c.b16 %v2420, %v2416
  %v2461 = vpack.c.b16 %v2421, %v2417
  %v2462 = vpack.c.b16 %v2426, %v2422
  %v2463 = vpack.c.b16 %v2427, %v2423
  %v2464 = vpack.c.b16 %v2428, %v2424
  %v2465 = vpack.c.b16 %v2429, %v2425
  %v2466 = vpack.c.b16 %v2434, %v2430
  %v2467 = vpack.c.b16 %v2435, %v2431
  %v2468 = vpack.c.b16 %v2436, %v2432
  %v2469 = vpack.c.b16 %v2437, %v2433
  %2502 = vmatpush.bf16.msra.mxu0 %v2466
  %2503 = vmatpush.bf16.msra.mxu0 %v2462
  %2504 = vmatpush.bf16.msra.mxu0 %v2458
  %2505 = vmatpush.bf16.msra.mxu0 %v2454
  %2506 = vmatpush.bf16.msra.mxu0 %v2450
  %2507 = vmatpush.bf16.msra.mxu0 %v2446
  %2508 = vmatpush.bf16.msra.mxu0 %v2442
  %2509 = vmatpush.bf16.msra.mxu0 %v2438
  %2510 = vmatmul.bf16.gmra.mxu0 %v2309
  %v2511 = vpop.f32.mrf.mxu0
  %v2512 = vadd.f32 0.0, %v2511
  %v2513 = vpop.f32.mrf.mxu0
  %2514 = vdwg.mxu0
  %2515 = vmatpush.bf16.msra.mxu0 %v2467
  %2516 = vmatpush.bf16.msra.mxu0 %v2463
  %2517 = vmatpush.bf16.msra.mxu0 %v2459
  %2518 = vmatpush.bf16.msra.mxu0 %v2455
  %2519 = vmatpush.bf16.msra.mxu0 %v2451
  %2520 = vmatpush.bf16.msra.mxu0 %v2447
  %2521 = vmatpush.bf16.msra.mxu0 %v2443
  %2522 = vmatpush.bf16.msra.mxu0 %v2439
  %2523 = vmatmul.bf16.gmra.mxu0 %v2309
  %v2524 = vpop.f32.mrf.mxu0
  %v2525 = vadd.f32 0.0, %v2524
  %v2526 = vpop.f32.mrf.mxu0
  %2527 = vdwg.mxu0
  %2528 = vmatpush.bf16.msra.mxu0 %v2468
  %2529 = vmatpush.bf16.msra.mxu0 %v2464
  %2530 = vmatpush.bf16.msra.mxu0 %v2460
  %2531 = vmatpush.bf16.msra.mxu0 %v2456
  %2532 = vmatpush.bf16.msra.mxu0 %v2452
  %2533 = vmatpush.bf16.msra.mxu0 %v2448
  %2534 = vmatpush.bf16.msra.mxu0 %v2444
  %2535 = vmatpush.bf16.msra.mxu0 %v2440
  %2536 = vmatmul.bf16.gmra.mxu0 %v2309
  %v2537 = vpop.f32.mrf.mxu0
  %v2538 = vadd.f32 0.0, %v2537
  %v2539 = vpop.f32.mrf.mxu0
  %2540 = vdwg.mxu0
  %2541 = vmatpush.bf16.msra.mxu0 %v2469
  %2542 = vmatpush.bf16.msra.mxu0 %v2465
  %2543 = vmatpush.bf16.msra.mxu0 %v2461
  %2544 = vmatpush.bf16.msra.mxu0 %v2457
  %2545 = vmatpush.bf16.msra.mxu0 %v2453
  %2546 = vmatpush.bf16.msra.mxu0 %v2449
  %2547 = vmatpush.bf16.msra.mxu0 %v2445
  %2548 = vmatpush.bf16.msra.mxu0 %v2441
  %2549 = vmatmul.bf16.gmra.mxu0 %v2309
  %v2550 = vpop.f32.mrf.mxu0
  %v2551 = vadd.f32 0.0, %v2550
  %v2552 = vpop.f32.mrf.mxu0
  %2553 = vdwg.mxu0
  %v2554 = vadd.f32 %v2305, %v2512
  %v2555 = vadd.f32 %v2306, %v2525
  %v2556 = vadd.f32 %v2307, %v2538
  %v2557 = vadd.f32 %v2308, %v2551
  %v2558 = vxor.u32 %v2554, 2147483648
  %v2559 = vxor.u32 %v2555, 2147483648
  %v2560 = vmul.f32 %v2558, 1.442695
  %v2561 = vpow.pop %v2560
  %v2562 = vmul.f32 %v2559, 1.442695
  %v2563 = vpow.pop %v2562
  %v2564 = vadd.f32 %v2561, 1.0
  %v2565 = vadd.f32 %v2563, 1.0
  %v2566 = vrcp.pop %v2564
  %v2567 = vmul.f32 %v2564, %v2566
  %v2568 = vsub.f32 1.0, %v2567
  %v2569 = vmul.f32 %v2566, %v2568
  %v2570 = vadd.f32 %v2566, %v2569
  %vm2571 = vweird.f32 %v2564
  %vm2572 = vweird.f32 %v2566
  %vm2573 = vmor %vm2571, %vm2572
  %v2574 = vsel %vm2573, %v2566, %v2570
  %v2575 = vand.u32 2147483647, %v2564
  %vm2576 = vcmp.eq.f32.partialorder %v2575, 8.507059e+37
  %v2577 = vand.u32 %v2564, 2147483648
  %v2578 = vor.u32 1.1754944e-38, %v2577
  %v2579 = vsel %vm2576, %v2578, %v2574
  %v2580 = vmul.f32 1.0, %v2579
  %v2581 = vrcp.pop %v2565
  %v2582 = vmul.f32 %v2565, %v2581
  %v2583 = vsub.f32 1.0, %v2582
  %v2584 = vmul.f32 %v2581, %v2583
  %v2585 = vadd.f32 %v2581, %v2584
  %vm2586 = vweird.f32 %v2565
  %vm2587 = vweird.f32 %v2581
  %vm2588 = vmor %vm2586, %vm2587
  %v2589 = vsel %vm2588, %v2581, %v2585
  %v2590 = vand.u32 2147483647, %v2565
  %vm2591 = vcmp.eq.f32.partialorder %v2590, 8.507059e+37
  %v2592 = vand.u32 %v2565, 2147483648
  %v2593 = vor.u32 1.1754944e-38, %v2592
  %v2594 = vsel %vm2591, %v2593, %v2589
  %v2595 = vmul.f32 1.0, %v2594
  %v2596 = vtanh.pop %v2557
  %v2597 = vmul.f32 %v2595, %v2280
  %v2598 = vmul.f32 %v2580, %v2596
  %v2599 = vadd.f32 %v2597, %v2598
  %v2600 = vxor.u32 %v2556, 2147483648
  %v2601 = vmul.f32 %v2600, 1.442695
  %v2602 = vpow.pop %v2601
  %v2603 = vadd.f32 %v2602, 1.0
  %v2604 = vrcp.pop %v2603
  %v2605 = vmul.f32 %v2603, %v2604
  %v2606 = vsub.f32 1.0, %v2605
  %v2607 = vmul.f32 %v2604, %v2606
  %v2608 = vadd.f32 %v2604, %v2607
  %vm2609 = vweird.f32 %v2603
  %vm2610 = vweird.f32 %v2604
  %vm2611 = vmor %vm2609, %vm2610
  %v2612 = vsel %vm2611, %v2604, %v2608
  %v2613 = vand.u32 2147483647, %v2603
  %vm2614 = vcmp.eq.f32.partialorder %v2613, 8.507059e+37
  %v2615 = vand.u32 %v2603, 2147483648
  %v2616 = vor.u32 1.1754944e-38, %v2615
  %v2617 = vsel %vm2614, %v2616, %v2612
  %v2618 = vmul.f32 1.0, %v2617
  %v2619 = vtanh.pop %v2599
  %v2620 = vmul.f32 %v2618, %v2619
  %s2621 = scalar_lea.vmem %s10, 48
  %2622 = vst [vmem:[%s2621] sm:$0xff] %v2620
  %s2623 = scalar_lea.vmem [#allocation2], 224
  %v2624 = vld [vmem:[%s2623] sm:$0xff]
  %v2625 = vld [vmem:[%s2623 + $0x8] sm:$0xff]
  %v2626 = vld [vmem:[%s2623 + $0x10] sm:$0xff]
  %v2627 = vld [vmem:[%s2623 + $0x18] sm:$0xff]
  %v2628 = vpack.c.bf16 %v2620, %v2620
  %v2629 = vld [vmem:[%s6] sm:$0xff]
  %v2630 = vld [vmem:[%s6 + $0x8] sm:$0xff]
  %v2631 = vld [vmem:[%s6 + $0x10] sm:$0xff]
  %v2632 = vld [vmem:[%s6 + $0x18] sm:$0xff]
  %v2633 = vld [vmem:[%s6 + $0x20] sm:$0xff]
  %v2634 = vld [vmem:[%s6 + $0x28] sm:$0xff]
  %v2635 = vld [vmem:[%s6 + $0x30] sm:$0xff]
  %v2636 = vld [vmem:[%s6 + $0x38] sm:$0xff]
  %v2637 = vld [vmem:[%s6 + $0x40] sm:$0xff]
  %v2638 = vld [vmem:[%s6 + $0x48] sm:$0xff]
  %v2639 = vld [vmem:[%s6 + $0x50] sm:$0xff]
  %v2640 = vld [vmem:[%s6 + $0x58] sm:$0xff]
  %v2641 = vld [vmem:[%s6 + $0x60] sm:$0xff]
  %v2642 = vld [vmem:[%s6 + $0x68] sm:$0xff]
  %v2643 = vld [vmem:[%s6 + $0x70] sm:$0xff]
  %v2644 = vld [vmem:[%s6 + $0x78] sm:$0xff]
  %v2645 = vld [vmem:[%s6 + $0x80] sm:$0xff]
  %v2646 = vld [vmem:[%s6 + $0x88] sm:$0xff]
  %v2647 = vld [vmem:[%s6 + $0x90] sm:$0xff]
  %v2648 = vld [vmem:[%s6 + $0x98] sm:$0xff]
  %v2649 = vld [vmem:[%s6 + $0xa0] sm:$0xff]
  %v2650 = vld [vmem:[%s6 + $0xa8] sm:$0xff]
  %v2651 = vld [vmem:[%s6 + $0xb0] sm:$0xff]
  %v2652 = vld [vmem:[%s6 + $0xb8] sm:$0xff]
  %v2653 = vld [vmem:[%s6 + $0xc0] sm:$0xff]
  %v2654 = vld [vmem:[%s6 + $0xc8] sm:$0xff]
  %v2655 = vld [vmem:[%s6 + $0xd0] sm:$0xff]
  %v2656 = vld [vmem:[%s6 + $0xd8] sm:$0xff]
  %v2657 = vld [vmem:[%s6 + $0xe0] sm:$0xff]
  %v2658 = vld [vmem:[%s6 + $0xe8] sm:$0xff]
  %v2659 = vld [vmem:[%s6 + $0xf0] sm:$0xff]
  %v2660 = vld [vmem:[%s6 + $0xf8] sm:$0xff]
  %v2693 = vunpack.c.l.b16 %v2629
  %v2694 = vunpack.c.h.b16 %v2629
  %v2695 = vunpack.c.l.b16 %v2630
  %v2696 = vunpack.c.h.b16 %v2630
  %v2697 = vunpack.c.l.b16 %v2631
  %v2698 = vunpack.c.h.b16 %v2631
  %v2699 = vunpack.c.l.b16 %v2632
  %v2700 = vunpack.c.h.b16 %v2632
  %v2701 = vunpack.c.l.b16 %v2633
  %v2702 = vunpack.c.h.b16 %v2633
  %v2703 = vunpack.c.l.b16 %v2634
  %v2704 = vunpack.c.h.b16 %v2634
  %v2705 = vunpack.c.l.b16 %v2635
  %v2706 = vunpack.c.h.b16 %v2635
  %v2707 = vunpack.c.l.b16 %v2636
  %v2708 = vunpack.c.h.b16 %v2636
  %v2709 = vunpack.c.l.b16 %v2637
  %v2710 = vunpack.c.h.b16 %v2637
  %v2711 = vunpack.c.l.b16 %v2638
  %v2712 = vunpack.c.h.b16 %v2638
  %v2713 = vunpack.c.l.b16 %v2639
  %v2714 = vunpack.c.h.b16 %v2639
  %v2715 = vunpack.c.l.b16 %v2640
  %v2716 = vunpack.c.h.b16 %v2640
  %v2717 = vunpack.c.l.b16 %v2641
  %v2718 = vunpack.c.h.b16 %v2641
  %v2719 = vunpack.c.l.b16 %v2642
  %v2720 = vunpack.c.h.b16 %v2642
  %v2721 = vunpack.c.l.b16 %v2643
  %v2722 = vunpack.c.h.b16 %v2643
  %v2723 = vunpack.c.l.b16 %v2644
  %v2724 = vunpack.c.h.b16 %v2644
  %v2725 = vunpack.c.l.b16 %v2645
  %v2726 = vunpack.c.h.b16 %v2645
  %v2727 = vunpack.c.l.b16 %v2646
  %v2728 = vunpack.c.h.b16 %v2646
  %v2729 = vunpack.c.l.b16 %v2647
  %v2730 = vunpack.c.h.b16 %v2647
  %v2731 = vunpack.c.l.b16 %v2648
  %v2732 = vunpack.c.h.b16 %v2648
  %v2733 = vunpack.c.l.b16 %v2649
  %v2734 = vunpack.c.h.b16 %v2649
  %v2735 = vunpack.c.l.b16 %v2650
  %v2736 = vunpack.c.h.b16 %v2650
  %v2737 = vunpack.c.l.b16 %v2651
  %v2738 = vunpack.c.h.b16 %v2651
  %v2739 = vunpack.c.l.b16 %v2652
  %v2740 = vunpack.c.h.b16 %v2652
  %v2741 = vunpack.c.l.b16 %v2653
  %v2742 = vunpack.c.h.b16 %v2653
  %v2743 = vunpack.c.l.b16 %v2654
  %v2744 = vunpack.c.h.b16 %v2654
  %v2745 = vunpack.c.l.b16 %v2655
  %v2746 = vunpack.c.h.b16 %v2655
  %v2747 = vunpack.c.l.b16 %v2656
  %v2748 = vunpack.c.h.b16 %v2656
  %v2749 = vunpack.c.l.b16 %v2657
  %v2750 = vunpack.c.h.b16 %v2657
  %v2751 = vunpack.c.l.b16 %v2658
  %v2752 = vunpack.c.h.b16 %v2658
  %v2753 = vunpack.c.l.b16 %v2659
  %v2754 = vunpack.c.h.b16 %v2659
  %v2755 = vunpack.c.l.b16 %v2660
  %v2756 = vunpack.c.h.b16 %v2660
  %v2757 = vpack.c.b16 %v2697, %v2693
  %v2758 = vpack.c.b16 %v2698, %v2694
  %v2759 = vpack.c.b16 %v2699, %v2695
  %v2760 = vpack.c.b16 %v2700, %v2696
  %v2761 = vpack.c.b16 %v2705, %v2701
  %v2762 = vpack.c.b16 %v2706, %v2702
  %v2763 = vpack.c.b16 %v2707, %v2703
  %v2764 = vpack.c.b16 %v2708, %v2704
  %v2765 = vpack.c.b16 %v2713, %v2709
  %v2766 = vpack.c.b16 %v2714, %v2710
  %v2767 = vpack.c.b16 %v2715, %v2711
  %v2768 = vpack.c.b16 %v2716, %v2712
  %v2769 = vpack.c.b16 %v2721, %v2717
  %v2770 = vpack.c.b16 %v2722, %v2718
  %v2771 = vpack.c.b16 %v2723, %v2719
  %v2772 = vpack.c.b16 %v2724, %v2720
  %v2773 = vpack.c.b16 %v2729, %v2725
  %v2774 = vpack.c.b16 %v2730, %v2726
  %v2775 = vpack.c.b16 %v2731, %v2727
  %v2776 = vpack.c.b16 %v2732, %v2728
  %v2777 = vpack.c.b16 %v2737, %v2733
  %v2778 = vpack.c.b16 %v2738, %v2734
  %v2779 = vpack.c.b16 %v2739, %v2735
  %v2780 = vpack.c.b16 %v2740, %v2736
  %v2781 = vpack.c.b16 %v2745, %v2741
  %v2782 = vpack.c.b16 %v2746, %v2742
  %v2783 = vpack.c.b16 %v2747, %v2743
  %v2784 = vpack.c.b16 %v2748, %v2744
  %v2785 = vpack.c.b16 %v2753, %v2749
  %v2786 = vpack.c.b16 %v2754, %v2750
  %v2787 = vpack.c.b16 %v2755, %v2751
  %v2788 = vpack.c.b16 %v2756, %v2752
  %2821 = vmatpush.bf16.msra.mxu0 %v2785
  %2822 = vmatpush.bf16.msra.mxu0 %v2781
  %2823 = vmatpush.bf16.msra.mxu0 %v2777
  %2824 = vmatpush.bf16.msra.mxu0 %v2773
  %2825 = vmatpush.bf16.msra.mxu0 %v2769
  %2826 = vmatpush.bf16.msra.mxu0 %v2765
  %2827 = vmatpush.bf16.msra.mxu0 %v2761
  %2828 = vmatpush.bf16.msra.mxu0 %v2757
  %2829 = vmatmul.bf16.gmra.mxu0 %v2628
  %v2830 = vpop.f32.mrf.mxu0
  %v2831 = vadd.f32 0.0, %v2830
  %v2832 = vpop.f32.mrf.mxu0
  %2833 = vdwg.mxu0
  %2834 = vmatpush.bf16.msra.mxu0 %v2786
  %2835 = vmatpush.bf16.msra.mxu0 %v2782
  %2836 = vmatpush.bf16.msra.mxu0 %v2778
  %2837 = vmatpush.bf16.msra.mxu0 %v2774
  %2838 = vmatpush.bf16.msra.mxu0 %v2770
  %2839 = vmatpush.bf16.msra.mxu0 %v2766
  %2840 = vmatpush.bf16.msra.mxu0 %v2762
  %2841 = vmatpush.bf16.msra.mxu0 %v2758
  %2842 = vmatmul.bf16.gmra.mxu0 %v2628
  %v2843 = vpop.f32.mrf.mxu0
  %v2844 = vadd.f32 0.0, %v2843
  %v2845 = vpop.f32.mrf.mxu0
  %2846 = vdwg.mxu0
  %2847 = vmatpush.bf16.msra.mxu0 %v2787
  %2848 = vmatpush.bf16.msra.mxu0 %v2783
  %2849 = vmatpush.bf16.msra.mxu0 %v2779
  %2850 = vmatpush.bf16.msra.mxu0 %v2775
  %2851 = vmatpush.bf16.msra.mxu0 %v2771
  %2852 = vmatpush.bf16.msra.mxu0 %v2767
  %2853 = vmatpush.bf16.msra.mxu0 %v2763
  %2854 = vmatpush.bf16.msra.mxu0 %v2759
  %2855 = vmatmul.bf16.gmra.mxu0 %v2628
  %v2856 = vpop.f32.mrf.mxu0
  %v2857 = vadd.f32 0.0, %v2856
  %v2858 = vpop.f32.mrf.mxu0
  %2859 = vdwg.mxu0
  %2860 = vmatpush.bf16.msra.mxu0 %v2788
  %2861 = vmatpush.bf16.msra.mxu0 %v2784
  %2862 = vmatpush.bf16.msra.mxu0 %v2780
  %2863 = vmatpush.bf16.msra.mxu0 %v2776
  %2864 = vmatpush.bf16.msra.mxu0 %v2772
  %2865 = vmatpush.bf16.msra.mxu0 %v2768
  %2866 = vmatpush.bf16.msra.mxu0 %v2764
  %2867 = vmatpush.bf16.msra.mxu0 %v2760
  %2868 = vmatmul.bf16.gmra.mxu0 %v2628
  %v2869 = vpop.f32.mrf.mxu0
  %v2870 = vadd.f32 0.0, %v2869
  %v2871 = vpop.f32.mrf.mxu0
  %2872 = vdwg.mxu0
  %v2873 = vadd.f32 %v2624, %v2831
  %v2874 = vadd.f32 %v2625, %v2844
  %v2875 = vadd.f32 %v2626, %v2857
  %v2876 = vadd.f32 %v2627, %v2870
  %v2877 = vxor.u32 %v2873, 2147483648
  %v2878 = vxor.u32 %v2874, 2147483648
  %v2879 = vmul.f32 %v2877, 1.442695
  %v2880 = vpow.pop %v2879
  %v2881 = vmul.f32 %v2878, 1.442695
  %v2882 = vpow.pop %v2881
  %v2883 = vadd.f32 %v2880, 1.0
  %v2884 = vadd.f32 %v2882, 1.0
  %v2885 = vrcp.pop %v2883
  %v2886 = vmul.f32 %v2883, %v2885
  %v2887 = vsub.f32 1.0, %v2886
  %v2888 = vmul.f32 %v2885, %v2887
  %v2889 = vadd.f32 %v2885, %v2888
  %vm2890 = vweird.f32 %v2883
  %vm2891 = vweird.f32 %v2885
  %vm2892 = vmor %vm2890, %vm2891
  %v2893 = vsel %vm2892, %v2885, %v2889
  %v2894 = vand.u32 2147483647, %v2883
  %vm2895 = vcmp.eq.f32.partialorder %v2894, 8.507059e+37
  %v2896 = vand.u32 %v2883, 2147483648
  %v2897 = vor.u32 1.1754944e-38, %v2896
  %v2898 = vsel %vm2895, %v2897, %v2893
  %v2899 = vmul.f32 1.0, %v2898
  %v2900 = vrcp.pop %v2884
  %v2901 = vmul.f32 %v2884, %v2900
  %v2902 = vsub.f32 1.0, %v2901
  %v2903 = vmul.f32 %v2900, %v2902
  %v2904 = vadd.f32 %v2900, %v2903
  %vm2905 = vweird.f32 %v2884
  %vm2906 = vweird.f32 %v2900
  %vm2907 = vmor %vm2905, %vm2906
  %v2908 = vsel %vm2907, %v2900, %v2904
  %v2909 = vand.u32 2147483647, %v2884
  %vm2910 = vcmp.eq.f32.partialorder %v2909, 8.507059e+37
  %v2911 = vand.u32 %v2884, 2147483648
  %v2912 = vor.u32 1.1754944e-38, %v2911
  %v2913 = vsel %vm2910, %v2912, %v2908
  %v2914 = vmul.f32 1.0, %v2913
  %v2915 = vtanh.pop %v2876
  %v2916 = vmul.f32 %v2914, %v2599
  %v2917 = vmul.f32 %v2899, %v2915
  %v2918 = vadd.f32 %v2916, %v2917
  %v2919 = vxor.u32 %v2875, 2147483648
  %v2920 = vmul.f32 %v2919, 1.442695
  %v2921 = vpow.pop %v2920
  %v2922 = vadd.f32 %v2921, 1.0
  %v2923 = vrcp.pop %v2922
  %v2924 = vmul.f32 %v2922, %v2923
  %v2925 = vsub.f32 1.0, %v2924
  %v2926 = vmul.f32 %v2923, %v2925
  %v2927 = vadd.f32 %v2923, %v2926
  %vm2928 = vweird.f32 %v2922
  %vm2929 = vweird.f32 %v2923
  %vm2930 = vmor %vm2928, %vm2929
  %v2931 = vsel %vm2930, %v2923, %v2927
  %v2932 = vand.u32 2147483647, %v2922
  %vm2933 = vcmp.eq.f32.partialorder %v2932, 8.507059e+37
  %v2934 = vand.u32 %v2922, 2147483648
  %v2935 = vor.u32 1.1754944e-38, %v2934
  %v2936 = vsel %vm2933, %v2935, %v2931
  %v2937 = vmul.f32 1.0, %v2936
  %v2938 = vtanh.pop %v2918
  %v2939 = vmul.f32 %v2937, %v2938
  %s2940 = scalar_lea.vmem %s10, 56
  %2941 = vst [vmem:[%s2940] sm:$0xff] %v2939
  %v2942 = vld [vmem:[%s10] sm:$0xff]
  %v2943 = vld [vmem:[%s10 + $0x8] sm:$0xff]
  %v2944 = vld [vmem:[%s10 + $0x10] sm:$0xff]
  %v2945 = vld [vmem:[%s10 + $0x18] sm:$0xff]
  %v2946 = vld [vmem:[%s10 + $0x20] sm:$0xff]
  %v2947 = vld [vmem:[%s10 + $0x28] sm:$0xff]
  %v2948 = vld [vmem:[%s10 + $0x30] sm:$0xff]
  %v2949 = vld [vmem:[%s10 + $0x38] sm:$0xff]
  %v2950 = vpack.c.bf16 %v2943, %v2942
  %v2951 = vpack.c.bf16 %v2945, %v2944
  %v2952 = vpack.c.bf16 %v2947, %v2946
  %v2953 = vpack.c.bf16 %v2949, %v2948
  %v2954 = vld [vmem:[%s7] sm:$0xf]
  %v2955 = vld [vmem:[%s7 + $0x4] sm:$0xf]
  %v2956 = vld [vmem:[%s7 + $0x8] sm:$0xf]
  %v2957 = vld [vmem:[%s7 + $0xc] sm:$0xf]
  %v2958 = vld [vmem:[%s7 + $0x10] sm:$0xf]
  %v2959 = vld [vmem:[%s7 + $0x14] sm:$0xf]
  %v2960 = vld [vmem:[%s7 + $0x18] sm:$0xf]
  %v2961 = vld [vmem:[%s7 + $0x1c] sm:$0xf]
  %v2962 = vld [vmem:[%s7 + $0x20] sm:$0xf]
  %v2963 = vld [vmem:[%s7 + $0x24] sm:$0xf]
  %v2964 = vld [vmem:[%s7 + $0x28] sm:$0xf]
  %v2965 = vld [vmem:[%s7 + $0x2c] sm:$0xf]
  %v2966 = vld [vmem:[%s7 + $0x30] sm:$0xf]
  %v2967 = vld [vmem:[%s7 + $0x34] sm:$0xf]
  %v2968 = vld [vmem:[%s7 + $0x38] sm:$0xf]
  %v2969 = vld [vmem:[%s7 + $0x3c] sm:$0xf]
  %v2970 = vld [vmem:[%s8] sm:$0x1]
  %v2972 = vperm.slane %v2970, 0
  %v2990 = vunpack.c.l.b16 %v2954
  %v2991 = vunpack.c.l.b16 %v2955
  %v2992 = vunpack.c.l.b16 %v2956
  %v2993 = vunpack.c.l.b16 %v2957
  %v2994 = vunpack.c.l.b16 %v2958
  %v2995 = vunpack.c.l.b16 %v2959
  %v2996 = vunpack.c.l.b16 %v2960
  %v2997 = vunpack.c.l.b16 %v2961
  %v2998 = vunpack.c.l.b16 %v2962
  %v2999 = vunpack.c.l.b16 %v2963
  %v3000 = vunpack.c.l.b16 %v2964
  %v3001 = vunpack.c.l.b16 %v2965
  %v3002 = vunpack.c.l.b16 %v2966
  %v3003 = vunpack.c.l.b16 %v2967
  %v3004 = vunpack.c.l.b16 %v2968
  %v3005 = vunpack.c.l.b16 %v2969
  %v3006 = vpack.c.b16 %v2991, %v2990
  %v3007 = vpack.c.b16 %v2993, %v2992
  %v3008 = vpack.c.b16 %v2995, %v2994
  %v3009 = vpack.c.b16 %v2997, %v2996
  %v3010 = vpack.c.b16 %v2999, %v2998
  %v3011 = vpack.c.b16 %v3001, %v3000
  %v3012 = vpack.c.b16 %v3003, %v3002
  %v3013 = vpack.c.b16 %v3005, %v3004
  %3022 = vmatpush.bf16.msra.mxu0 %v3013
  %3023 = vmatpush.bf16.msra.mxu0 %v3012
  %3024 = vmatpush.bf16.msra.mxu0 %v3011
  %3025 = vmatpush.bf16.msra.mxu0 %v3010
  %3026 = vmatpush.bf16.msra.mxu0 %v3009
  %3027 = vmatpush.bf16.msra.mxu0 %v3008
  %3028 = vmatpush.bf16.msra.mxu0 %v3007
  %3029 = vmatpush.bf16.msra.mxu0 %v3006
  %3030 = vmatmul.bf16.gmra.mxu0 %v2950
  %v3031 = vpop.f32.mrf.mxu0
  %v3032 = vadd.f32 %v2972, %v3031
  %v3033 = vpop.f32.mrf.mxu0
  %v3034 = vadd.f32 %v2972, %v3033
  %3035 = vmatmul.bf16.gmra.mxu0 %v2951
  %v3036 = vpop.f32.mrf.mxu0
  %v3037 = vadd.f32 %v2972, %v3036
  %v3038 = vpop.f32.mrf.mxu0
  %v3039 = vadd.f32 %v2972, %v3038
  %3040 = vmatmul.bf16.gmra.mxu0 %v2952
  %v3041 = vpop.f32.mrf.mxu0
  %v3042 = vadd.f32 %v2972, %v3041
  %v3043 = vpop.f32.mrf.mxu0
  %v3044 = vadd.f32 %v2972, %v3043
  %3045 = vmatmul.bf16.gmra.mxu0 %v2953
  %v3046 = vpop.f32.mrf.mxu0
  %v3047 = vadd.f32 %v2972, %v3046
  %v3048 = vpop.f32.mrf.mxu0
  %v3049 = vadd.f32 %v2972, %v3048
  %3050 = vdwg.mxu0
  %3051 = vst [vmem:[%s9] sm:$0xff] %v3032
  %3052 = vst [vmem:[%s9 + $0x8] sm:$0xff] %v3034
  %3053 = vst [vmem:[%s9 + $0x10] sm:$0xff] %v3037
  %3054 = vst [vmem:[%s9 + $0x18] sm:$0xff] %v3039
  %3055 = vst [vmem:[%s9 + $0x20] sm:$0xff] %v3042
  %3056 = vst [vmem:[%s9 + $0x28] sm:$0xff] %v3044
  %3057 = vst [vmem:[%s9 + $0x30] sm:$0xff] %v3047
  %3058 = vst [vmem:[%s9 + $0x38] sm:$0xff] %v3049
  // Predicated region
  $region38: #{caption_decoder_forward.1} parent=0 // pred_check
    _
  $region39: #{caption_decoder_forward.1} parent=0 // pred_check_branch
    %3060 = sbr.rel (0) target = $region41
  $region40: #{caption_decoder_forward.1} parent=0 // pred_region
    _
  $region41: #{caption_decoder_forward.1} parent=0 // pred_fallthru
    _
  // Predicated region
  $region42: #{caption_decoder_forward.1} parent=0 // pred_check
    _
  $region43: #{caption_decoder_forward.1} parent=0 // pred_check_branch
    %3062 = sbr.rel (0) target = $region45
  $region44: #{caption_decoder_forward.1} parent=0 // pred_region
    _
  $region45: #{caption_decoder_forward.1} parent=0 // pred_fallthru
    _
  // Predicated region
  $region46: #{caption_decoder_forward.1} parent=0 // pred_check
    _
  $region47: #{caption_decoder_forward.1} parent=0 // pred_check_branch
    %3064 = sbr.rel (0) target = $region49
  $region48: #{caption_decoder_forward.1} parent=0 // pred_region
    _
  $region49: #{caption_decoder_forward.1} parent=0 // pred_fallthru
    _
  // Predicated region
  $region50: #{caption_decoder_forward.1} parent=0 // pred_check
    _
  $region51: #{caption_decoder_forward.1} parent=0 // pred_check_branch
    %3066 = sbr.rel (0) target = $region53
  $region52: #{caption_decoder_forward.1} parent=0 // pred_region
    _
  $region53: #{caption_decoder_forward.1} parent=0 // pred_fallthru
    _

</llo_original>
